<compile_context>
chip_gen: v6e
topology: v6e:2x2x1
jax: 0.10.0
libtpu: 0.0.40
codegen_flags: <defaults>
</compile_context>

<pallas_src>
import jax
import jax.numpy as jnp
from jax.experimental import pallas as pl
from jax.experimental.pallas import tpu as pltpu

LANE = 128      # TPU lane width (last dim)
SUBLANE = 8     # TPU sublane width (second-to-last dim)
N_LAYERS = 7


def _round_up(x, m):
    return ((x + m - 1) // m) * m


def _pad2d(a, rows, cols, dtype):
    """Zero-pad a 2-D array to (rows, cols) and cast to dtype."""
    out = jnp.zeros((rows, cols), dtype)
    return out.at[: a.shape[0], : a.shape[1]].set(a.astype(dtype))


def _vmem_budget_bytes():
    """~75% of the physical VMEM of the current generation.
    v5e/v6e (128 MiB) -> ~96 MiB; v7x (64 MiB/TC) -> ~48 MiB."""
    try:
        cap = pltpu.get_tpu_info().vmem_capacity_bytes
    except Exception:
        cap = 64 * 1024 * 1024          # conservative (v7x per-TC VMEM)
    return int(cap) * 3 // 4


def prepare_params(params):
    """One-time preprocessing (NOT on the per-call path):
    zero-pad every W/b to 128-lane multiples, cast W to bf16 (MXU operand),
    keep b in f32 (added on the f32 accumulator)."""
    layers = []
    for (w, b) in params:
        fi, fo = w.shape
        fi_p = _round_up(fi, LANE)
        fo_p = _round_up(fo, LANE)
        w_p = _pad2d(w, fi_p, fo_p, jnp.bfloat16)
        b_p = _pad2d(jnp.reshape(b, (1, -1)), 1, fo_p, jnp.float32)
        layers.append((w_p, b_p))
    return {"layers": layers, "d_out": params[-1][0].shape[1]}


def make_seven_layer_kernel(d_out_valid):
    """Kernel closed over the number of valid (unpadded) output lanes."""

    def kernel(x_ref, *refs):
        o_ref = refs[-1]
        wb = refs[:-1]                           # w1,b1,...,w7,b7 (14 refs)

        h = x_ref[...]                           # bf16, lane-padded

        # 6x (Linear + ReLU): bf16 operands into the MXU, f32 accumulate,
        # bias-add / ReLU in f32, re-pack to bf16 for the next layer.
        for layer in range(N_LAYERS - 1):
            w_ref = wb[2 * layer]
            b_ref = wb[2 * layer + 1]
            acc = jnp.dot(h, w_ref[...], preferred_element_type=jnp.float32)
            h = jnp.maximum(acc + b_ref[...], 0.0).astype(jnp.bfloat16)

        # Final Linear (no ReLU), f32 logits.
        w_ref = wb[2 * (N_LAYERS - 1)]
        b_ref = wb[2 * (N_LAYERS - 1) + 1]
        logits = jnp.dot(h, w_ref[...],
                         preferred_element_type=jnp.float32) + b_ref[...]

        # Mask padded logit lanes with -inf so they don't corrupt the LSE.
        lane_idx = jax.lax.broadcasted_iota(jnp.int32, logits.shape, 1)
        valid = lane_idx < d_out_valid
        logits = jnp.where(valid, logits, -jnp.inf)

        # Numerically stable log_softmax over the feature (last) axis.
        m = jnp.max(logits, axis=-1, keepdims=True)
        shifted = logits - m
        lse = jnp.log(jnp.sum(jnp.exp(shifted), axis=-1, keepdims=True))
        out = shifted - lse
        # Padded lanes stored as 0.0 (not -inf): no NaN hazard downstream.
        o_ref[...] = jnp.where(valid, out, 0.0).astype(o_ref.dtype)

    return kernel


def seven_layer_fc_net(x, prepared, *, tm_max=512):
    """x: (N, D_in) float32. prepared: output of prepare_params()."""
    N, _ = x.shape
    layers = prepared["layers"]
    d_out = prepared["d_out"]
    d_in_p = layers[0][0].shape[0]
    d_out_p = layers[-1][0].shape[1]

    # Batch tiling. For small/medium N, force >= 2 grid steps so the batch
    # axis ("parallel") shards across v7x's two TensorCores. For large N use
    # 512-row tiles (big tiles amortize the ~0.35us/step pipeline overhead).
    if N <= 2 * tm_max:
        half = -(-N // 2)
        align = 256 if half >= 256 else (128 if half >= 128 else SUBLANE)
        tm = _round_up(half, align)
        n_p = 2 * tm
    else:
        tm = tm_max
        n_p = _round_up(N, tm)
    grid = (n_p // tm,)

    # x is the only per-step streamed input: pad + cast to bf16 here.
    x_p = _pad2d(x, n_p, d_in_p, jnp.bfloat16)

    flat_wb = []
    for (w_p, b_p) in layers:
        flat_wb += [w_p, b_p]

    # Advisory cost estimate so XLA schedules the surrounding pad/slice ops
    # sensibly around the custom call.
    mm_flops = 2 * n_p * sum(w.shape[0] * w.shape[1] for (w, _) in layers)
    bytes_accessed = (x_p.size * 2 + n_p * d_out_p * 4
                      + sum(w.size * 2 + b.size * 4 for (w, b) in layers))
    cost = pl.CostEstimate(flops=mm_flops,
                           transcendentals=2 * n_p * d_out_p,
                           bytes_accessed=bytes_accessed)

    vmem_limit = _vmem_budget_bytes()
    kernel = make_seven_layer_kernel(d_out)

    def run(single_buffer_weights):
        # Weights/biases: constant block index -> VMEM-resident across grid
        # steps; Buffered(1) avoids double-buffering blocks that never change.
        wkw = ({"pipeline_mode": pl.Buffered(1)}
               if single_buffer_weights else {})
        in_specs = [pl.BlockSpec((tm, d_in_p), lambda i: (i, 0))]
        for (w_p, b_p) in layers:
            in_specs.append(pl.BlockSpec(w_p.shape, lambda i: (0, 0), **wkw))
            in_specs.append(pl.BlockSpec(b_p.shape, lambda i: (0, 0), **wkw))
        return pl.pallas_call(
            kernel,
            out_shape=jax.ShapeDtypeStruct((n_p, d_out_p), jnp.float32),
            grid=grid,
            in_specs=in_specs,
            out_specs=pl.BlockSpec((tm, d_out_p), lambda i: (i, 0)),
            compiler_params=pltpu.CompilerParams(
                dimension_semantics=("parallel",),
                vmem_limit_bytes=vmem_limit),
            cost_estimate=cost,
        )(x_p, *flat_wb)

    try:
        out_p = jax.block_until_ready(run(True))
    except Exception:
        # Graceful fallback if this Pallas build rejects single-buffered
        # (pipeline_mode=Buffered(1)) specs on the top-level pallas_call.
        out_p = jax.block_until_ready(run(False))

    return out_p[:N, :d_out]


def init_params(key, D_in, H, D_out):
    """Deterministic init mimicking nn.Linear (uniform +-1/sqrt(fan_in))."""
    dims = [(D_in, H), (H, H), (H, H), (H, H), (H, H), (H, H), (H, D_out)]
    params = []
    for (fan_in, fan_out) in dims:
        key, kw, kb = jax.random.split(key, 3)
        bound = 1.0 / (fan_in ** 0.5)
        w = jax.random.uniform(kw, (fan_in, fan_out), jnp.float32,
                               minval=-bound, maxval=bound)
        b = jax.random.uniform(kb, (1, fan_out), jnp.float32,
                               minval=-bound, maxval=bound)
        params.append((w, b))
    return params


def reference_forward(x, params):
    """Pure-JAX reference matching the kernel's mixed-precision policy
    (bf16 operands / bf16 inter-layer activations, f32 accumulate)."""
    h = x.astype(jnp.bfloat16)
    n = len(params)
    z = None
    for i, (w, b) in enumerate(params):
        acc = jnp.dot(h, w.astype(jnp.bfloat16),
                      preferred_element_type=jnp.float32)
        z = acc + jnp.reshape(b, (1, -1))
        if i < n - 1:
            h = jnp.maximum(z, 0.0).astype(jnp.bfloat16)
    return jax.nn.log_softmax(z, axis=-1)


if __name__ == "__main__":
    # Small shapes consistent with the module: N x D_in input, hidden H, D_out classes.
    N, D_in, H, D_out = 8, 32, 64, 16

    key = jax.random.PRNGKey(0)
    key, kx = jax.random.split(key)
    x = jax.random.normal(kx, (N, D_in), dtype=jnp.float32)

    params = init_params(key, D_in, H, D_out)
    prepared = prepare_params(params)            # one-time pad + bf16 cast

    out = jax.block_until_ready(seven_layer_fc_net(x, prepared))
    ref = jax.block_until_ready(reference_forward(x, params))

    assert out.shape == (N, D_out)
    err = float(jnp.max(jnp.abs(out - ref)))
    assert jnp.allclose(out, ref, atol=1e-3, rtol=1e-3), err

    print("KERNEL_OK")
</pallas_src>

<mosaic_0001>
module attributes {stable_mosaic.version = 11 : i64} {
  func.func @kernel(%arg0: i32, %arg1: memref<8x128xbf16, #tpu.memory_space<vmem>>, %arg2: memref<128x128xbf16, #tpu.memory_space<vmem>>, %arg3: memref<1x128xf32, #tpu.memory_space<vmem>>, %arg4: memref<128x128xbf16, #tpu.memory_space<vmem>>, %arg5: memref<1x128xf32, #tpu.memory_space<vmem>>, %arg6: memref<128x128xbf16, #tpu.memory_space<vmem>>, %arg7: memref<1x128xf32, #tpu.memory_space<vmem>>, %arg8: memref<128x128xbf16, #tpu.memory_space<vmem>>, %arg9: memref<1x128xf32, #tpu.memory_space<vmem>>, %arg10: memref<128x128xbf16, #tpu.memory_space<vmem>>, %arg11: memref<1x128xf32, #tpu.memory_space<vmem>>, %arg12: memref<128x128xbf16, #tpu.memory_space<vmem>>, %arg13: memref<1x128xf32, #tpu.memory_space<vmem>>, %arg14: memref<128x128xbf16, #tpu.memory_space<vmem>>, %arg15: memref<1x128xf32, #tpu.memory_space<vmem>>, %arg16: memref<8x128xf32, #tpu.memory_space<vmem>>) attributes {dimension_semantics = [#tpu.dimension_semantics<parallel>], iteration_bounds = array<i64: 2>, scalar_prefetch = 0 : i64, scratch_operands = 0 : i64, tpu.core_type = #tpu.core_type<tc>, window_params = [{transform_indices = @transform_0, window_bounds = array<i64: 8, 128>}, {pipeline_mode = #tpu.pipeline_mode<synchronous>, transform_indices = @transform_1, window_bounds = array<i64: 128, 128>}, {pipeline_mode = #tpu.pipeline_mode<synchronous>, transform_indices = @transform_2, window_bounds = array<i64: 1, 128>}, {pipeline_mode = #tpu.pipeline_mode<synchronous>, transform_indices = @transform_3, window_bounds = array<i64: 128, 128>}, {pipeline_mode = #tpu.pipeline_mode<synchronous>, transform_indices = @transform_4, window_bounds = array<i64: 1, 128>}, {pipeline_mode = #tpu.pipeline_mode<synchronous>, transform_indices = @transform_5, window_bounds = array<i64: 128, 128>}, {pipeline_mode = #tpu.pipeline_mode<synchronous>, transform_indices = @transform_6, window_bounds = array<i64: 1, 128>}, {pipeline_mode = #tpu.pipeline_mode<synchronous>, transform_indices = @transform_7, window_bounds = array<i64: 128, 128>}, {pipeline_mode = #tpu.pipeline_mode<synchronous>, transform_indices = @transform_8, window_bounds = array<i64: 1, 128>}, {pipeline_mode = #tpu.pipeline_mode<synchronous>, transform_indices = @transform_9, window_bounds = array<i64: 128, 128>}, {pipeline_mode = #tpu.pipeline_mode<synchronous>, transform_indices = @transform_10, window_bounds = array<i64: 1, 128>}, {pipeline_mode = #tpu.pipeline_mode<synchronous>, transform_indices = @transform_11, window_bounds = array<i64: 128, 128>}, {pipeline_mode = #tpu.pipeline_mode<synchronous>, transform_indices = @transform_12, window_bounds = array<i64: 1, 128>}, {pipeline_mode = #tpu.pipeline_mode<synchronous>, transform_indices = @transform_13, window_bounds = array<i64: 128, 128>}, {pipeline_mode = #tpu.pipeline_mode<synchronous>, transform_indices = @transform_14, window_bounds = array<i64: 1, 128>}, {transform_indices = @transform_15, window_bounds = array<i64: 8, 128>}]} {
    %c0 = arith.constant 0 : index
    %c0_0 = arith.constant 0 : index
    %0 = vector.load %arg1[%c0, %c0_0] : memref<8x128xbf16, #tpu.memory_space<vmem>>, vector<8x128xbf16>
    %c0_1 = arith.constant 0 : index
    %c0_2 = arith.constant 0 : index
    %1 = vector.load %arg2[%c0_1, %c0_2] : memref<128x128xbf16, #tpu.memory_space<vmem>>, vector<128x128xbf16>
    %cst = arith.constant dense<0.000000e+00> : vector<8x128xf32>
    %2 = tpu.matmul %0, %1, %cst {dimension_numbers = #tpu.dot_dimension_numbers<[1], [0], [0], [1], [0, 0, 1, 1], [], []>} : vector<8x128xbf16>, vector<128x128xbf16>, vector<8x128xf32> -> vector<8x128xf32>
    %c0_3 = arith.constant 0 : index
    %c0_4 = arith.constant 0 : index
    %3 = vector.load %arg3[%c0_3, %c0_4] : memref<1x128xf32, #tpu.memory_space<vmem>>, vector<1x128xf32>
    %4 = vector.broadcast %3 : vector<1x128xf32> to vector<8x128xf32>
    %5 = arith.addf %2, %4 : vector<8x128xf32>
    %cst_5 = arith.constant 0.000000e+00 : f32
    %6 = vector.broadcast %cst_5 : f32 to vector<8x128xf32>
    %7 = arith.maximumf %5, %6 : vector<8x128xf32>
    %8 = arith.truncf %7 : vector<8x128xf32> to vector<8x128xbf16>
    %c0_6 = arith.constant 0 : index
    %c0_7 = arith.constant 0 : index
    %9 = vector.load %arg4[%c0_6, %c0_7] : memref<128x128xbf16, #tpu.memory_space<vmem>>, vector<128x128xbf16>
    %cst_8 = arith.constant dense<0.000000e+00> : vector<8x128xf32>
    %10 = tpu.matmul %8, %9, %cst_8 {dimension_numbers = #tpu.dot_dimension_numbers<[1], [0], [0], [1], [0, 0, 1, 1], [], []>} : vector<8x128xbf16>, vector<128x128xbf16>, vector<8x128xf32> -> vector<8x128xf32>
    %c0_9 = arith.constant 0 : index
    %c0_10 = arith.constant 0 : index
    %11 = vector.load %arg5[%c0_9, %c0_10] : memref<1x128xf32, #tpu.memory_space<vmem>>, vector<1x128xf32>
    %12 = vector.broadcast %11 : vector<1x128xf32> to vector<8x128xf32>
    %13 = arith.addf %10, %12 : vector<8x128xf32>
    %cst_11 = arith.constant 0.000000e+00 : f32
    %14 = vector.broadcast %cst_11 : f32 to vector<8x128xf32>
    %15 = arith.maximumf %13, %14 : vector<8x128xf32>
    %16 = arith.truncf %15 : vector<8x128xf32> to vector<8x128xbf16>
    %c0_12 = arith.constant 0 : index
    %c0_13 = arith.constant 0 : index
    %17 = vector.load %arg6[%c0_12, %c0_13] : memref<128x128xbf16, #tpu.memory_space<vmem>>, vector<128x128xbf16>
    %cst_14 = arith.constant dense<0.000000e+00> : vector<8x128xf32>
    %18 = tpu.matmul %16, %17, %cst_14 {dimension_numbers = #tpu.dot_dimension_numbers<[1], [0], [0], [1], [0, 0, 1, 1], [], []>} : vector<8x128xbf16>, vector<128x128xbf16>, vector<8x128xf32> -> vector<8x128xf32>
    %c0_15 = arith.constant 0 : index
    %c0_16 = arith.constant 0 : index
    %19 = vector.load %arg7[%c0_15, %c0_16] : memref<1x128xf32, #tpu.memory_space<vmem>>, vector<1x128xf32>
    %20 = vector.broadcast %19 : vector<1x128xf32> to vector<8x128xf32>
    %21 = arith.addf %18, %20 : vector<8x128xf32>
    %cst_17 = arith.constant 0.000000e+00 : f32
    %22 = vector.broadcast %cst_17 : f32 to vector<8x128xf32>
    %23 = arith.maximumf %21, %22 : vector<8x128xf32>
    %24 = arith.truncf %23 : vector<8x128xf32> to vector<8x128xbf16>
    %c0_18 = arith.constant 0 : index
    %c0_19 = arith.constant 0 : index
    %25 = vector.load %arg8[%c0_18, %c0_19] : memref<128x128xbf16, #tpu.memory_space<vmem>>, vector<128x128xbf16>
    %cst_20 = arith.constant dense<0.000000e+00> : vector<8x128xf32>
    %26 = tpu.matmul %24, %25, %cst_20 {dimension_numbers = #tpu.dot_dimension_numbers<[1], [0], [0], [1], [0, 0, 1, 1], [], []>} : vector<8x128xbf16>, vector<128x128xbf16>, vector<8x128xf32> -> vector<8x128xf32>
    %c0_21 = arith.constant 0 : index
    %c0_22 = arith.constant 0 : index
    %27 = vector.load %arg9[%c0_21, %c0_22] : memref<1x128xf32, #tpu.memory_space<vmem>>, vector<1x128xf32>
    %28 = vector.broadcast %27 : vector<1x128xf32> to vector<8x128xf32>
    %29 = arith.addf %26, %28 : vector<8x128xf32>
    %cst_23 = arith.constant 0.000000e+00 : f32
    %30 = vector.broadcast %cst_23 : f32 to vector<8x128xf32>
    %31 = arith.maximumf %29, %30 : vector<8x128xf32>
    %32 = arith.truncf %31 : vector<8x128xf32> to vector<8x128xbf16>
    %c0_24 = arith.constant 0 : index
    %c0_25 = arith.constant 0 : index
    %33 = vector.load %arg10[%c0_24, %c0_25] : memref<128x128xbf16, #tpu.memory_space<vmem>>, vector<128x128xbf16>
    %cst_26 = arith.constant dense<0.000000e+00> : vector<8x128xf32>
    %34 = tpu.matmul %32, %33, %cst_26 {dimension_numbers = #tpu.dot_dimension_numbers<[1], [0], [0], [1], [0, 0, 1, 1], [], []>} : vector<8x128xbf16>, vector<128x128xbf16>, vector<8x128xf32> -> vector<8x128xf32>
    %c0_27 = arith.constant 0 : index
    %c0_28 = arith.constant 0 : index
    %35 = vector.load %arg11[%c0_27, %c0_28] : memref<1x128xf32, #tpu.memory_space<vmem>>, vector<1x128xf32>
    %36 = vector.broadcast %35 : vector<1x128xf32> to vector<8x128xf32>
    %37 = arith.addf %34, %36 : vector<8x128xf32>
    %cst_29 = arith.constant 0.000000e+00 : f32
    %38 = vector.broadcast %cst_29 : f32 to vector<8x128xf32>
    %39 = arith.maximumf %37, %38 : vector<8x128xf32>
    %40 = arith.truncf %39 : vector<8x128xf32> to vector<8x128xbf16>
    %c0_30 = arith.constant 0 : index
    %c0_31 = arith.constant 0 : index
    %41 = vector.load %arg12[%c0_30, %c0_31] : memref<128x128xbf16, #tpu.memory_space<vmem>>, vector<128x128xbf16>
    %cst_32 = arith.constant dense<0.000000e+00> : vector<8x128xf32>
    %42 = tpu.matmul %40, %41, %cst_32 {dimension_numbers = #tpu.dot_dimension_numbers<[1], [0], [0], [1], [0, 0, 1, 1], [], []>} : vector<8x128xbf16>, vector<128x128xbf16>, vector<8x128xf32> -> vector<8x128xf32>
    %c0_33 = arith.constant 0 : index
    %c0_34 = arith.constant 0 : index
    %43 = vector.load %arg13[%c0_33, %c0_34] : memref<1x128xf32, #tpu.memory_space<vmem>>, vector<1x128xf32>
    %44 = vector.broadcast %43 : vector<1x128xf32> to vector<8x128xf32>
    %45 = arith.addf %42, %44 : vector<8x128xf32>
    %cst_35 = arith.constant 0.000000e+00 : f32
    %46 = vector.broadcast %cst_35 : f32 to vector<8x128xf32>
    %47 = arith.maximumf %45, %46 : vector<8x128xf32>
    %48 = arith.truncf %47 : vector<8x128xf32> to vector<8x128xbf16>
    %c0_36 = arith.constant 0 : index
    %c0_37 = arith.constant 0 : index
    %49 = vector.load %arg14[%c0_36, %c0_37] : memref<128x128xbf16, #tpu.memory_space<vmem>>, vector<128x128xbf16>
    %cst_38 = arith.constant dense<0.000000e+00> : vector<8x128xf32>
    %50 = tpu.matmul %48, %49, %cst_38 {dimension_numbers = #tpu.dot_dimension_numbers<[1], [0], [0], [1], [0, 0, 1, 1], [], []>} : vector<8x128xbf16>, vector<128x128xbf16>, vector<8x128xf32> -> vector<8x128xf32>
    %c0_39 = arith.constant 0 : index
    %c0_40 = arith.constant 0 : index
    %51 = vector.load %arg15[%c0_39, %c0_40] : memref<1x128xf32, #tpu.memory_space<vmem>>, vector<1x128xf32>
    %52 = vector.broadcast %51 : vector<1x128xf32> to vector<8x128xf32>
    %53 = arith.addf %50, %52 : vector<8x128xf32>
    %54 = tpu.iota {dimensions = array<i32: 1>} : vector<8x128xi32>
    %c16_i32 = arith.constant 16 : i32
    %55 = vector.broadcast %c16_i32 : i32 to vector<8x128xi32>
    %56 = arith.cmpi slt, %54, %55 : vector<8x128xi32>
    %cst_41 = arith.constant 0xFF800000 : f32
    %57 = vector.broadcast %cst_41 : f32 to vector<8x128xf32>
    %58 = arith.select %56, %53, %57 : vector<8x128xi1>, vector<8x128xf32>
    %cst_42 = arith.constant dense<0xFF800000> : vector<8xf32>
    %59 = vector.multi_reduction <maximumf>, %58, %cst_42 [1] : vector<8x128xf32> to vector<8xf32>
    %60 = vector.shape_cast %59 : vector<8xf32> to vector<8x1xf32>
    %61 = vector.broadcast %60 : vector<8x1xf32> to vector<8x128xf32>
    %62 = arith.subf %58, %61 : vector<8x128xf32>
    %63 = math.exp %62 : vector<8x128xf32>
    %cst_43 = arith.constant dense<0.000000e+00> : vector<8xf32>
    %64 = vector.multi_reduction <add>, %63, %cst_43 [1] : vector<8x128xf32> to vector<8xf32>
    %65 = vector.shape_cast %64 : vector<8xf32> to vector<8x1xf32>
    %66 = math.log %65 : vector<8x1xf32>
    %67 = vector.broadcast %66 : vector<8x1xf32> to vector<8x128xf32>
    %68 = arith.subf %62, %67 : vector<8x128xf32>
    %cst_44 = arith.constant 0.000000e+00 : f32
    %69 = vector.broadcast %cst_44 : f32 to vector<8x128xf32>
    %70 = arith.select %56, %68, %69 : vector<8x128xi1>, vector<8x128xf32>
    %c0_45 = arith.constant 0 : index
    %c0_46 = arith.constant 0 : index
    %71 = vector.load %arg16[%c0_45, %c0_46] : memref<8x128xf32, #tpu.memory_space<vmem>>, vector<8x128xf32>
    tpu.vector_store %arg16[%c0_45, %c0_46], %70 {strides = array<i32>} : memref<8x128xf32, #tpu.memory_space<vmem>>, vector<8x128xf32>,
    return
  }
  func.func @transform_0(%arg0: i32) -> (i32, i32) {
    %c0_i32 = arith.constant 0 : i32
    %c0_i32_0 = arith.constant 0 : i32
    return %arg0, %c0_i32 : i32, i32
  }
  func.func @transform_1(%arg0: i32) -> (i32, i32) {
    %c0_i32 = arith.constant 0 : i32
    %c0_i32_0 = arith.constant 0 : i32
    %c0_i32_1 = arith.constant 0 : i32
    return %c0_i32, %c0_i32_0 : i32, i32
  }
  func.func @transform_2(%arg0: i32) -> (i32, i32) {
    %c0_i32 = arith.constant 0 : i32
    %c0_i32_0 = arith.constant 0 : i32
    %c0_i32_1 = arith.constant 0 : i32
    return %c0_i32, %c0_i32_0 : i32, i32
  }
  func.func @transform_3(%arg0: i32) -> (i32, i32) {
    %c0_i32 = arith.constant 0 : i32
    %c0_i32_0 = arith.constant 0 : i32
    %c0_i32_1 = arith.constant 0 : i32
    return %c0_i32, %c0_i32_0 : i32, i32
  }
  func.func @transform_4(%arg0: i32) -> (i32, i32) {
    %c0_i32 = arith.constant 0 : i32
    %c0_i32_0 = arith.constant 0 : i32
    %c0_i32_1 = arith.constant 0 : i32
    return %c0_i32, %c0_i32_0 : i32, i32
  }
  func.func @transform_5(%arg0: i32) -> (i32, i32) {
    %c0_i32 = arith.constant 0 : i32
    %c0_i32_0 = arith.constant 0 : i32
    %c0_i32_1 = arith.constant 0 : i32
    return %c0_i32, %c0_i32_0 : i32, i32
  }
  func.func @transform_6(%arg0: i32) -> (i32, i32) {
    %c0_i32 = arith.constant 0 : i32
    %c0_i32_0 = arith.constant 0 : i32
    %c0_i32_1 = arith.constant 0 : i32
    return %c0_i32, %c0_i32_0 : i32, i32
  }
  func.func @transform_7(%arg0: i32) -> (i32, i32) {
    %c0_i32 = arith.constant 0 : i32
    %c0_i32_0 = arith.constant 0 : i32
    %c0_i32_1 = arith.constant 0 : i32
    return %c0_i32, %c0_i32_0 : i32, i32
  }
  func.func @transform_8(%arg0: i32) -> (i32, i32) {
    %c0_i32 = arith.constant 0 : i32
    %c0_i32_0 = arith.constant 0 : i32
    %c0_i32_1 = arith.constant 0 : i32
    return %c0_i32, %c0_i32_0 : i32, i32
  }
  func.func @transform_9(%arg0: i32) -> (i32, i32) {
    %c0_i32 = arith.constant 0 : i32
    %c0_i32_0 = arith.constant 0 : i32
    %c0_i32_1 = arith.constant 0 : i32
    return %c0_i32, %c0_i32_0 : i32, i32
  }
  func.func @transform_10(%arg0: i32) -> (i32, i32) {
    %c0_i32 = arith.constant 0 : i32
    %c0_i32_0 = arith.constant 0 : i32
    %c0_i32_1 = arith.constant 0 : i32
    return %c0_i32, %c0_i32_0 : i32, i32
  }
  func.func @transform_11(%arg0: i32) -> (i32, i32) {
    %c0_i32 = arith.constant 0 : i32
    %c0_i32_0 = arith.constant 0 : i32
    %c0_i32_1 = arith.constant 0 : i32
    return %c0_i32, %c0_i32_0 : i32, i32
  }
  func.func @transform_12(%arg0: i32) -> (i32, i32) {
    %c0_i32 = arith.constant 0 : i32
    %c0_i32_0 = arith.constant 0 : i32
    %c0_i32_1 = arith.constant 0 : i32
    return %c0_i32, %c0_i32_0 : i32, i32
  }
  func.func @transform_13(%arg0: i32) -> (i32, i32) {
    %c0_i32 = arith.constant 0 : i32
    %c0_i32_0 = arith.constant 0 : i32
    %c0_i32_1 = arith.constant 0 : i32
    return %c0_i32, %c0_i32_0 : i32, i32
  }
  func.func @transform_14(%arg0: i32) -> (i32, i32) {
    %c0_i32 = arith.constant 0 : i32
    %c0_i32_0 = arith.constant 0 : i32
    %c0_i32_1 = arith.constant 0 : i32
    return %c0_i32, %c0_i32_0 : i32, i32
  }
  func.func @transform_15(%arg0: i32) -> (i32, i32) {
    %c0_i32 = arith.constant 0 : i32
    %c0_i32_0 = arith.constant 0 : i32
    return %arg0, %c0_i32 : i32, i32
  }
}

module attributes {stable_mosaic.version = 11 : i64} {
  func.func @kernel(%arg0: i32, %arg1: memref<8x128xbf16, #tpu.memory_space<vmem>>, %arg2: memref<128x128xbf16, #tpu.memory_space<vmem>>, %arg3: memref<1x128xf32, #tpu.memory_space<vmem>>, %arg4: memref<128x128xbf16, #tpu.memory_space<vmem>>, %arg5: memref<1x128xf32, #tpu.memory_space<vmem>>, %arg6: memref<128x128xbf16, #tpu.memory_space<vmem>>, %arg7: memref<1x128xf32, #tpu.memory_space<vmem>>, %arg8: memref<128x128xbf16, #tpu.memory_space<vmem>>, %arg9: memref<1x128xf32, #tpu.memory_space<vmem>>, %arg10: memref<128x128xbf16, #tpu.memory_space<vmem>>, %arg11: memref<1x128xf32, #tpu.memory_space<vmem>>, %arg12: memref<128x128xbf16, #tpu.memory_space<vmem>>, %arg13: memref<1x128xf32, #tpu.memory_space<vmem>>, %arg14: memref<128x128xbf16, #tpu.memory_space<vmem>>, %arg15: memref<1x128xf32, #tpu.memory_space<vmem>>, %arg16: memref<8x128xf32, #tpu.memory_space<vmem>>) attributes {dimension_semantics = [#tpu.dimension_semantics<parallel>], iteration_bounds = array<i64: 2>, scalar_prefetch = 0 : i64, scratch_operands = 0 : i64, tpu.core_type = #tpu.core_type<tc>, window_params = [{transform_indices = @transform_0, window_bounds = array<i64: 8, 128>}, {pipeline_mode = #tpu.pipeline_mode<synchronous>, transform_indices = @transform_1, window_bounds = array<i64: 128, 128>}, {pipeline_mode = #tpu.pipeline_mode<synchronous>, transform_indices = @transform_2, window_bounds = array<i64: 1, 128>}, {pipeline_mode = #tpu.pipeline_mode<synchronous>, transform_indices = @transform_3, window_bounds = array<i64: 128, 128>}, {pipeline_mode = #tpu.pipeline_mode<synchronous>, transform_indices = @transform_4, window_bounds = array<i64: 1, 128>}, {pipeline_mode = #tpu.pipeline_mode<synchronous>, transform_indices = @transform_5, window_bounds = array<i64: 128, 128>}, {pipeline_mode = #tpu.pipeline_mode<synchronous>, transform_indices = @transform_6, window_bounds = array<i64: 1, 128>}, {pipeline_mode = #tpu.pipeline_mode<synchronous>, transform_indices = @transform_7, window_bounds = array<i64: 128, 128>}, {pipeline_mode = #tpu.pipeline_mode<synchronous>, transform_indices = @transform_8, window_bounds = array<i64: 1, 128>}, {pipeline_mode = #tpu.pipeline_mode<synchronous>, transform_indices = @transform_9, window_bounds = array<i64: 128, 128>}, {pipeline_mode = #tpu.pipeline_mode<synchronous>, transform_indices = @transform_10, window_bounds = array<i64: 1, 128>}, {pipeline_mode = #tpu.pipeline_mode<synchronous>, transform_indices = @transform_11, window_bounds = array<i64: 128, 128>}, {pipeline_mode = #tpu.pipeline_mode<synchronous>, transform_indices = @transform_12, window_bounds = array<i64: 1, 128>}, {pipeline_mode = #tpu.pipeline_mode<synchronous>, transform_indices = @transform_13, window_bounds = array<i64: 128, 128>}, {pipeline_mode = #tpu.pipeline_mode<synchronous>, transform_indices = @transform_14, window_bounds = array<i64: 1, 128>}, {transform_indices = @transform_15, window_bounds = array<i64: 8, 128>}]} {
    %c0 = arith.constant 0 : index
    %c0_0 = arith.constant 0 : index
    %0 = vector.load %arg1[%c0, %c0_0] : memref<8x128xbf16, #tpu.memory_space<vmem>>, vector<8x128xbf16>
    %c0_1 = arith.constant 0 : index
    %c0_2 = arith.constant 0 : index
    %1 = vector.load %arg2[%c0_1, %c0_2] : memref<128x128xbf16, #tpu.memory_space<vmem>>, vector<128x128xbf16>
    %cst = arith.constant dense<0.000000e+00> : vector<8x128xf32>
    %2 = tpu.matmul %0, %1, %cst {dimension_numbers = #tpu.dot_dimension_numbers<[1], [0], [0], [1], [0, 0, 1, 1], [], []>} : vector<8x128xbf16>, vector<128x128xbf16>, vector<8x128xf32> -> vector<8x128xf32>
    %c0_3 = arith.constant 0 : index
    %c0_4 = arith.constant 0 : index
    %3 = vector.load %arg3[%c0_3, %c0_4] : memref<1x128xf32, #tpu.memory_space<vmem>>, vector<1x128xf32>
    %4 = vector.broadcast %3 : vector<1x128xf32> to vector<8x128xf32>
    %5 = arith.addf %2, %4 : vector<8x128xf32>
    %cst_5 = arith.constant 0.000000e+00 : f32
    %6 = vector.broadcast %cst_5 : f32 to vector<8x128xf32>
    %7 = arith.maximumf %5, %6 : vector<8x128xf32>
    %8 = arith.truncf %7 : vector<8x128xf32> to vector<8x128xbf16>
    %c0_6 = arith.constant 0 : index
    %c0_7 = arith.constant 0 : index
    %9 = vector.load %arg4[%c0_6, %c0_7] : memref<128x128xbf16, #tpu.memory_space<vmem>>, vector<128x128xbf16>
    %cst_8 = arith.constant dense<0.000000e+00> : vector<8x128xf32>
    %10 = tpu.matmul %8, %9, %cst_8 {dimension_numbers = #tpu.dot_dimension_numbers<[1], [0], [0], [1], [0, 0, 1, 1], [], []>} : vector<8x128xbf16>, vector<128x128xbf16>, vector<8x128xf32> -> vector<8x128xf32>
    %c0_9 = arith.constant 0 : index
    %c0_10 = arith.constant 0 : index
    %11 = vector.load %arg5[%c0_9, %c0_10] : memref<1x128xf32, #tpu.memory_space<vmem>>, vector<1x128xf32>
    %12 = vector.broadcast %11 : vector<1x128xf32> to vector<8x128xf32>
    %13 = arith.addf %10, %12 : vector<8x128xf32>
    %cst_11 = arith.constant 0.000000e+00 : f32
    %14 = vector.broadcast %cst_11 : f32 to vector<8x128xf32>
    %15 = arith.maximumf %13, %14 : vector<8x128xf32>
    %16 = arith.truncf %15 : vector<8x128xf32> to vector<8x128xbf16>
    %c0_12 = arith.constant 0 : index
    %c0_13 = arith.constant 0 : index
    %17 = vector.load %arg6[%c0_12, %c0_13] : memref<128x128xbf16, #tpu.memory_space<vmem>>, vector<128x128xbf16>
    %cst_14 = arith.constant dense<0.000000e+00> : vector<8x128xf32>
    %18 = tpu.matmul %16, %17, %cst_14 {dimension_numbers = #tpu.dot_dimension_numbers<[1], [0], [0], [1], [0, 0, 1, 1], [], []>} : vector<8x128xbf16>, vector<128x128xbf16>, vector<8x128xf32> -> vector<8x128xf32>
    %c0_15 = arith.constant 0 : index
    %c0_16 = arith.constant 0 : index
    %19 = vector.load %arg7[%c0_15, %c0_16] : memref<1x128xf32, #tpu.memory_space<vmem>>, vector<1x128xf32>
    %20 = vector.broadcast %19 : vector<1x128xf32> to vector<8x128xf32>
    %21 = arith.addf %18, %20 : vector<8x128xf32>
    %cst_17 = arith.constant 0.000000e+00 : f32
    %22 = vector.broadcast %cst_17 : f32 to vector<8x128xf32>
    %23 = arith.maximumf %21, %22 : vector<8x128xf32>
    %24 = arith.truncf %23 : vector<8x128xf32> to vector<8x128xbf16>
    %c0_18 = arith.constant 0 : index
    %c0_19 = arith.constant 0 : index
    %25 = vector.load %arg8[%c0_18, %c0_19] : memref<128x128xbf16, #tpu.memory_space<vmem>>, vector<128x128xbf16>
    %cst_20 = arith.constant dense<0.000000e+00> : vector<8x128xf32>
    %26 = tpu.matmul %24, %25, %cst_20 {dimension_numbers = #tpu.dot_dimension_numbers<[1], [0], [0], [1], [0, 0, 1, 1], [], []>} : vector<8x128xbf16>, vector<128x128xbf16>, vector<8x128xf32> -> vector<8x128xf32>
    %c0_21 = arith.constant 0 : index
    %c0_22 = arith.constant 0 : index
    %27 = vector.load %arg9[%c0_21, %c0_22] : memref<1x128xf32, #tpu.memory_space<vmem>>, vector<1x128xf32>
    %28 = vector.broadcast %27 : vector<1x128xf32> to vector<8x128xf32>
    %29 = arith.addf %26, %28 : vector<8x128xf32>
    %cst_23 = arith.constant 0.000000e+00 : f32
    %30 = vector.broadcast %cst_23 : f32 to vector<8x128xf32>
    %31 = arith.maximumf %29, %30 : vector<8x128xf32>
    %32 = arith.truncf %31 : vector<8x128xf32> to vector<8x128xbf16>
    %c0_24 = arith.constant 0 : index
    %c0_25 = arith.constant 0 : index
    %33 = vector.load %arg10[%c0_24, %c0_25] : memref<128x128xbf16, #tpu.memory_space<vmem>>, vector<128x128xbf16>
    %cst_26 = arith.constant dense<0.000000e+00> : vector<8x128xf32>
    %34 = tpu.matmul %32, %33, %cst_26 {dimension_numbers = #tpu.dot_dimension_numbers<[1], [0], [0], [1], [0, 0, 1, 1], [], []>} : vector<8x128xbf16>, vector<128x128xbf16>, vector<8x128xf32> -> vector<8x128xf32>
    %c0_27 = arith.constant 0 : index
    %c0_28 = arith.constant 0 : index
    %35 = vector.load %arg11[%c0_27, %c0_28] : memref<1x128xf32, #tpu.memory_space<vmem>>, vector<1x128xf32>
    %36 = vector.broadcast %35 : vector<1x128xf32> to vector<8x128xf32>
    %37 = arith.addf %34, %36 : vector<8x128xf32>
    %cst_29 = arith.constant 0.000000e+00 : f32
    %38 = vector.broadcast %cst_29 : f32 to vector<8x128xf32>
    %39 = arith.maximumf %37, %38 : vector<8x128xf32>
    %40 = arith.truncf %39 : vector<8x128xf32> to vector<8x128xbf16>
    %c0_30 = arith.constant 0 : index
    %c0_31 = arith.constant 0 : index
    %41 = vector.load %arg12[%c0_30, %c0_31] : memref<128x128xbf16, #tpu.memory_space<vmem>>, vector<128x128xbf16>
    %cst_32 = arith.constant dense<0.000000e+00> : vector<8x128xf32>
    %42 = tpu.matmul %40, %41, %cst_32 {dimension_numbers = #tpu.dot_dimension_numbers<[1], [0], [0], [1], [0, 0, 1, 1], [], []>} : vector<8x128xbf16>, vector<128x128xbf16>, vector<8x128xf32> -> vector<8x128xf32>
    %c0_33 = arith.constant 0 : index
    %c0_34 = arith.constant 0 : index
    %43 = vector.load %arg13[%c0_33, %c0_34] : memref<1x128xf32, #tpu.memory_space<vmem>>, vector<1x128xf32>
    %44 = vector.broadcast %43 : vector<1x128xf32> to vector<8x128xf32>
    %45 = arith.addf %42, %44 : vector<8x128xf32>
    %cst_35 = arith.constant 0.000000e+00 : f32
    %46 = vector.broadcast %cst_35 : f32 to vector<8x128xf32>
    %47 = arith.maximumf %45, %46 : vector<8x128xf32>
    %48 = arith.truncf %47 : vector<8x128xf32> to vector<8x128xbf16>
    %c0_36 = arith.constant 0 : index
    %c0_37 = arith.constant 0 : index
    %49 = vector.load %arg14[%c0_36, %c0_37] : memref<128x128xbf16, #tpu.memory_space<vmem>>, vector<128x128xbf16>
    %cst_38 = arith.constant dense<0.000000e+00> : vector<8x128xf32>
    %50 = tpu.matmul %48, %49, %cst_38 {dimension_numbers = #tpu.dot_dimension_numbers<[1], [0], [0], [1], [0, 0, 1, 1], [], []>} : vector<8x128xbf16>, vector<128x128xbf16>, vector<8x128xf32> -> vector<8x128xf32>
    %c0_39 = arith.constant 0 : index
    %c0_40 = arith.constant 0 : index
    %51 = vector.load %arg15[%c0_39, %c0_40] : memref<1x128xf32, #tpu.memory_space<vmem>>, vector<1x128xf32>
    %52 = vector.broadcast %51 : vector<1x128xf32> to vector<8x128xf32>
    %53 = arith.addf %50, %52 : vector<8x128xf32>
    %54 = tpu.iota {dimensions = array<i32: 1>} : vector<8x128xi32>
    %c16_i32 = arith.constant 16 : i32
    %55 = vector.broadcast %c16_i32 : i32 to vector<8x128xi32>
    %56 = arith.cmpi slt, %54, %55 : vector<8x128xi32>
    %cst_41 = arith.constant 0xFF800000 : f32
    %57 = vector.broadcast %cst_41 : f32 to vector<8x128xf32>
    %58 = arith.select %56, %53, %57 : vector<8x128xi1>, vector<8x128xf32>
    %cst_42 = arith.constant dense<0xFF800000> : vector<8xf32>
    %59 = vector.multi_reduction <maximumf>, %58, %cst_42 [1] : vector<8x128xf32> to vector<8xf32>
    %60 = vector.shape_cast %59 : vector<8xf32> to vector<8x1xf32>
    %61 = vector.broadcast %60 : vector<8x1xf32> to vector<8x128xf32>
    %62 = arith.subf %58, %61 : vector<8x128xf32>
    %63 = math.exp %62 : vector<8x128xf32>
    %cst_43 = arith.constant dense<0.000000e+00> : vector<8xf32>
    %64 = vector.multi_reduction <add>, %63, %cst_43 [1] : vector<8x128xf32> to vector<8xf32>
    %65 = vector.shape_cast %64 : vector<8xf32> to vector<8x1xf32>
    %66 = math.log %65 : vector<8x1xf32>
    %67 = vector.broadcast %66 : vector<8x1xf32> to vector<8x128xf32>
    %68 = arith.subf %62, %67 : vector<8x128xf32>
    %cst_44 = arith.constant 0.000000e+00 : f32
    %69 = vector.broadcast %cst_44 : f32 to vector<8x128xf32>
    %70 = arith.select %56, %68, %69 : vector<8x128xi1>, vector<8x128xf32>
    %c0_45 = arith.constant 0 : index
    %c0_46 = arith.constant 0 : index
    %71 = vector.load %arg16[%c0_45, %c0_46] : memref<8x128xf32, #tpu.memory_space<vmem>>, vector<8x128xf32>
    tpu.vector_store %arg16[%c0_45, %c0_46], %70 {strides = array<i32>} : memref<8x128xf32, #tpu.memory_space<vmem>>, vector<8x128xf32>,
    return
  }
  func.func @transform_0(%arg0: i32) -> (i32, i32) {
    %c0_i32 = arith.constant 0 : i32
    %c0_i32_0 = arith.constant 0 : i32
    return %arg0, %c0_i32 : i32, i32
  }
  func.func @transform_1(%arg0: i32) -> (i32, i32) {
    %c0_i32 = arith.constant 0 : i32
    %c0_i32_0 = arith.constant 0 : i32
    %c0_i32_1 = arith.constant 0 : i32
    return %c0_i32, %c0_i32_0 : i32, i32
  }
  func.func @transform_2(%arg0: i32) -> (i32, i32) {
    %c0_i32 = arith.constant 0 : i32
    %c0_i32_0 = arith.constant 0 : i32
    %c0_i32_1 = arith.constant 0 : i32
    return %c0_i32, %c0_i32_0 : i32, i32
  }
  func.func @transform_3(%arg0: i32) -> (i32, i32) {
    %c0_i32 = arith.constant 0 : i32
    %c0_i32_0 = arith.constant 0 : i32
    %c0_i32_1 = arith.constant 0 : i32
    return %c0_i32, %c0_i32_0 : i32, i32
  }
  func.func @transform_4(%arg0: i32) -> (i32, i32) {
    %c0_i32 = arith.constant 0 : i32
    %c0_i32_0 = arith.constant 0 : i32
    %c0_i32_1 = arith.constant 0 : i32
    return %c0_i32, %c0_i32_0 : i32, i32
  }
  func.func @transform_5(%arg0: i32) -> (i32, i32) {
    %c0_i32 = arith.constant 0 : i32
    %c0_i32_0 = arith.constant 0 : i32
    %c0_i32_1 = arith.constant 0 : i32
    return %c0_i32, %c0_i32_0 : i32, i32
  }
  func.func @transform_6(%arg0: i32) -> (i32, i32) {
    %c0_i32 = arith.constant 0 : i32
    %c0_i32_0 = arith.constant 0 : i32
    %c0_i32_1 = arith.constant 0 : i32
    return %c0_i32, %c0_i32_0 : i32, i32
  }
  func.func @transform_7(%arg0: i32) -> (i32, i32) {
    %c0_i32 = arith.constant 0 : i32
    %c0_i32_0 = arith.constant 0 : i32
    %c0_i32_1 = arith.constant 0 : i32
    return %c0_i32, %c0_i32_0 : i32, i32
  }
  func.func @transform_8(%arg0: i32) -> (i32, i32) {
    %c0_i32 = arith.constant 0 : i32
    %c0_i32_0 = arith.constant 0 : i32
    %c0_i32_1 = arith.constant 0 : i32
    return %c0_i32, %c0_i32_0 : i32, i32
  }
  func.func @transform_9(%arg0: i32) -> (i32, i32) {
    %c0_i32 = arith.constant 0 : i32
    %c0_i32_0 = arith.constant 0 : i32
    %c0_i32_1 = arith.constant 0 : i32
    return %c0_i32, %c0_i32_0 : i32, i32
  }
  func.func @transform_10(%arg0: i32) -> (i32, i32) {
    %c0_i32 = arith.constant 0 : i32
    %c0_i32_0 = arith.constant 0 : i32
    %c0_i32_1 = arith.constant 0 : i32
    return %c0_i32, %c0_i32_0 : i32, i32
  }
  func.func @transform_11(%arg0: i32) -> (i32, i32) {
    %c0_i32 = arith.constant 0 : i32
    %c0_i32_0 = arith.constant 0 : i32
    %c0_i32_1 = arith.constant 0 : i32
    return %c0_i32, %c0_i32_0 : i32, i32
  }
  func.func @transform_12(%arg0: i32) -> (i32, i32) {
    %c0_i32 = arith.constant 0 : i32
    %c0_i32_0 = arith.constant 0 : i32
    %c0_i32_1 = arith.constant 0 : i32
    return %c0_i32, %c0_i32_0 : i32, i32
  }
  func.func @transform_13(%arg0: i32) -> (i32, i32) {
    %c0_i32 = arith.constant 0 : i32
    %c0_i32_0 = arith.constant 0 : i32
    %c0_i32_1 = arith.constant 0 : i32
    return %c0_i32, %c0_i32_0 : i32, i32
  }
  func.func @transform_14(%arg0: i32) -> (i32, i32) {
    %c0_i32 = arith.constant 0 : i32
    %c0_i32_0 = arith.constant 0 : i32
    %c0_i32_1 = arith.constant 0 : i32
    return %c0_i32, %c0_i32_0 : i32, i32
  }
  func.func @transform_15(%arg0: i32) -> (i32, i32) {
    %c0_i32 = arith.constant 0 : i32
    %c0_i32_0 = arith.constant 0 : i32
    return %arg0, %c0_i32 : i32, i32
  }
}

</mosaic_0001>

<llo_original>
// kernel: tpu_custom_call.1
$region0: #{tpu_custom_call.1}
  #allocation0 [shape = 'u32[]', space=smem, size = 0x4, offset = 0x4, fixed_abs, tag = 'smem constant byte address 0x4 - core index']
  #allocation1 [shape = 'u32[144,128]{1,0:T(1,128)}', space=vmem, size = 0x12000, scoped, tag = 'internal scratch']
  %s0 = inlined_call_operand.hbm [shape: bf16[16,128], index: 0, kind: input, shape index: {}]
  %s1 = inlined_call_operand.hbm [shape: bf16[128,128], index: 1, kind: input, shape index: {}]
  %s2 = inlined_call_operand.vmem [shape: f32[1,128], index: 2, kind: input, shape index: {}]
  %s3 = inlined_call_operand.hbm [shape: bf16[128,128], index: 3, kind: input, shape index: {}]
  %s4 = inlined_call_operand.vmem [shape: f32[1,128], index: 4, kind: input, shape index: {}]
  %s5 = inlined_call_operand.hbm [shape: bf16[128,128], index: 5, kind: input, shape index: {}]
  %s6 = inlined_call_operand.vmem [shape: f32[1,128], index: 6, kind: input, shape index: {}]
  %s7 = inlined_call_operand.hbm [shape: bf16[128,128], index: 7, kind: input, shape index: {}]
  %s8 = inlined_call_operand.vmem [shape: f32[1,128], index: 8, kind: input, shape index: {}]
  %s9 = inlined_call_operand.hbm [shape: bf16[128,128], index: 9, kind: input, shape index: {}]
  %s10 = inlined_call_operand.vmem [shape: f32[1,128], index: 10, kind: input, shape index: {}]
  %s11 = inlined_call_operand.hbm [shape: bf16[128,128], index: 11, kind: input, shape index: {}]
  %s12 = inlined_call_operand.vmem [shape: f32[1,128], index: 12, kind: input, shape index: {}]
  %s13 = inlined_call_operand.hbm [shape: bf16[128,128], index: 13, kind: input, shape index: {}]
  %s14 = inlined_call_operand.vmem [shape: f32[1,128], index: 14, kind: input, shape index: {}]
  %s15 = inlined_call_operand.hbm [shape: f32[16,128], index: 15, kind: output, shape index: {}]
  %s16 = sld [smem:[#allocation0]]
  $region125: #{tpu_custom_call.1} parent=0
    _
  %s18 = ssub.s32 1, %s16
  %s19 = scalar_select 0, %s18, %s16
  $region1: #{tpu_custom_call.1} parent=0
    #allocation2 [shape = 'u8[4096]{0}', space=vmem, size = 0x1000, scoped, tag = 'input window, operand 0']
    #allocation3 [shape = 's32[2]{0}', space=sflag, size = 0x8, scoped, tag = 'scoped memory for tpu_custom_call.1']
    #allocation4 [shape = 's32[2]{0}', space=sflag, size = 0x8, scoped, tag = 'scoped memory for tpu_custom_call.1']
    #allocation5 [shape = 'u8[32768]{0}', space=vmem, size = 0x8000, scoped, tag = 'input window, operand 1, single buffered']
    #allocation6 [shape = 's32[1]{0}', space=sflag, size = 0x4, scoped, tag = 'scoped memory for tpu_custom_call.1']
    #allocation7 [shape = 'u8[32768]{0}', space=vmem, size = 0x8000, scoped, tag = 'input window, operand 3, single buffered']
    #allocation8 [shape = 'u8[32768]{0}', space=vmem, size = 0x8000, scoped, tag = 'input window, operand 5, single buffered']
    #allocation9 [shape = 's32[1]{0}', space=sflag, size = 0x4, scoped, tag = 'scoped memory for tpu_custom_call.1']
    #allocation10 [shape = 'u8[32768]{0}', space=vmem, size = 0x8000, scoped, tag = 'input window, operand 7, single buffered']
    #allocation11 [shape = 'u8[32768]{0}', space=vmem, size = 0x8000, scoped, tag = 'input window, operand 9, single buffered']
    #allocation12 [shape = 's32[1]{0}', space=sflag, size = 0x4, scoped, tag = 'scoped memory for tpu_custom_call.1']
    #allocation13 [shape = 'u8[32768]{0}', space=vmem, size = 0x8000, scoped, tag = 'input window, operand 11, single buffered']
    #allocation14 [shape = 'u8[32768]{0}', space=vmem, size = 0x8000, scoped, tag = 'input window, operand 13, single buffered']
    #allocation15 [shape = 's32[1]{0}', space=sflag, size = 0x4, scoped, tag = 'scoped memory for tpu_custom_call.1']
    #allocation16 [shape = 'u8[8192]{0}', space=vmem, size = 0x2000, scoped, tag = 'output window, operand 0']
    %20 = vsyncpa [#allocation3], 0
    %s21 = scalar_lea.sflag [#allocation3], 1
    %22 = vsyncpa %s21, 0
    %23 = vsyncpa [#allocation6], 0
    %24 = vsyncpa [#allocation9], 0
    %25 = vsyncpa [#allocation12], 0
    %26 = vsyncpa [#allocation15], 0
    %27 = vsyncpa [#allocation4], 0
    %s28 = scalar_lea.sflag [#allocation4], 1
    %29 = vsyncpa %s28, 0
    loop: start=0, step=1, limit=4
    $region2: #{tpu_custom_call.1} parent=1 // loop_pre_header
      _
    $region3: #{tpu_custom_call.1} parent=1 // loop_header
      %s31 = sphi 0, %s35
      %p32 = scmp.ge.s32.totalorder %s31, 4
      %s41 = sphi 0, %s43
      %s44 = sphi 0, %s41
      %s45 = sphi 0, %s44
      %s61 = sphi 0, %s45
      %s65 = sphi 0, %s65
      %s67 = sphi 0, %s65
      %s68 = sphi 0, %s67
      %s82 = sphi 0, %s68
      %s86 = sphi 0, %s86
      %s88 = sphi 0, %s86
      %s89 = sphi 0, %s88
      %s103 = sphi 0, %s89
      %s107 = sphi 0, %s107
      %s109 = sphi 0, %s107
      %s110 = sphi 0, %s109
      %s124 = sphi 0, %s110
      %s128 = sphi 0, %s128
      %s130 = sphi 0, %s128
      %s131 = sphi 0, %s130
      %s145 = sphi 0, %s131
      %s149 = sphi 0, %s149
      %s151 = sphi 0, %s149
      %s152 = sphi 0, %s151
      %s166 = sphi 0, %s152
      %s170 = sphi 0, %s170
      %s172 = sphi 0, %s170
      %s173 = sphi 0, %s172
      %s187 = sphi 0, %s173
      %s191 = sphi 0, %s191
      %s193 = sphi 0, %s191
      %s194 = sphi 0, %s193
      %s208 = sphi 0, %s194
      %s212 = sphi 0, %s212
      %s214 = sphi 0, %s212
      %s215 = sphi 0, %s214
      %s229 = sphi 0, %s215
      %s233 = sphi 0, %s233
      %s235 = sphi 0, %s233
      %s236 = sphi 0, %s235
      %s250 = sphi 0, %s236
      %s254 = sphi 0, %s254
      %s256 = sphi 0, %s254
      %s257 = sphi 0, %s256
      %s271 = sphi 0, %s257
      %s275 = sphi 0, %s275
      %s277 = sphi 0, %s275
      %s278 = sphi 0, %s277
      %s292 = sphi 0, %s278
      %s296 = sphi 0, %s296
      %s298 = sphi 0, %s296
      %s299 = sphi 0, %s298
      %s313 = sphi 0, %s299
      %s317 = sphi 0, %s317
      %s319 = sphi 0, %s317
      %s320 = sphi 0, %s319
      %s334 = sphi 0, %s320
      %s338 = sphi 0, %s338
      %s340 = sphi 0, %s338
      %s341 = sphi 0, %s340
      %s355 = sphi 0, %s341
      %s361 = sphi 0, %s363
      %s364 = sphi 0, %s361
      %s365 = sphi 0, %s364
      %s381 = sphi 0, %s365
    $region4: #{tpu_custom_call.1} parent=1 // loop_header_branch
      %34 = sbr.rel (%p32) target = $region8
    $region5: #{tpu_custom_call.1} parent=1 // loop_body
      %s36 = ssub.s32 %s31, 1
      %s37 = ssub.s32 %s31, 2
      %s38 = sadd.s32 %s31, 1
      %s39 = ssub.s32 %s31, %s38
      %p40 = scmp.eq.s32.totalorder %s39, 0
      %s42 = sadd.s32 %s41, 1
      %s43 = scalar_select %p40, %s41, %s42
      %p46 = pneg %p40
      %p47 = scmp.eq.s32.totalorder %s31, 1
      %p48 = por %p46, %p47
      %p49 = scmp.ne.s32.totalorder %s41, %s44
      %p50 = scmp.eq.s32.totalorder %s31, 0
      %p51 = por %p49, %p50
      %p52 = scmp.ne.s32.totalorder %s41, %s44
      %p53 = scmp.eq.s32.totalorder %s36, 1
      %p54 = por %p52, %p53
      %p55 = scmp.ne.s32.totalorder %s44, %s45
      %p56 = scmp.eq.s32.totalorder %s36, 0
      %p57 = por %p55, %p56
      %p58 = scmp.ne.s32.totalorder %s44, %s45
      %p59 = scmp.eq.s32.totalorder %s37, 1
      %p60 = por %p58, %p59
      %p62 = scmp.ne.s32.totalorder %s45, %s61
      %p63 = scmp.eq.s32.totalorder %s37, 0
      %p64 = por %p62, %p63
      %s66 = sadd.s32 %s65, 1
      %p69 = scmp.eq.s32.totalorder %s31, 1
      %p70 = scmp.ne.s32.totalorder %s65, %s67
      %p71 = scmp.eq.s32.totalorder %s31, 0
      %p72 = por %p70, %p71
      %p73 = scmp.ne.s32.totalorder %s65, %s67
      %p74 = scmp.eq.s32.totalorder %s36, 1
      %p75 = por %p73, %p74
      %p76 = scmp.ne.s32.totalorder %s67, %s68
      %p77 = scmp.eq.s32.totalorder %s36, 0
      %p78 = por %p76, %p77
      %p79 = scmp.ne.s32.totalorder %s67, %s68
      %p80 = scmp.eq.s32.totalorder %s37, 1
      %p81 = por %p79, %p80
      %p83 = scmp.ne.s32.totalorder %s68, %s82
      %p84 = scmp.eq.s32.totalorder %s37, 0
      %p85 = por %p83, %p84
      %s87 = sadd.s32 %s86, 1
      %p90 = scmp.eq.s32.totalorder %s31, 1
      %p91 = scmp.ne.s32.totalorder %s86, %s88
      %p92 = scmp.eq.s32.totalorder %s31, 0
      %p93 = por %p91, %p92
      %p94 = scmp.ne.s32.totalorder %s86, %s88
      %p95 = scmp.eq.s32.totalorder %s36, 1
      %p96 = por %p94, %p95
      %p97 = scmp.ne.s32.totalorder %s88, %s89
      %p98 = scmp.eq.s32.totalorder %s36, 0
      %p99 = por %p97, %p98
      %p100 = scmp.ne.s32.totalorder %s88, %s89
      %p101 = scmp.eq.s32.totalorder %s37, 1
      %p102 = por %p100, %p101
      %p104 = scmp.ne.s32.totalorder %s89, %s103
      %p105 = scmp.eq.s32.totalorder %s37, 0
      %p106 = por %p104, %p105
      %s108 = sadd.s32 %s107, 1
      %p111 = scmp.eq.s32.totalorder %s31, 1
      %p112 = scmp.ne.s32.totalorder %s107, %s109
      %p113 = scmp.eq.s32.totalorder %s31, 0
      %p114 = por %p112, %p113
      %p115 = scmp.ne.s32.totalorder %s107, %s109
      %p116 = scmp.eq.s32.totalorder %s36, 1
      %p117 = por %p115, %p116
      %p118 = scmp.ne.s32.totalorder %s109, %s110
      %p119 = scmp.eq.s32.totalorder %s36, 0
      %p120 = por %p118, %p119
      %p121 = scmp.ne.s32.totalorder %s109, %s110
      %p122 = scmp.eq.s32.totalorder %s37, 1
      %p123 = por %p121, %p122
      %p125 = scmp.ne.s32.totalorder %s110, %s124
      %p126 = scmp.eq.s32.totalorder %s37, 0
      %p127 = por %p125, %p126
      %s129 = sadd.s32 %s128, 1
      %p132 = scmp.eq.s32.totalorder %s31, 1
      %p133 = scmp.ne.s32.totalorder %s128, %s130
      %p134 = scmp.eq.s32.totalorder %s31, 0
      %p135 = por %p133, %p134
      %p136 = scmp.ne.s32.totalorder %s128, %s130
      %p137 = scmp.eq.s32.totalorder %s36, 1
      %p138 = por %p136, %p137
      %p139 = scmp.ne.s32.totalorder %s130, %s131
      %p140 = scmp.eq.s32.totalorder %s36, 0
      %p141 = por %p139, %p140
      %p142 = scmp.ne.s32.totalorder %s130, %s131
      %p143 = scmp.eq.s32.totalorder %s37, 1
      %p144 = por %p142, %p143
      %p146 = scmp.ne.s32.totalorder %s131, %s145
      %p147 = scmp.eq.s32.totalorder %s37, 0
      %p148 = por %p146, %p147
      %s150 = sadd.s32 %s149, 1
      %p153 = scmp.eq.s32.totalorder %s31, 1
      %p154 = scmp.ne.s32.totalorder %s149, %s151
      %p155 = scmp.eq.s32.totalorder %s31, 0
      %p156 = por %p154, %p155
      %p157 = scmp.ne.s32.totalorder %s149, %s151
      %p158 = scmp.eq.s32.totalorder %s36, 1
      %p159 = por %p157, %p158
      %p160 = scmp.ne.s32.totalorder %s151, %s152
      %p161 = scmp.eq.s32.totalorder %s36, 0
      %p162 = por %p160, %p161
      %p163 = scmp.ne.s32.totalorder %s151, %s152
      %p164 = scmp.eq.s32.totalorder %s37, 1
      %p165 = por %p163, %p164
      %p167 = scmp.ne.s32.totalorder %s152, %s166
      %p168 = scmp.eq.s32.totalorder %s37, 0
      %p169 = por %p167, %p168
      %s171 = sadd.s32 %s170, 1
      %p174 = scmp.eq.s32.totalorder %s31, 1
      %p175 = scmp.ne.s32.totalorder %s170, %s172
      %p176 = scmp.eq.s32.totalorder %s31, 0
      %p177 = por %p175, %p176
      %p178 = scmp.ne.s32.totalorder %s170, %s172
      %p179 = scmp.eq.s32.totalorder %s36, 1
      %p180 = por %p178, %p179
      %p181 = scmp.ne.s32.totalorder %s172, %s173
      %p182 = scmp.eq.s32.totalorder %s36, 0
      %p183 = por %p181, %p182
      %p184 = scmp.ne.s32.totalorder %s172, %s173
      %p185 = scmp.eq.s32.totalorder %s37, 1
      %p186 = por %p184, %p185
      %p188 = scmp.ne.s32.totalorder %s173, %s187
      %p189 = scmp.eq.s32.totalorder %s37, 0
      %p190 = por %p188, %p189
      %s192 = sadd.s32 %s191, 1
      %p195 = scmp.eq.s32.totalorder %s31, 1
      %p196 = scmp.ne.s32.totalorder %s191, %s193
      %p197 = scmp.eq.s32.totalorder %s31, 0
      %p198 = por %p196, %p197
      %p199 = scmp.ne.s32.totalorder %s191, %s193
      %p200 = scmp.eq.s32.totalorder %s36, 1
      %p201 = por %p199, %p200
      %p202 = scmp.ne.s32.totalorder %s193, %s194
      %p203 = scmp.eq.s32.totalorder %s36, 0
      %p204 = por %p202, %p203
      %p205 = scmp.ne.s32.totalorder %s193, %s194
      %p206 = scmp.eq.s32.totalorder %s37, 1
      %p207 = por %p205, %p206
      %p209 = scmp.ne.s32.totalorder %s194, %s208
      %p210 = scmp.eq.s32.totalorder %s37, 0
      %p211 = por %p209, %p210
      %s213 = sadd.s32 %s212, 1
      %p216 = scmp.eq.s32.totalorder %s31, 1
      %p217 = scmp.ne.s32.totalorder %s212, %s214
      %p218 = scmp.eq.s32.totalorder %s31, 0
      %p219 = por %p217, %p218
      %p220 = scmp.ne.s32.totalorder %s212, %s214
      %p221 = scmp.eq.s32.totalorder %s36, 1
      %p222 = por %p220, %p221
      %p223 = scmp.ne.s32.totalorder %s214, %s215
      %p224 = scmp.eq.s32.totalorder %s36, 0
      %p225 = por %p223, %p224
      %p226 = scmp.ne.s32.totalorder %s214, %s215
      %p227 = scmp.eq.s32.totalorder %s37, 1
      %p228 = por %p226, %p227
      %p230 = scmp.ne.s32.totalorder %s215, %s229
      %p231 = scmp.eq.s32.totalorder %s37, 0
      %p232 = por %p230, %p231
      %s234 = sadd.s32 %s233, 1
      %p237 = scmp.eq.s32.totalorder %s31, 1
      %p238 = scmp.ne.s32.totalorder %s233, %s235
      %p239 = scmp.eq.s32.totalorder %s31, 0
      %p240 = por %p238, %p239
      %p241 = scmp.ne.s32.totalorder %s233, %s235
      %p242 = scmp.eq.s32.totalorder %s36, 1
      %p243 = por %p241, %p242
      %p244 = scmp.ne.s32.totalorder %s235, %s236
      %p245 = scmp.eq.s32.totalorder %s36, 0
      %p246 = por %p244, %p245
      %p247 = scmp.ne.s32.totalorder %s235, %s236
      %p248 = scmp.eq.s32.totalorder %s37, 1
      %p249 = por %p247, %p248
      %p251 = scmp.ne.s32.totalorder %s236, %s250
      %p252 = scmp.eq.s32.totalorder %s37, 0
      %p253 = por %p251, %p252
      %s255 = sadd.s32 %s254, 1
      %p258 = scmp.eq.s32.totalorder %s31, 1
      %p259 = scmp.ne.s32.totalorder %s254, %s256
      %p260 = scmp.eq.s32.totalorder %s31, 0
      %p261 = por %p259, %p260
      %p262 = scmp.ne.s32.totalorder %s254, %s256
      %p263 = scmp.eq.s32.totalorder %s36, 1
      %p264 = por %p262, %p263
      %p265 = scmp.ne.s32.totalorder %s256, %s257
      %p266 = scmp.eq.s32.totalorder %s36, 0
      %p267 = por %p265, %p266
      %p268 = scmp.ne.s32.totalorder %s256, %s257
      %p269 = scmp.eq.s32.totalorder %s37, 1
      %p270 = por %p268, %p269
      %p272 = scmp.ne.s32.totalorder %s257, %s271
      %p273 = scmp.eq.s32.totalorder %s37, 0
      %p274 = por %p272, %p273
      %s276 = sadd.s32 %s275, 1
      %p279 = scmp.eq.s32.totalorder %s31, 1
      %p280 = scmp.ne.s32.totalorder %s275, %s277
      %p281 = scmp.eq.s32.totalorder %s31, 0
      %p282 = por %p280, %p281
      %p283 = scmp.ne.s32.totalorder %s275, %s277
      %p284 = scmp.eq.s32.totalorder %s36, 1
      %p285 = por %p283, %p284
      %p286 = scmp.ne.s32.totalorder %s277, %s278
      %p287 = scmp.eq.s32.totalorder %s36, 0
      %p288 = por %p286, %p287
      %p289 = scmp.ne.s32.totalorder %s277, %s278
      %p290 = scmp.eq.s32.totalorder %s37, 1
      %p291 = por %p289, %p290
      %p293 = scmp.ne.s32.totalorder %s278, %s292
      %p294 = scmp.eq.s32.totalorder %s37, 0
      %p295 = por %p293, %p294
      %s297 = sadd.s32 %s296, 1
      %p300 = scmp.eq.s32.totalorder %s31, 1
      %p301 = scmp.ne.s32.totalorder %s296, %s298
      %p302 = scmp.eq.s32.totalorder %s31, 0
      %p303 = por %p301, %p302
      %p304 = scmp.ne.s32.totalorder %s296, %s298
      %p305 = scmp.eq.s32.totalorder %s36, 1
      %p306 = por %p304, %p305
      %p307 = scmp.ne.s32.totalorder %s298, %s299
      %p308 = scmp.eq.s32.totalorder %s36, 0
      %p309 = por %p307, %p308
      %p310 = scmp.ne.s32.totalorder %s298, %s299
      %p311 = scmp.eq.s32.totalorder %s37, 1
      %p312 = por %p310, %p311
      %p314 = scmp.ne.s32.totalorder %s299, %s313
      %p315 = scmp.eq.s32.totalorder %s37, 0
      %p316 = por %p314, %p315
      %s318 = sadd.s32 %s317, 1
      %p321 = scmp.eq.s32.totalorder %s31, 1
      %p322 = scmp.ne.s32.totalorder %s317, %s319
      %p323 = scmp.eq.s32.totalorder %s31, 0
      %p324 = por %p322, %p323
      %p325 = scmp.ne.s32.totalorder %s317, %s319
      %p326 = scmp.eq.s32.totalorder %s36, 1
      %p327 = por %p325, %p326
      %p328 = scmp.ne.s32.totalorder %s319, %s320
      %p329 = scmp.eq.s32.totalorder %s36, 0
      %p330 = por %p328, %p329
      %p331 = scmp.ne.s32.totalorder %s319, %s320
      %p332 = scmp.eq.s32.totalorder %s37, 1
      %p333 = por %p331, %p332
      %p335 = scmp.ne.s32.totalorder %s320, %s334
      %p336 = scmp.eq.s32.totalorder %s37, 0
      %p337 = por %p335, %p336
      %s339 = sadd.s32 %s338, 1
      %p342 = scmp.eq.s32.totalorder %s31, 1
      %p343 = scmp.ne.s32.totalorder %s338, %s340
      %p344 = scmp.eq.s32.totalorder %s31, 0
      %p345 = por %p343, %p344
      %p346 = scmp.ne.s32.totalorder %s338, %s340
      %p347 = scmp.eq.s32.totalorder %s36, 1
      %p348 = por %p346, %p347
      %p349 = scmp.ne.s32.totalorder %s340, %s341
      %p350 = scmp.eq.s32.totalorder %s36, 0
      %p351 = por %p349, %p350
      %p352 = scmp.ne.s32.totalorder %s340, %s341
      %p353 = scmp.eq.s32.totalorder %s37, 1
      %p354 = por %p352, %p353
      %p356 = scmp.ne.s32.totalorder %s341, %s355
      %p357 = scmp.eq.s32.totalorder %s37, 0
      %p358 = por %p356, %p357
      %s359 = ssub.s32 %s31, %s38
      %p360 = scmp.eq.s32.totalorder %s359, 0
      %s362 = sadd.s32 %s361, 1
      %s363 = scalar_select %p360, %s361, %s362
      %p366 = pneg %p360
      %p367 = scmp.eq.s32.totalorder %s31, 1
      %p368 = por %p366, %p367
      %p369 = scmp.ne.s32.totalorder %s361, %s364
      %p370 = scmp.eq.s32.totalorder %s31, 0
      %p371 = por %p369, %p370
      %p372 = scmp.ne.s32.totalorder %s361, %s364
      %p373 = scmp.eq.s32.totalorder %s36, 1
      %p374 = por %p372, %p373
      %p375 = scmp.ne.s32.totalorder %s364, %s365
      %p376 = scmp.eq.s32.totalorder %s36, 0
      %p377 = por %p375, %p376
      %p378 = scmp.ne.s32.totalorder %s364, %s365
      %p379 = scmp.eq.s32.totalorder %s37, 1
      %p380 = por %p378, %p379
      %p382 = scmp.ne.s32.totalorder %s365, %s381
      %p383 = scmp.eq.s32.totalorder %s37, 0
      %p384 = por %p382, %p383
      %p385 = scmp.le.s32.totalorder 1, %s31
      %p386 = scmp.lt.s32.totalorder %s31, 3
      %p387 = pnand %p385, %p386
      %p388 = pneg %p387
      // Predicated region
      $region9: #{tpu_custom_call.1} parent=5 // pred_check
        _
      $region10: #{tpu_custom_call.1} parent=5 // pred_check_branch
        %390 = sbr.rel (%p387) target = $region12
      $region11: #{tpu_custom_call.1} parent=5 // pred_region
        %s391 = ssub.s32 %s31, 1
        // Predicated region
        $region13: #{tpu_custom_call.1} parent=11 // pred_check
          %p392 = pneg %p78
        $region14: #{tpu_custom_call.1} parent=11 // pred_check_branch
          %394 = sbr.rel (%p392) target = $region16
        $region15: #{tpu_custom_call.1} parent=11 // pred_region
          %s396 = ssub.s32 1024, 1024
          %397 = vsyncadd [#allocation6], %s396
          %s398 = sshll.u32 [#allocation5], 4
          %s399 = int_to_ptr.vmem [resolvable:$true] %s398
          %404 = dma.hbm_to_vmem [thread:$0]  %s1, 1024, %s399, [#allocation6], 64, 64, 4
        $region16: #{tpu_custom_call.1} parent=11 // pred_fallthru
          _
        // Predicated region
        $region17: #{tpu_custom_call.1} parent=11 // pred_check
          %p405 = pneg %p99
        $region18: #{tpu_custom_call.1} parent=11 // pred_check_branch
          %407 = sbr.rel (%p405) target = $region20
        $region19: #{tpu_custom_call.1} parent=11 // pred_region
          _
        $region20: #{tpu_custom_call.1} parent=11 // pred_fallthru
          _
        // Predicated region
        $region21: #{tpu_custom_call.1} parent=11 // pred_check
          %p408 = pneg %p120
        $region22: #{tpu_custom_call.1} parent=11 // pred_check_branch
          %410 = sbr.rel (%p408) target = $region24
        $region23: #{tpu_custom_call.1} parent=11 // pred_region
          %s412 = ssub.s32 1024, 1024
          %413 = vsyncadd [#allocation6], %s412
          %s414 = sshll.u32 [#allocation7], 4
          %s415 = int_to_ptr.vmem [resolvable:$true] %s414
          %420 = dma.hbm_to_vmem [thread:$0]  %s3, 1024, %s415, [#allocation6], 64, 64, 4
        $region24: #{tpu_custom_call.1} parent=11 // pred_fallthru
          _
        // Predicated region
        $region25: #{tpu_custom_call.1} parent=11 // pred_check
          %p421 = pneg %p141
        $region26: #{tpu_custom_call.1} parent=11 // pred_check_branch
          %423 = sbr.rel (%p421) target = $region28
        $region27: #{tpu_custom_call.1} parent=11 // pred_region
          _
        $region28: #{tpu_custom_call.1} parent=11 // pred_fallthru
          _
        // Predicated region
        $region29: #{tpu_custom_call.1} parent=11 // pred_check
          %p424 = pneg %p162
        $region30: #{tpu_custom_call.1} parent=11 // pred_check_branch
          %426 = sbr.rel (%p424) target = $region32
        $region31: #{tpu_custom_call.1} parent=11 // pred_region
          %s428 = ssub.s32 1024, 1024
          %429 = vsyncadd [#allocation9], %s428
          %s430 = sshll.u32 [#allocation8], 4
          %s431 = int_to_ptr.vmem [resolvable:$true] %s430
          %436 = dma.hbm_to_vmem [thread:$0]  %s5, 1024, %s431, [#allocation9], 64, 64, 4
        $region32: #{tpu_custom_call.1} parent=11 // pred_fallthru
          _
        // Predicated region
        $region33: #{tpu_custom_call.1} parent=11 // pred_check
          %p437 = pneg %p183
        $region34: #{tpu_custom_call.1} parent=11 // pred_check_branch
          %439 = sbr.rel (%p437) target = $region36
        $region35: #{tpu_custom_call.1} parent=11 // pred_region
          _
        $region36: #{tpu_custom_call.1} parent=11 // pred_fallthru
          _
        // Predicated region
        $region37: #{tpu_custom_call.1} parent=11 // pred_check
          %p440 = pneg %p204
        $region38: #{tpu_custom_call.1} parent=11 // pred_check_branch
          %442 = sbr.rel (%p440) target = $region40
        $region39: #{tpu_custom_call.1} parent=11 // pred_region
          %s444 = ssub.s32 1024, 1024
          %445 = vsyncadd [#allocation9], %s444
          %s446 = sshll.u32 [#allocation10], 4
          %s447 = int_to_ptr.vmem [resolvable:$true] %s446
          %452 = dma.hbm_to_vmem [thread:$0]  %s7, 1024, %s447, [#allocation9], 64, 64, 4
        $region40: #{tpu_custom_call.1} parent=11 // pred_fallthru
          _
        // Predicated region
        $region41: #{tpu_custom_call.1} parent=11 // pred_check
          %p453 = pneg %p225
        $region42: #{tpu_custom_call.1} parent=11 // pred_check_branch
          %455 = sbr.rel (%p453) target = $region44
        $region43: #{tpu_custom_call.1} parent=11 // pred_region
          _
        $region44: #{tpu_custom_call.1} parent=11 // pred_fallthru
          _
        // Predicated region
        $region45: #{tpu_custom_call.1} parent=11 // pred_check
          %p456 = pneg %p246
        $region46: #{tpu_custom_call.1} parent=11 // pred_check_branch
          %458 = sbr.rel (%p456) target = $region48
        $region47: #{tpu_custom_call.1} parent=11 // pred_region
          %s460 = ssub.s32 1024, 1024
          %461 = vsyncadd [#allocation12], %s460
          %s462 = sshll.u32 [#allocation11], 4
          %s463 = int_to_ptr.vmem [resolvable:$true] %s462
          %468 = dma.hbm_to_vmem [thread:$0]  %s9, 1024, %s463, [#allocation12], 64, 64, 4
        $region48: #{tpu_custom_call.1} parent=11 // pred_fallthru
          _
        // Predicated region
        $region49: #{tpu_custom_call.1} parent=11 // pred_check
          %p469 = pneg %p267
        $region50: #{tpu_custom_call.1} parent=11 // pred_check_branch
          %471 = sbr.rel (%p469) target = $region52
        $region51: #{tpu_custom_call.1} parent=11 // pred_region
          _
        $region52: #{tpu_custom_call.1} parent=11 // pred_fallthru
          _
        // Predicated region
        $region53: #{tpu_custom_call.1} parent=11 // pred_check
          %p472 = pneg %p288
        $region54: #{tpu_custom_call.1} parent=11 // pred_check_branch
          %474 = sbr.rel (%p472) target = $region56
        $region55: #{tpu_custom_call.1} parent=11 // pred_region
          %s476 = ssub.s32 1024, 1024
          %477 = vsyncadd [#allocation12], %s476
          %s478 = sshll.u32 [#allocation13], 4
          %s479 = int_to_ptr.vmem [resolvable:$true] %s478
          %484 = dma.hbm_to_vmem [thread:$0]  %s11, 1024, %s479, [#allocation12], 64, 64, 4
        $region56: #{tpu_custom_call.1} parent=11 // pred_fallthru
          _
        // Predicated region
        $region57: #{tpu_custom_call.1} parent=11 // pred_check
          %p485 = pneg %p309
        $region58: #{tpu_custom_call.1} parent=11 // pred_check_branch
          %487 = sbr.rel (%p485) target = $region60
        $region59: #{tpu_custom_call.1} parent=11 // pred_region
          _
        $region60: #{tpu_custom_call.1} parent=11 // pred_fallthru
          _
        // Predicated region
        $region61: #{tpu_custom_call.1} parent=11 // pred_check
          %p488 = pneg %p330
        $region62: #{tpu_custom_call.1} parent=11 // pred_check_branch
          %490 = sbr.rel (%p488) target = $region64
        $region63: #{tpu_custom_call.1} parent=11 // pred_region
          %s492 = ssub.s32 1024, 1024
          %493 = vsyncadd [#allocation15], %s492
          %s494 = sshll.u32 [#allocation14], 4
          %s495 = int_to_ptr.vmem [resolvable:$true] %s494
          %500 = dma.hbm_to_vmem [thread:$0]  %s13, 1024, %s495, [#allocation15], 64, 64, 4
        $region64: #{tpu_custom_call.1} parent=11 // pred_fallthru
          _
        // Predicated region
        $region65: #{tpu_custom_call.1} parent=11 // pred_check
          %p501 = pneg %p351
        $region66: #{tpu_custom_call.1} parent=11 // pred_check_branch
          %503 = sbr.rel (%p501) target = $region68
        $region67: #{tpu_custom_call.1} parent=11 // pred_region
          _
        $region68: #{tpu_custom_call.1} parent=11 // pred_fallthru
          _
      $region12: #{tpu_custom_call.1} parent=5 // pred_fallthru
        _
      %p504 = scmp.lt.s32.totalorder %s31, 2
      // Predicated region
      $region69: #{tpu_custom_call.1} parent=5 // pred_check
        %p505 = pneg %p504
      $region70: #{tpu_custom_call.1} parent=5 // pred_check_branch
        %507 = sbr.rel (%p505) target = $region72
      $region71: #{tpu_custom_call.1} parent=5 // pred_region
        // Predicated region
        $region73: #{tpu_custom_call.1} parent=71 // pred_check
          %p508 = pneg %p51
        $region74: #{tpu_custom_call.1} parent=71 // pred_check_branch
          %510 = sbr.rel (%p508) target = $region76
        $region75: #{tpu_custom_call.1} parent=71 // pred_region
          %s511 = sand.u32 %s41, 1
          %s512 = scalar_lea.sflag [#allocation3], %s511
          %s513 = sand.u32 %s41, 1
          %s514 = smul.addr %s513, 4
          %s515 = scalar_lea.vmem [#allocation2], %s514
          %s517 = ssub.s32 64, 64
          %518 = vsyncadd %s512, %s517
          %s519 = smul.addr %s31, 64
          %s520 = scalar_lea.hbm %s0, %s519
          %s522 = sshll.u32 %s515, 4
          %s523 = int_to_ptr.vmem [resolvable:$true] %s522
          %525 = dma.hbm_to_vmem [thread:$0]  %s520, 64, %s523, %s512
        $region76: #{tpu_custom_call.1} parent=71 // pred_fallthru
          _
      $region72: #{tpu_custom_call.1} parent=5 // pred_fallthru
        _
      %p526 = scmp.le.s32.totalorder 1, %s31
      %p527 = scmp.lt.s32.totalorder %s31, 3
      %p528 = pnand %p526, %p527
      %p529 = pneg %p528
      // Predicated region
      $region77: #{tpu_custom_call.1} parent=5 // pred_check
        _
      $region78: #{tpu_custom_call.1} parent=5 // pred_check_branch
        %531 = sbr.rel (%p528) target = $region80
      $region79: #{tpu_custom_call.1} parent=5 // pred_region
        %s532 = ssub.s32 %s31, 1
        %s533 = sand.u32 %s44, 1
        %s534 = scalar_lea.sflag [#allocation3], %s533
        %s535 = sand.u32 %s44, 1
        %s536 = smul.addr %s535, 4
        %s537 = scalar_lea.vmem [#allocation2], %s536
        // Predicated region
        $region81: #{tpu_custom_call.1} parent=79 // pred_check
          %p538 = pneg %p57
        $region82: #{tpu_custom_call.1} parent=79 // pred_check_branch
          %540 = sbr.rel (%p538) target = $region84
        $region83: #{tpu_custom_call.1} parent=79 // pred_region
          %541 = dma.done %s534, 64
        $region84: #{tpu_custom_call.1} parent=79 // pred_fallthru
          _
        // Predicated region
        $region85: #{tpu_custom_call.1} parent=79 // pred_check
          %p542 = pneg %p78
        $region86: #{tpu_custom_call.1} parent=79 // pred_check_branch
          %544 = sbr.rel (%p542) target = $region88
        $region87: #{tpu_custom_call.1} parent=79 // pred_region
          %545 = dma.done [#allocation6], 1024
        $region88: #{tpu_custom_call.1} parent=79 // pred_fallthru
          _
        // Predicated region
        $region89: #{tpu_custom_call.1} parent=79 // pred_check
          %p546 = pneg %p120
        $region90: #{tpu_custom_call.1} parent=79 // pred_check_branch
          %548 = sbr.rel (%p546) target = $region92
        $region91: #{tpu_custom_call.1} parent=79 // pred_region
          %549 = dma.done [#allocation6], 1024
        $region92: #{tpu_custom_call.1} parent=79 // pred_fallthru
          _
        // Predicated region
        $region93: #{tpu_custom_call.1} parent=79 // pred_check
          %p550 = pneg %p162
        $region94: #{tpu_custom_call.1} parent=79 // pred_check_branch
          %552 = sbr.rel (%p550) target = $region96
        $region95: #{tpu_custom_call.1} parent=79 // pred_region
          %553 = dma.done [#allocation9], 1024
        $region96: #{tpu_custom_call.1} parent=79 // pred_fallthru
          _
        // Predicated region
        $region97: #{tpu_custom_call.1} parent=79 // pred_check
          %p554 = pneg %p204
        $region98: #{tpu_custom_call.1} parent=79 // pred_check_branch
          %556 = sbr.rel (%p554) target = $region100
        $region99: #{tpu_custom_call.1} parent=79 // pred_region
          %557 = dma.done [#allocation9], 1024
        $region100: #{tpu_custom_call.1} parent=79 // pred_fallthru
          _
        // Predicated region
        $region101: #{tpu_custom_call.1} parent=79 // pred_check
          %p558 = pneg %p246
        $region102: #{tpu_custom_call.1} parent=79 // pred_check_branch
          %560 = sbr.rel (%p558) target = $region104
        $region103: #{tpu_custom_call.1} parent=79 // pred_region
          %561 = dma.done [#allocation12], 1024
        $region104: #{tpu_custom_call.1} parent=79 // pred_fallthru
          _
        // Predicated region
        $region105: #{tpu_custom_call.1} parent=79 // pred_check
          %p562 = pneg %p288
        $region106: #{tpu_custom_call.1} parent=79 // pred_check_branch
          %564 = sbr.rel (%p562) target = $region108
        $region107: #{tpu_custom_call.1} parent=79 // pred_region
          %565 = dma.done [#allocation12], 1024
        $region108: #{tpu_custom_call.1} parent=79 // pred_fallthru
          _
        // Predicated region
        $region109: #{tpu_custom_call.1} parent=79 // pred_check
          %p566 = pneg %p330
        $region110: #{tpu_custom_call.1} parent=79 // pred_check_branch
          %568 = sbr.rel (%p566) target = $region112
        $region111: #{tpu_custom_call.1} parent=79 // pred_region
          %569 = dma.done [#allocation15], 1024
        $region112: #{tpu_custom_call.1} parent=79 // pred_fallthru
          _
        %s570 = sand.u32 %s44, 1
        %s571 = scalar_lea.sflag [#allocation3], %s570
        %s572 = sand.u32 %s44, 1
        %s573 = smul.addr %s572, 4
        %s574 = scalar_lea.vmem [#allocation2], %s573
        %p575 = pneg %p57
        %p576 = pneg %p54
        %p577 = pneg %p78
        %p578 = pneg %p75
        %p579 = pneg %p99
        %p580 = pneg %p96
        %p581 = pneg %p120
        %p582 = pneg %p117
        %p583 = pneg %p141
        %p584 = pneg %p138
        %p585 = pneg %p162
        %p586 = pneg %p159
        %p587 = pneg %p183
        %p588 = pneg %p180
        %p589 = pneg %p204
        %p590 = pneg %p201
        %p591 = pneg %p225
        %p592 = pneg %p222
        %p593 = pneg %p246
        %p594 = pneg %p243
        %p595 = pneg %p267
        %p596 = pneg %p264
        %p597 = pneg %p288
        %p598 = pneg %p285
        %p599 = pneg %p309
        %p600 = pneg %p306
        %p601 = pneg %p330
        %p602 = pneg %p327
        %p603 = pneg %p351
        %p604 = pneg %p348
        %p605 = pneg %p377
        %p606 = pneg %p374
        %s607 = sand.u32 %s364, 1
        %s608 = scalar_lea.sflag [#allocation4], %s607
        %s609 = sand.u32 %s364, 1
        %s610 = smul.addr %s609, 8
        %s611 = scalar_lea.vmem [#allocation16], %s610
        %v613 = vld [vmem:[%s537] sm:$0xf]
        %v614 = vld [vmem:[#allocation5] sm:$0xf]
        %v615 = vld [vmem:[#allocation5 + $0x4] sm:$0xf]
        %v616 = vld [vmem:[#allocation5 + $0x8] sm:$0xf]
        %v617 = vld [vmem:[#allocation5 + $0xc] sm:$0xf]
        %v618 = vld [vmem:[#allocation5 + $0x10] sm:$0xf]
        %v619 = vld [vmem:[#allocation5 + $0x14] sm:$0xf]
        %v620 = vld [vmem:[#allocation5 + $0x18] sm:$0xf]
        %v621 = vld [vmem:[#allocation5 + $0x1c] sm:$0xf]
        %v622 = vld [vmem:[#allocation5 + $0x20] sm:$0xf]
        %v623 = vld [vmem:[#allocation5 + $0x24] sm:$0xf]
        %v624 = vld [vmem:[#allocation5 + $0x28] sm:$0xf]
        %v625 = vld [vmem:[#allocation5 + $0x2c] sm:$0xf]
        %v626 = vld [vmem:[#allocation5 + $0x30] sm:$0xf]
        %v627 = vld [vmem:[#allocation5 + $0x34] sm:$0xf]
        %v628 = vld [vmem:[#allocation5 + $0x38] sm:$0xf]
        %v629 = vld [vmem:[#allocation5 + $0x3c] sm:$0xf]
        %v630 = vld [vmem:[%s2] sm:$0x1]
        %v632 = vlaneseq
        %v633 = vshrl.u32 %v632, 7
        %v634 = vsub.s32 0, %v633
        %v635 = vrot.slane %v630, %v634
        %v653 = vunpack.c.l.b16 %v614
        %v654 = vunpack.c.l.b16 %v615
        %v655 = vunpack.c.l.b16 %v616
        %v656 = vunpack.c.l.b16 %v617
        %v657 = vunpack.c.l.b16 %v618
        %v658 = vunpack.c.l.b16 %v619
        %v659 = vunpack.c.l.b16 %v620
        %v660 = vunpack.c.l.b16 %v621
        %v661 = vunpack.c.l.b16 %v622
        %v662 = vunpack.c.l.b16 %v623
        %v663 = vunpack.c.l.b16 %v624
        %v664 = vunpack.c.l.b16 %v625
        %v665 = vunpack.c.l.b16 %v626
        %v666 = vunpack.c.l.b16 %v627
        %v667 = vunpack.c.l.b16 %v628
        %v668 = vunpack.c.l.b16 %v629
        %v669 = vpack.c.b16 %v654, %v653
        %v670 = vpack.c.b16 %v656, %v655
        %v671 = vpack.c.b16 %v658, %v657
        %v672 = vpack.c.b16 %v660, %v659
        %v673 = vpack.c.b16 %v662, %v661
        %v674 = vpack.c.b16 %v664, %v663
        %v675 = vpack.c.b16 %v666, %v665
        %v676 = vpack.c.b16 %v668, %v667
        %685 = vmatprep.subr.bf16.mxu0 0
        %686 = vmatpush1.bf16.msra.mxu0 %v676
        %687 = vmatprep.subr.bf16.mxu0 0
        %688 = vmatpush1.bf16.msra.mxu0 %v675
        %689 = vmatprep.subr.bf16.mxu0 0
        %690 = vmatpush1.bf16.msra.mxu0 %v674
        %691 = vmatprep.subr.bf16.mxu0 0
        %692 = vmatpush1.bf16.msra.mxu0 %v673
        %693 = vmatprep.subr.bf16.mxu0 0
        %694 = vmatpush1.bf16.msra.mxu0 %v672
        %695 = vmatprep.subr.bf16.mxu0 0
        %696 = vmatpush1.bf16.msra.mxu0 %v671
        %697 = vmatprep.subr.bf16.mxu0 0
        %698 = vmatpush1.bf16.msra.mxu0 %v670
        %699 = vmatprep.subr.bf16.mxu0 0
        %700 = vmatpush1.bf16.msra.mxu0 %v669
        %701 = vmatprep.subr.bf16.mxu0 0
        %702 = vmatpush2.bf16.msra.mxu0 0
        %703 = vmatprep.subr.bf16.mxu0 0
        %704 = vmatpush2.bf16.msra.mxu0 0
        %705 = vmatprep.subr.bf16.mxu0 0
        %706 = vmatpush2.bf16.msra.mxu0 0
        %707 = vmatprep.subr.bf16.mxu0 0
        %708 = vmatpush2.bf16.msra.mxu0 0
        %709 = vmatprep.subr.bf16.mxu0 0
        %710 = vmatpush2.bf16.msra.mxu0 0
        %711 = vmatprep.subr.bf16.mxu0 0
        %712 = vmatpush2.bf16.msra.mxu0 0
        %713 = vmatprep.subr.bf16.mxu0 0
        %714 = vmatpush2.bf16.msra.mxu0 0
        %715 = vmatprep.subr.bf16.mxu0 0
        %716 = vmatpush2.bf16.msra.mxu0 0
        %717 = vmatprep.mubr.bf16.mxu0 0
        %718 = vmatmul.mubr.bf16.gmra.mxu0 %v613
        %v719 = vpop.f32.mrf.mxu0
        %v720 = vadd.f32 %v635, %v719
        %v721 = vpop.f32.mrf.mxu0
        %v722 = vpop.f32.mrf.mxu0
        %v723 = vpop.f32.mrf.mxu0
        %724 = vdwg.mxu0
        %v725 = vmax.f32 %v720, 0.0
        %v726 = vpack.c.bf16 %v725, %v725
        %v727 = vld [vmem:[#allocation7] sm:$0xf]
        %v728 = vld [vmem:[#allocation7 + $0x4] sm:$0xf]
        %v729 = vld [vmem:[#allocation7 + $0x8] sm:$0xf]
        %v730 = vld [vmem:[#allocation7 + $0xc] sm:$0xf]
        %v731 = vld [vmem:[#allocation7 + $0x10] sm:$0xf]
        %v732 = vld [vmem:[#allocation7 + $0x14] sm:$0xf]
        %v733 = vld [vmem:[#allocation7 + $0x18] sm:$0xf]
        %v734 = vld [vmem:[#allocation7 + $0x1c] sm:$0xf]
        %v735 = vld [vmem:[#allocation7 + $0x20] sm:$0xf]
        %v736 = vld [vmem:[#allocation7 + $0x24] sm:$0xf]
        %v737 = vld [vmem:[#allocation7 + $0x28] sm:$0xf]
        %v738 = vld [vmem:[#allocation7 + $0x2c] sm:$0xf]
        %v739 = vld [vmem:[#allocation7 + $0x30] sm:$0xf]
        %v740 = vld [vmem:[#allocation7 + $0x34] sm:$0xf]
        %v741 = vld [vmem:[#allocation7 + $0x38] sm:$0xf]
        %v742 = vld [vmem:[#allocation7 + $0x3c] sm:$0xf]
        %v743 = vld [vmem:[%s4] sm:$0x1]
        %v745 = vlaneseq
        %v746 = vshrl.u32 %v745, 7
        %v747 = vsub.s32 0, %v746
        %v748 = vrot.slane %v743, %v747
        %v766 = vunpack.c.l.b16 %v727
        %v767 = vunpack.c.l.b16 %v728
        %v768 = vunpack.c.l.b16 %v729
        %v769 = vunpack.c.l.b16 %v730
        %v770 = vunpack.c.l.b16 %v731
        %v771 = vunpack.c.l.b16 %v732
        %v772 = vunpack.c.l.b16 %v733
        %v773 = vunpack.c.l.b16 %v734
        %v774 = vunpack.c.l.b16 %v735
        %v775 = vunpack.c.l.b16 %v736
        %v776 = vunpack.c.l.b16 %v737
        %v777 = vunpack.c.l.b16 %v738
        %v778 = vunpack.c.l.b16 %v739
        %v779 = vunpack.c.l.b16 %v740
        %v780 = vunpack.c.l.b16 %v741
        %v781 = vunpack.c.l.b16 %v742
        %v782 = vpack.c.b16 %v767, %v766
        %v783 = vpack.c.b16 %v769, %v768
        %v784 = vpack.c.b16 %v771, %v770
        %v785 = vpack.c.b16 %v773, %v772
        %v786 = vpack.c.b16 %v775, %v774
        %v787 = vpack.c.b16 %v777, %v776
        %v788 = vpack.c.b16 %v779, %v778
        %v789 = vpack.c.b16 %v781, %v780
        %798 = vmatprep.subr.bf16.mxu0 0
        %799 = vmatpush1.bf16.msra.mxu0 %v789
        %800 = vmatprep.subr.bf16.mxu0 0
        %801 = vmatpush1.bf16.msra.mxu0 %v788
        %802 = vmatprep.subr.bf16.mxu0 0
        %803 = vmatpush1.bf16.msra.mxu0 %v787
        %804 = vmatprep.subr.bf16.mxu0 0
        %805 = vmatpush1.bf16.msra.mxu0 %v786
        %806 = vmatprep.subr.bf16.mxu0 0
        %807 = vmatpush1.bf16.msra.mxu0 %v785
        %808 = vmatprep.subr.bf16.mxu0 0
        %809 = vmatpush1.bf16.msra.mxu0 %v784
        %810 = vmatprep.subr.bf16.mxu0 0
        %811 = vmatpush1.bf16.msra.mxu0 %v783
        %812 = vmatprep.subr.bf16.mxu0 0
        %813 = vmatpush1.bf16.msra.mxu0 %v782
        %814 = vmatprep.subr.bf16.mxu0 0
        %815 = vmatpush2.bf16.msra.mxu0 0
        %816 = vmatprep.subr.bf16.mxu0 0
        %817 = vmatpush2.bf16.msra.mxu0 0
        %818 = vmatprep.subr.bf16.mxu0 0
        %819 = vmatpush2.bf16.msra.mxu0 0
        %820 = vmatprep.subr.bf16.mxu0 0
        %821 = vmatpush2.bf16.msra.mxu0 0
        %822 = vmatprep.subr.bf16.mxu0 0
        %823 = vmatpush2.bf16.msra.mxu0 0
        %824 = vmatprep.subr.bf16.mxu0 0
        %825 = vmatpush2.bf16.msra.mxu0 0
        %826 = vmatprep.subr.bf16.mxu0 0
        %827 = vmatpush2.bf16.msra.mxu0 0
        %828 = vmatprep.subr.bf16.mxu0 0
        %829 = vmatpush2.bf16.msra.mxu0 0
        %830 = vmatprep.mubr.bf16.mxu0 0
        %831 = vmatmul.mubr.bf16.gmra.mxu0 %v726
        %v832 = vpop.f32.mrf.mxu0
        %v833 = vadd.f32 %v748, %v832
        %v834 = vpop.f32.mrf.mxu0
        %v835 = vpop.f32.mrf.mxu0
        %v836 = vpop.f32.mrf.mxu0
        %837 = vdwg.mxu0
        %v838 = vmax.f32 %v833, 0.0
        %v839 = vpack.c.bf16 %v838, %v838
        %v840 = vld [vmem:[#allocation8] sm:$0xf]
        %v841 = vld [vmem:[#allocation8 + $0x4] sm:$0xf]
        %v842 = vld [vmem:[#allocation8 + $0x8] sm:$0xf]
        %v843 = vld [vmem:[#allocation8 + $0xc] sm:$0xf]
        %v844 = vld [vmem:[#allocation8 + $0x10] sm:$0xf]
        %v845 = vld [vmem:[#allocation8 + $0x14] sm:$0xf]
        %v846 = vld [vmem:[#allocation8 + $0x18] sm:$0xf]
        %v847 = vld [vmem:[#allocation8 + $0x1c] sm:$0xf]
        %v848 = vld [vmem:[#allocation8 + $0x20] sm:$0xf]
        %v849 = vld [vmem:[#allocation8 + $0x24] sm:$0xf]
        %v850 = vld [vmem:[#allocation8 + $0x28] sm:$0xf]
        %v851 = vld [vmem:[#allocation8 + $0x2c] sm:$0xf]
        %v852 = vld [vmem:[#allocation8 + $0x30] sm:$0xf]
        %v853 = vld [vmem:[#allocation8 + $0x34] sm:$0xf]
        %v854 = vld [vmem:[#allocation8 + $0x38] sm:$0xf]
        %v855 = vld [vmem:[#allocation8 + $0x3c] sm:$0xf]
        %v856 = vld [vmem:[%s6] sm:$0x1]
        %v858 = vlaneseq
        %v859 = vshrl.u32 %v858, 7
        %v860 = vsub.s32 0, %v859
        %v861 = vrot.slane %v856, %v860
        %v879 = vunpack.c.l.b16 %v840
        %v880 = vunpack.c.l.b16 %v841
        %v881 = vunpack.c.l.b16 %v842
        %v882 = vunpack.c.l.b16 %v843
        %v883 = vunpack.c.l.b16 %v844
        %v884 = vunpack.c.l.b16 %v845
        %v885 = vunpack.c.l.b16 %v846
        %v886 = vunpack.c.l.b16 %v847
        %v887 = vunpack.c.l.b16 %v848
        %v888 = vunpack.c.l.b16 %v849
        %v889 = vunpack.c.l.b16 %v850
        %v890 = vunpack.c.l.b16 %v851
        %v891 = vunpack.c.l.b16 %v852
        %v892 = vunpack.c.l.b16 %v853
        %v893 = vunpack.c.l.b16 %v854
        %v894 = vunpack.c.l.b16 %v855
        %v895 = vpack.c.b16 %v880, %v879
        %v896 = vpack.c.b16 %v882, %v881
        %v897 = vpack.c.b16 %v884, %v883
        %v898 = vpack.c.b16 %v886, %v885
        %v899 = vpack.c.b16 %v888, %v887
        %v900 = vpack.c.b16 %v890, %v889
        %v901 = vpack.c.b16 %v892, %v891
        %v902 = vpack.c.b16 %v894, %v893
        %911 = vmatprep.subr.bf16.mxu0 0
        %912 = vmatpush1.bf16.msra.mxu0 %v902
        %913 = vmatprep.subr.bf16.mxu0 0
        %914 = vmatpush1.bf16.msra.mxu0 %v901
        %915 = vmatprep.subr.bf16.mxu0 0
        %916 = vmatpush1.bf16.msra.mxu0 %v900
        %917 = vmatprep.subr.bf16.mxu0 0
        %918 = vmatpush1.bf16.msra.mxu0 %v899
        %919 = vmatprep.subr.bf16.mxu0 0
        %920 = vmatpush1.bf16.msra.mxu0 %v898
        %921 = vmatprep.subr.bf16.mxu0 0
        %922 = vmatpush1.bf16.msra.mxu0 %v897
        %923 = vmatprep.subr.bf16.mxu0 0
        %924 = vmatpush1.bf16.msra.mxu0 %v896
        %925 = vmatprep.subr.bf16.mxu0 0
        %926 = vmatpush1.bf16.msra.mxu0 %v895
        %927 = vmatprep.subr.bf16.mxu0 0
        %928 = vmatpush2.bf16.msra.mxu0 0
        %929 = vmatprep.subr.bf16.mxu0 0
        %930 = vmatpush2.bf16.msra.mxu0 0
        %931 = vmatprep.subr.bf16.mxu0 0
        %932 = vmatpush2.bf16.msra.mxu0 0
        %933 = vmatprep.subr.bf16.mxu0 0
        %934 = vmatpush2.bf16.msra.mxu0 0
        %935 = vmatprep.subr.bf16.mxu0 0
        %936 = vmatpush2.bf16.msra.mxu0 0
        %937 = vmatprep.subr.bf16.mxu0 0
        %938 = vmatpush2.bf16.msra.mxu0 0
        %939 = vmatprep.subr.bf16.mxu0 0
        %940 = vmatpush2.bf16.msra.mxu0 0
        %941 = vmatprep.subr.bf16.mxu0 0
        %942 = vmatpush2.bf16.msra.mxu0 0
        %943 = vmatprep.mubr.bf16.mxu0 0
        %944 = vmatmul.mubr.bf16.gmra.mxu0 %v839
        %v945 = vpop.f32.mrf.mxu0
        %v946 = vadd.f32 %v861, %v945
        %v947 = vpop.f32.mrf.mxu0
        %v948 = vpop.f32.mrf.mxu0
        %v949 = vpop.f32.mrf.mxu0
        %950 = vdwg.mxu0
        %v951 = vmax.f32 %v946, 0.0
        %v952 = vpack.c.bf16 %v951, %v951
        %v953 = vld [vmem:[#allocation10] sm:$0xf]
        %v954 = vld [vmem:[#allocation10 + $0x4] sm:$0xf]
        %v955 = vld [vmem:[#allocation10 + $0x8] sm:$0xf]
        %v956 = vld [vmem:[#allocation10 + $0xc] sm:$0xf]
        %v957 = vld [vmem:[#allocation10 + $0x10] sm:$0xf]
        %v958 = vld [vmem:[#allocation10 + $0x14] sm:$0xf]
        %v959 = vld [vmem:[#allocation10 + $0x18] sm:$0xf]
        %v960 = vld [vmem:[#allocation10 + $0x1c] sm:$0xf]
        %v961 = vld [vmem:[#allocation10 + $0x20] sm:$0xf]
        %v962 = vld [vmem:[#allocation10 + $0x24] sm:$0xf]
        %v963 = vld [vmem:[#allocation10 + $0x28] sm:$0xf]
        %v964 = vld [vmem:[#allocation10 + $0x2c] sm:$0xf]
        %v965 = vld [vmem:[#allocation10 + $0x30] sm:$0xf]
        %v966 = vld [vmem:[#allocation10 + $0x34] sm:$0xf]
        %v967 = vld [vmem:[#allocation10 + $0x38] sm:$0xf]
        %v968 = vld [vmem:[#allocation10 + $0x3c] sm:$0xf]
        %v969 = vld [vmem:[%s8] sm:$0x1]
        %v971 = vlaneseq
        %v972 = vshrl.u32 %v971, 7
        %v973 = vsub.s32 0, %v972
        %v974 = vrot.slane %v969, %v973
        %v992 = vunpack.c.l.b16 %v953
        %v993 = vunpack.c.l.b16 %v954
        %v994 = vunpack.c.l.b16 %v955
        %v995 = vunpack.c.l.b16 %v956
        %v996 = vunpack.c.l.b16 %v957
        %v997 = vunpack.c.l.b16 %v958
        %v998 = vunpack.c.l.b16 %v959
        %v999 = vunpack.c.l.b16 %v960
        %v1000 = vunpack.c.l.b16 %v961
        %v1001 = vunpack.c.l.b16 %v962
        %v1002 = vunpack.c.l.b16 %v963
        %v1003 = vunpack.c.l.b16 %v964
        %v1004 = vunpack.c.l.b16 %v965
        %v1005 = vunpack.c.l.b16 %v966
        %v1006 = vunpack.c.l.b16 %v967
        %v1007 = vunpack.c.l.b16 %v968
        %v1008 = vpack.c.b16 %v993, %v992
        %v1009 = vpack.c.b16 %v995, %v994
        %v1010 = vpack.c.b16 %v997, %v996
        %v1011 = vpack.c.b16 %v999, %v998
        %v1012 = vpack.c.b16 %v1001, %v1000
        %v1013 = vpack.c.b16 %v1003, %v1002
        %v1014 = vpack.c.b16 %v1005, %v1004
        %v1015 = vpack.c.b16 %v1007, %v1006
        %1024 = vmatprep.subr.bf16.mxu0 0
        %1025 = vmatpush1.bf16.msra.mxu0 %v1015
        %1026 = vmatprep.subr.bf16.mxu0 0
        %1027 = vmatpush1.bf16.msra.mxu0 %v1014
        %1028 = vmatprep.subr.bf16.mxu0 0
        %1029 = vmatpush1.bf16.msra.mxu0 %v1013
        %1030 = vmatprep.subr.bf16.mxu0 0
        %1031 = vmatpush1.bf16.msra.mxu0 %v1012
        %1032 = vmatprep.subr.bf16.mxu0 0
        %1033 = vmatpush1.bf16.msra.mxu0 %v1011
        %1034 = vmatprep.subr.bf16.mxu0 0
        %1035 = vmatpush1.bf16.msra.mxu0 %v1010
        %1036 = vmatprep.subr.bf16.mxu0 0
        %1037 = vmatpush1.bf16.msra.mxu0 %v1009
        %1038 = vmatprep.subr.bf16.mxu0 0
        %1039 = vmatpush1.bf16.msra.mxu0 %v1008
        %1040 = vmatprep.subr.bf16.mxu0 0
        %1041 = vmatpush2.bf16.msra.mxu0 0
        %1042 = vmatprep.subr.bf16.mxu0 0
        %1043 = vmatpush2.bf16.msra.mxu0 0
        %1044 = vmatprep.subr.bf16.mxu0 0
        %1045 = vmatpush2.bf16.msra.mxu0 0
        %1046 = vmatprep.subr.bf16.mxu0 0
        %1047 = vmatpush2.bf16.msra.mxu0 0
        %1048 = vmatprep.subr.bf16.mxu0 0
        %1049 = vmatpush2.bf16.msra.mxu0 0
        %1050 = vmatprep.subr.bf16.mxu0 0
        %1051 = vmatpush2.bf16.msra.mxu0 0
        %1052 = vmatprep.subr.bf16.mxu0 0
        %1053 = vmatpush2.bf16.msra.mxu0 0
        %1054 = vmatprep.subr.bf16.mxu0 0
        %1055 = vmatpush2.bf16.msra.mxu0 0
        %1056 = vmatprep.mubr.bf16.mxu0 0
        %1057 = vmatmul.mubr.bf16.gmra.mxu0 %v952
        %v1058 = vpop.f32.mrf.mxu0
        %v1059 = vadd.f32 %v974, %v1058
        %v1060 = vpop.f32.mrf.mxu0
        %v1061 = vpop.f32.mrf.mxu0
        %v1062 = vpop.f32.mrf.mxu0
        %1063 = vdwg.mxu0
        %v1064 = vmax.f32 %v1059, 0.0
        %v1065 = vpack.c.bf16 %v1064, %v1064
        %v1066 = vld [vmem:[#allocation11] sm:$0xf]
        %v1067 = vld [vmem:[#allocation11 + $0x4] sm:$0xf]
        %v1068 = vld [vmem:[#allocation11 + $0x8] sm:$0xf]
        %v1069 = vld [vmem:[#allocation11 + $0xc] sm:$0xf]
        %v1070 = vld [vmem:[#allocation11 + $0x10] sm:$0xf]
        %v1071 = vld [vmem:[#allocation11 + $0x14] sm:$0xf]
        %v1072 = vld [vmem:[#allocation11 + $0x18] sm:$0xf]
        %v1073 = vld [vmem:[#allocation11 + $0x1c] sm:$0xf]
        %v1074 = vld [vmem:[#allocation11 + $0x20] sm:$0xf]
        %v1075 = vld [vmem:[#allocation11 + $0x24] sm:$0xf]
        %v1076 = vld [vmem:[#allocation11 + $0x28] sm:$0xf]
        %v1077 = vld [vmem:[#allocation11 + $0x2c] sm:$0xf]
        %v1078 = vld [vmem:[#allocation11 + $0x30] sm:$0xf]
        %v1079 = vld [vmem:[#allocation11 + $0x34] sm:$0xf]
        %v1080 = vld [vmem:[#allocation11 + $0x38] sm:$0xf]
        %v1081 = vld [vmem:[#allocation11 + $0x3c] sm:$0xf]
        %v1082 = vld [vmem:[%s10] sm:$0x1]
        %v1084 = vlaneseq
        %v1085 = vshrl.u32 %v1084, 7
        %v1086 = vsub.s32 0, %v1085
        %v1087 = vrot.slane %v1082, %v1086
        %v1105 = vunpack.c.l.b16 %v1066
        %v1106 = vunpack.c.l.b16 %v1067
        %v1107 = vunpack.c.l.b16 %v1068
        %v1108 = vunpack.c.l.b16 %v1069
        %v1109 = vunpack.c.l.b16 %v1070
        %v1110 = vunpack.c.l.b16 %v1071
        %v1111 = vunpack.c.l.b16 %v1072
        %v1112 = vunpack.c.l.b16 %v1073
        %v1113 = vunpack.c.l.b16 %v1074
        %v1114 = vunpack.c.l.b16 %v1075
        %v1115 = vunpack.c.l.b16 %v1076
        %v1116 = vunpack.c.l.b16 %v1077
        %v1117 = vunpack.c.l.b16 %v1078
        %v1118 = vunpack.c.l.b16 %v1079
        %v1119 = vunpack.c.l.b16 %v1080
        %v1120 = vunpack.c.l.b16 %v1081
        %v1121 = vpack.c.b16 %v1106, %v1105
        %v1122 = vpack.c.b16 %v1108, %v1107
        %v1123 = vpack.c.b16 %v1110, %v1109
        %v1124 = vpack.c.b16 %v1112, %v1111
        %v1125 = vpack.c.b16 %v1114, %v1113
        %v1126 = vpack.c.b16 %v1116, %v1115
        %v1127 = vpack.c.b16 %v1118, %v1117
        %v1128 = vpack.c.b16 %v1120, %v1119
        %1137 = vmatprep.subr.bf16.mxu0 0
        %1138 = vmatpush1.bf16.msra.mxu0 %v1128
        %1139 = vmatprep.subr.bf16.mxu0 0
        %1140 = vmatpush1.bf16.msra.mxu0 %v1127
        %1141 = vmatprep.subr.bf16.mxu0 0
        %1142 = vmatpush1.bf16.msra.mxu0 %v1126
        %1143 = vmatprep.subr.bf16.mxu0 0
        %1144 = vmatpush1.bf16.msra.mxu0 %v1125
        %1145 = vmatprep.subr.bf16.mxu0 0
        %1146 = vmatpush1.bf16.msra.mxu0 %v1124
        %1147 = vmatprep.subr.bf16.mxu0 0
        %1148 = vmatpush1.bf16.msra.mxu0 %v1123
        %1149 = vmatprep.subr.bf16.mxu0 0
        %1150 = vmatpush1.bf16.msra.mxu0 %v1122
        %1151 = vmatprep.subr.bf16.mxu0 0
        %1152 = vmatpush1.bf16.msra.mxu0 %v1121
        %1153 = vmatprep.subr.bf16.mxu0 0
        %1154 = vmatpush2.bf16.msra.mxu0 0
        %1155 = vmatprep.subr.bf16.mxu0 0
        %1156 = vmatpush2.bf16.msra.mxu0 0
        %1157 = vmatprep.subr.bf16.mxu0 0
        %1158 = vmatpush2.bf16.msra.mxu0 0
        %1159 = vmatprep.subr.bf16.mxu0 0
        %1160 = vmatpush2.bf16.msra.mxu0 0
        %1161 = vmatprep.subr.bf16.mxu0 0
        %1162 = vmatpush2.bf16.msra.mxu0 0
        %1163 = vmatprep.subr.bf16.mxu0 0
        %1164 = vmatpush2.bf16.msra.mxu0 0
        %1165 = vmatprep.subr.bf16.mxu0 0
        %1166 = vmatpush2.bf16.msra.mxu0 0
        %1167 = vmatprep.subr.bf16.mxu0 0
        %1168 = vmatpush2.bf16.msra.mxu0 0
        %1169 = vmatprep.mubr.bf16.mxu0 0
        %1170 = vmatmul.mubr.bf16.gmra.mxu0 %v1065
        %v1171 = vpop.f32.mrf.mxu0
        %v1172 = vadd.f32 %v1087, %v1171
        %v1173 = vpop.f32.mrf.mxu0
        %v1174 = vpop.f32.mrf.mxu0
        %v1175 = vpop.f32.mrf.mxu0
        %1176 = vdwg.mxu0
        %v1177 = vmax.f32 %v1172, 0.0
        %v1178 = vpack.c.bf16 %v1177, %v1177
        %v1179 = vld [vmem:[#allocation13] sm:$0xf]
        %v1180 = vld [vmem:[#allocation13 + $0x4] sm:$0xf]
        %v1181 = vld [vmem:[#allocation13 + $0x8] sm:$0xf]
        %v1182 = vld [vmem:[#allocation13 + $0xc] sm:$0xf]
        %v1183 = vld [vmem:[#allocation13 + $0x10] sm:$0xf]
        %v1184 = vld [vmem:[#allocation13 + $0x14] sm:$0xf]
        %v1185 = vld [vmem:[#allocation13 + $0x18] sm:$0xf]
        %v1186 = vld [vmem:[#allocation13 + $0x1c] sm:$0xf]
        %v1187 = vld [vmem:[#allocation13 + $0x20] sm:$0xf]
        %v1188 = vld [vmem:[#allocation13 + $0x24] sm:$0xf]
        %v1189 = vld [vmem:[#allocation13 + $0x28] sm:$0xf]
        %v1190 = vld [vmem:[#allocation13 + $0x2c] sm:$0xf]
        %v1191 = vld [vmem:[#allocation13 + $0x30] sm:$0xf]
        %v1192 = vld [vmem:[#allocation13 + $0x34] sm:$0xf]
        %v1193 = vld [vmem:[#allocation13 + $0x38] sm:$0xf]
        %v1194 = vld [vmem:[#allocation13 + $0x3c] sm:$0xf]
        %v1195 = vld [vmem:[%s12] sm:$0x1]
        %v1197 = vlaneseq
        %v1198 = vshrl.u32 %v1197, 7
        %v1199 = vsub.s32 0, %v1198
        %v1200 = vrot.slane %v1195, %v1199
        %v1218 = vunpack.c.l.b16 %v1179
        %v1219 = vunpack.c.l.b16 %v1180
        %v1220 = vunpack.c.l.b16 %v1181
        %v1221 = vunpack.c.l.b16 %v1182
        %v1222 = vunpack.c.l.b16 %v1183
        %v1223 = vunpack.c.l.b16 %v1184
        %v1224 = vunpack.c.l.b16 %v1185
        %v1225 = vunpack.c.l.b16 %v1186
        %v1226 = vunpack.c.l.b16 %v1187
        %v1227 = vunpack.c.l.b16 %v1188
        %v1228 = vunpack.c.l.b16 %v1189
        %v1229 = vunpack.c.l.b16 %v1190
        %v1230 = vunpack.c.l.b16 %v1191
        %v1231 = vunpack.c.l.b16 %v1192
        %v1232 = vunpack.c.l.b16 %v1193
        %v1233 = vunpack.c.l.b16 %v1194
        %v1234 = vpack.c.b16 %v1219, %v1218
        %v1235 = vpack.c.b16 %v1221, %v1220
        %v1236 = vpack.c.b16 %v1223, %v1222
        %v1237 = vpack.c.b16 %v1225, %v1224
        %v1238 = vpack.c.b16 %v1227, %v1226
        %v1239 = vpack.c.b16 %v1229, %v1228
        %v1240 = vpack.c.b16 %v1231, %v1230
        %v1241 = vpack.c.b16 %v1233, %v1232
        %1250 = vmatprep.subr.bf16.mxu0 0
        %1251 = vmatpush1.bf16.msra.mxu0 %v1241
        %1252 = vmatprep.subr.bf16.mxu0 0
        %1253 = vmatpush1.bf16.msra.mxu0 %v1240
        %1254 = vmatprep.subr.bf16.mxu0 0
        %1255 = vmatpush1.bf16.msra.mxu0 %v1239
        %1256 = vmatprep.subr.bf16.mxu0 0
        %1257 = vmatpush1.bf16.msra.mxu0 %v1238
        %1258 = vmatprep.subr.bf16.mxu0 0
        %1259 = vmatpush1.bf16.msra.mxu0 %v1237
        %1260 = vmatprep.subr.bf16.mxu0 0
        %1261 = vmatpush1.bf16.msra.mxu0 %v1236
        %1262 = vmatprep.subr.bf16.mxu0 0
        %1263 = vmatpush1.bf16.msra.mxu0 %v1235
        %1264 = vmatprep.subr.bf16.mxu0 0
        %1265 = vmatpush1.bf16.msra.mxu0 %v1234
        %1266 = vmatprep.subr.bf16.mxu0 0
        %1267 = vmatpush2.bf16.msra.mxu0 0
        %1268 = vmatprep.subr.bf16.mxu0 0
        %1269 = vmatpush2.bf16.msra.mxu0 0
        %1270 = vmatprep.subr.bf16.mxu0 0
        %1271 = vmatpush2.bf16.msra.mxu0 0
        %1272 = vmatprep.subr.bf16.mxu0 0
        %1273 = vmatpush2.bf16.msra.mxu0 0
        %1274 = vmatprep.subr.bf16.mxu0 0
        %1275 = vmatpush2.bf16.msra.mxu0 0
        %1276 = vmatprep.subr.bf16.mxu0 0
        %1277 = vmatpush2.bf16.msra.mxu0 0
        %1278 = vmatprep.subr.bf16.mxu0 0
        %1279 = vmatpush2.bf16.msra.mxu0 0
        %1280 = vmatprep.subr.bf16.mxu0 0
        %1281 = vmatpush2.bf16.msra.mxu0 0
        %1282 = vmatprep.mubr.bf16.mxu0 0
        %1283 = vmatmul.mubr.bf16.gmra.mxu0 %v1178
        %v1284 = vpop.f32.mrf.mxu0
        %v1285 = vadd.f32 %v1200, %v1284
        %v1286 = vpop.f32.mrf.mxu0
        %v1287 = vpop.f32.mrf.mxu0
        %v1288 = vpop.f32.mrf.mxu0
        %1289 = vdwg.mxu0
        %v1290 = vmax.f32 %v1285, 0.0
        %v1291 = vpack.c.bf16 %v1290, %v1290
        %v1292 = vld [vmem:[#allocation14] sm:$0xf]
        %v1293 = vld [vmem:[#allocation14 + $0x4] sm:$0xf]
        %v1294 = vld [vmem:[#allocation14 + $0x8] sm:$0xf]
        %v1295 = vld [vmem:[#allocation14 + $0xc] sm:$0xf]
        %v1296 = vld [vmem:[#allocation14 + $0x10] sm:$0xf]
        %v1297 = vld [vmem:[#allocation14 + $0x14] sm:$0xf]
        %v1298 = vld [vmem:[#allocation14 + $0x18] sm:$0xf]
        %v1299 = vld [vmem:[#allocation14 + $0x1c] sm:$0xf]
        %v1300 = vld [vmem:[#allocation14 + $0x20] sm:$0xf]
        %v1301 = vld [vmem:[#allocation14 + $0x24] sm:$0xf]
        %v1302 = vld [vmem:[#allocation14 + $0x28] sm:$0xf]
        %v1303 = vld [vmem:[#allocation14 + $0x2c] sm:$0xf]
        %v1304 = vld [vmem:[#allocation14 + $0x30] sm:$0xf]
        %v1305 = vld [vmem:[#allocation14 + $0x34] sm:$0xf]
        %v1306 = vld [vmem:[#allocation14 + $0x38] sm:$0xf]
        %v1307 = vld [vmem:[#allocation14 + $0x3c] sm:$0xf]
        %v1308 = vld [vmem:[%s14] sm:$0x1]
        %v1310 = vlaneseq
        %v1311 = vshrl.u32 %v1310, 7
        %v1312 = vsub.s32 0, %v1311
        %v1313 = vrot.slane %v1308, %v1312
        %v1331 = vunpack.c.l.b16 %v1292
        %v1332 = vunpack.c.l.b16 %v1293
        %v1333 = vunpack.c.l.b16 %v1294
        %v1334 = vunpack.c.l.b16 %v1295
        %v1335 = vunpack.c.l.b16 %v1296
        %v1336 = vunpack.c.l.b16 %v1297
        %v1337 = vunpack.c.l.b16 %v1298
        %v1338 = vunpack.c.l.b16 %v1299
        %v1339 = vunpack.c.l.b16 %v1300
        %v1340 = vunpack.c.l.b16 %v1301
        %v1341 = vunpack.c.l.b16 %v1302
        %v1342 = vunpack.c.l.b16 %v1303
        %v1343 = vunpack.c.l.b16 %v1304
        %v1344 = vunpack.c.l.b16 %v1305
        %v1345 = vunpack.c.l.b16 %v1306
        %v1346 = vunpack.c.l.b16 %v1307
        %v1347 = vpack.c.b16 %v1332, %v1331
        %v1348 = vpack.c.b16 %v1334, %v1333
        %v1349 = vpack.c.b16 %v1336, %v1335
        %v1350 = vpack.c.b16 %v1338, %v1337
        %v1351 = vpack.c.b16 %v1340, %v1339
        %v1352 = vpack.c.b16 %v1342, %v1341
        %v1353 = vpack.c.b16 %v1344, %v1343
        %v1354 = vpack.c.b16 %v1346, %v1345
        %1363 = vmatprep.subr.bf16.mxu0 0
        %1364 = vmatpush1.bf16.msra.mxu0 %v1354
        %1365 = vmatprep.subr.bf16.mxu0 0
        %1366 = vmatpush1.bf16.msra.mxu0 %v1353
        %1367 = vmatprep.subr.bf16.mxu0 0
        %1368 = vmatpush1.bf16.msra.mxu0 %v1352
        %1369 = vmatprep.subr.bf16.mxu0 0
        %1370 = vmatpush1.bf16.msra.mxu0 %v1351
        %1371 = vmatprep.subr.bf16.mxu0 0
        %1372 = vmatpush1.bf16.msra.mxu0 %v1350
        %1373 = vmatprep.subr.bf16.mxu0 0
        %1374 = vmatpush1.bf16.msra.mxu0 %v1349
        %1375 = vmatprep.subr.bf16.mxu0 0
        %1376 = vmatpush1.bf16.msra.mxu0 %v1348
        %1377 = vmatprep.subr.bf16.mxu0 0
        %1378 = vmatpush1.bf16.msra.mxu0 %v1347
        %1379 = vmatprep.subr.bf16.mxu0 0
        %1380 = vmatpush2.bf16.msra.mxu0 0
        %1381 = vmatprep.subr.bf16.mxu0 0
        %1382 = vmatpush2.bf16.msra.mxu0 0
        %1383 = vmatprep.subr.bf16.mxu0 0
        %1384 = vmatpush2.bf16.msra.mxu0 0
        %1385 = vmatprep.subr.bf16.mxu0 0
        %1386 = vmatpush2.bf16.msra.mxu0 0
        %1387 = vmatprep.subr.bf16.mxu0 0
        %1388 = vmatpush2.bf16.msra.mxu0 0
        %1389 = vmatprep.subr.bf16.mxu0 0
        %1390 = vmatpush2.bf16.msra.mxu0 0
        %1391 = vmatprep.subr.bf16.mxu0 0
        %1392 = vmatpush2.bf16.msra.mxu0 0
        %1393 = vmatprep.subr.bf16.mxu0 0
        %1394 = vmatpush2.bf16.msra.mxu0 0
        %1395 = vmatprep.mubr.bf16.mxu0 0
        %1396 = vmatmul.mubr.bf16.gmra.mxu0 %v1291
        %v1397 = vpop.f32.mrf.mxu0
        %v1398 = vadd.f32 %v1313, %v1397
        %v1399 = vpop.f32.mrf.mxu0
        %v1400 = vpop.f32.mrf.mxu0
        %v1401 = vpop.f32.mrf.mxu0
        %1402 = vdwg.mxu0
        %v1403 = vlaneseq
        %v1404 = vand.u32 %v1403, 127
        %vm1405 = vcmp.lt.s32.totalorder %v1404, 16
        %v1406 = vsel %vm1405, %v1398, -inf
        %1407 = vmax.xlane.f32.xlu0 %v1406
        %v1408 = vpop.xlane.xlu0 %1407
        %v1409 = vsub.f32 %v1406, %v1408
        %v1410 = vmul.f32 %v1409, 1.442695
        %v1411 = vpow.pop %v1410
        %1412 = vadd.xlane.f32.xlu0 %v1411
        %v1413 = vpop.xlane.xlu0 %1412
        %v1414 = vlog2.pop %v1413
        %v1415 = vmul.f32 %v1414, 0.6931472
        %v1416 = vsub.f32 %v1409, %v1415
        %v1417 = vsel %vm1405, %v1416, 0.0
        %1418 = vst [vmem:[%s611] sm:$0xff] %v1417
        %s1419 = sand.u32 %s364, 1
        %s1420 = scalar_lea.sflag [#allocation4], %s1419
        %s1421 = sand.u32 %s364, 1
        %s1422 = smul.addr %s1421, 8
        %s1423 = scalar_lea.vmem [#allocation16], %s1422
        // Predicated region
        $region113: #{tpu_custom_call.1} parent=79 // pred_check
          %p1424 = pneg %p374
        $region114: #{tpu_custom_call.1} parent=79 // pred_check_branch
          %1426 = sbr.rel (%p1424) target = $region116
        $region115: #{tpu_custom_call.1} parent=79 // pred_region
          %s1428 = ssub.s32 128, 128
          %1429 = vsyncadd %s1420, %s1428
          %s1430 = smul.addr %s36, 128
          %s1431 = scalar_lea.hbm %s15, %s1430
          %s1433 = sshll.u32 %s1423, 4
          %s1434 = int_to_ptr.vmem [resolvable:$true] %s1433
          %1436 = dma.vmem_to_hbm [thread:$0]  %s1434, 128, %s1431, %s1420
        $region116: #{tpu_custom_call.1} parent=79 // pred_fallthru
          _
      $region80: #{tpu_custom_call.1} parent=5 // pred_fallthru
        _
      %p1437 = scmp.le.s32.totalorder 2, %s31
      // Predicated region
      $region117: #{tpu_custom_call.1} parent=5 // pred_check
        %p1438 = pneg %p1437
      $region118: #{tpu_custom_call.1} parent=5 // pred_check_branch
        %1440 = sbr.rel (%p1438) target = $region120
      $region119: #{tpu_custom_call.1} parent=5 // pred_region
        %s1441 = ssub.s32 %s31, 2
        // Predicated region
        $region121: #{tpu_custom_call.1} parent=119 // pred_check
          %p1442 = pneg %p380
        $region122: #{tpu_custom_call.1} parent=119 // pred_check_branch
          %1444 = sbr.rel (%p1442) target = $region124
        $region123: #{tpu_custom_call.1} parent=119 // pred_region
          %s1445 = sand.u32 %s365, 1
          %s1446 = scalar_lea.sflag [#allocation4], %s1445
          %s1447 = sand.u32 %s365, 1
          %s1448 = smul.addr %s1447, 8
          %s1449 = scalar_lea.vmem [#allocation16], %s1448
          %1450 = dma.done %s1446, 128
        $region124: #{tpu_custom_call.1} parent=119 // pred_fallthru
          _
      $region120: #{tpu_custom_call.1} parent=5 // pred_fallthru
        _
    $region6: #{tpu_custom_call.1} parent=1 // loop_footer
      %s35 = sadd.s32 1, %s31
    $region7: #{tpu_custom_call.1} parent=1 // loop_footer_branch
      %30 = sbr.rel target = $region3
    $region8: #{tpu_custom_call.1} parent=1 // loop_exit
      _
    %1451 = vsyncpa [#allocation3], 1
    %s1452 = scalar_lea.sflag [#allocation3], 1
    %1453 = vsyncpa %s1452, 1
    %1454 = vsyncpa [#allocation6], 1
    %1455 = vsyncpa [#allocation9], 1
    %1456 = vsyncpa [#allocation12], 1
    %1457 = vsyncpa [#allocation15], 1
    %1458 = vsyncpa [#allocation4], 1
    %s1459 = scalar_lea.sflag [#allocation4], 1
    %1460 = vsyncpa %s1459, 1

// kernel: tpu_custom_call.1
$region0: #{tpu_custom_call.1}
  #allocation0 [shape = 'u32[]', space=smem, size = 0x4, offset = 0x4, fixed_abs, tag = 'smem constant byte address 0x4 - core index']
  #allocation1 [shape = 'u32[144,128]{1,0:T(1,128)}', space=vmem, size = 0x12000, scoped, tag = 'internal scratch']
  %s0 = inlined_call_operand.hbm [shape: bf16[16,128], index: 0, kind: input, shape index: {}]
  %s1 = inlined_call_operand.hbm [shape: bf16[128,128], index: 1, kind: input, shape index: {}]
  %s2 = inlined_call_operand.vmem [shape: f32[1,128], index: 2, kind: input, shape index: {}]
  %s3 = inlined_call_operand.hbm [shape: bf16[128,128], index: 3, kind: input, shape index: {}]
  %s4 = inlined_call_operand.vmem [shape: f32[1,128], index: 4, kind: input, shape index: {}]
  %s5 = inlined_call_operand.hbm [shape: bf16[128,128], index: 5, kind: input, shape index: {}]
  %s6 = inlined_call_operand.vmem [shape: f32[1,128], index: 6, kind: input, shape index: {}]
  %s7 = inlined_call_operand.hbm [shape: bf16[128,128], index: 7, kind: input, shape index: {}]
  %s8 = inlined_call_operand.vmem [shape: f32[1,128], index: 8, kind: input, shape index: {}]
  %s9 = inlined_call_operand.hbm [shape: bf16[128,128], index: 9, kind: input, shape index: {}]
  %s10 = inlined_call_operand.vmem [shape: f32[1,128], index: 10, kind: input, shape index: {}]
  %s11 = inlined_call_operand.hbm [shape: bf16[128,128], index: 11, kind: input, shape index: {}]
  %s12 = inlined_call_operand.vmem [shape: f32[1,128], index: 12, kind: input, shape index: {}]
  %s13 = inlined_call_operand.hbm [shape: bf16[128,128], index: 13, kind: input, shape index: {}]
  %s14 = inlined_call_operand.vmem [shape: f32[1,128], index: 14, kind: input, shape index: {}]
  %s15 = inlined_call_operand.hbm [shape: f32[16,128], index: 15, kind: output, shape index: {}]
  %s16 = sld [smem:[#allocation0]]
  $region125: #{tpu_custom_call.1} parent=0
    _
  %s18 = ssub.s32 1, %s16
  %s19 = scalar_select 0, %s18, %s16
  $region1: #{tpu_custom_call.1} parent=0
    #allocation2 [shape = 'u8[4096]{0}', space=vmem, size = 0x1000, scoped, tag = 'input window, operand 0']
    #allocation3 [shape = 's32[2]{0}', space=sflag, size = 0x8, scoped, tag = 'scoped memory for tpu_custom_call.1']
    #allocation4 [shape = 's32[2]{0}', space=sflag, size = 0x8, scoped, tag = 'scoped memory for tpu_custom_call.1']
    #allocation5 [shape = 'u8[32768]{0}', space=vmem, size = 0x8000, scoped, tag = 'input window, operand 1, single buffered']
    #allocation6 [shape = 's32[1]{0}', space=sflag, size = 0x4, scoped, tag = 'scoped memory for tpu_custom_call.1']
    #allocation7 [shape = 'u8[32768]{0}', space=vmem, size = 0x8000, scoped, tag = 'input window, operand 3, single buffered']
    #allocation8 [shape = 'u8[32768]{0}', space=vmem, size = 0x8000, scoped, tag = 'input window, operand 5, single buffered']
    #allocation9 [shape = 's32[1]{0}', space=sflag, size = 0x4, scoped, tag = 'scoped memory for tpu_custom_call.1']
    #allocation10 [shape = 'u8[32768]{0}', space=vmem, size = 0x8000, scoped, tag = 'input window, operand 7, single buffered']
    #allocation11 [shape = 'u8[32768]{0}', space=vmem, size = 0x8000, scoped, tag = 'input window, operand 9, single buffered']
    #allocation12 [shape = 's32[1]{0}', space=sflag, size = 0x4, scoped, tag = 'scoped memory for tpu_custom_call.1']
    #allocation13 [shape = 'u8[32768]{0}', space=vmem, size = 0x8000, scoped, tag = 'input window, operand 11, single buffered']
    #allocation14 [shape = 'u8[32768]{0}', space=vmem, size = 0x8000, scoped, tag = 'input window, operand 13, single buffered']
    #allocation15 [shape = 's32[1]{0}', space=sflag, size = 0x4, scoped, tag = 'scoped memory for tpu_custom_call.1']
    #allocation16 [shape = 'u8[8192]{0}', space=vmem, size = 0x2000, scoped, tag = 'output window, operand 0']
    %20 = vsyncpa [#allocation3], 0
    %s21 = scalar_lea.sflag [#allocation3], 1
    %22 = vsyncpa %s21, 0
    %23 = vsyncpa [#allocation6], 0
    %24 = vsyncpa [#allocation9], 0
    %25 = vsyncpa [#allocation12], 0
    %26 = vsyncpa [#allocation15], 0
    %27 = vsyncpa [#allocation4], 0
    %s28 = scalar_lea.sflag [#allocation4], 1
    %29 = vsyncpa %s28, 0
    loop: start=0, step=1, limit=4
    $region2: #{tpu_custom_call.1} parent=1 // loop_pre_header
      _
    $region3: #{tpu_custom_call.1} parent=1 // loop_header
      %s31 = sphi 0, %s35
      %p32 = scmp.ge.s32.totalorder %s31, 4
      %s41 = sphi 0, %s43
      %s44 = sphi 0, %s41
      %s45 = sphi 0, %s44
      %s61 = sphi 0, %s45
      %s65 = sphi 0, %s65
      %s67 = sphi 0, %s65
      %s68 = sphi 0, %s67
      %s82 = sphi 0, %s68
      %s86 = sphi 0, %s86
      %s88 = sphi 0, %s86
      %s89 = sphi 0, %s88
      %s103 = sphi 0, %s89
      %s107 = sphi 0, %s107
      %s109 = sphi 0, %s107
      %s110 = sphi 0, %s109
      %s124 = sphi 0, %s110
      %s128 = sphi 0, %s128
      %s130 = sphi 0, %s128
      %s131 = sphi 0, %s130
      %s145 = sphi 0, %s131
      %s149 = sphi 0, %s149
      %s151 = sphi 0, %s149
      %s152 = sphi 0, %s151
      %s166 = sphi 0, %s152
      %s170 = sphi 0, %s170
      %s172 = sphi 0, %s170
      %s173 = sphi 0, %s172
      %s187 = sphi 0, %s173
      %s191 = sphi 0, %s191
      %s193 = sphi 0, %s191
      %s194 = sphi 0, %s193
      %s208 = sphi 0, %s194
      %s212 = sphi 0, %s212
      %s214 = sphi 0, %s212
      %s215 = sphi 0, %s214
      %s229 = sphi 0, %s215
      %s233 = sphi 0, %s233
      %s235 = sphi 0, %s233
      %s236 = sphi 0, %s235
      %s250 = sphi 0, %s236
      %s254 = sphi 0, %s254
      %s256 = sphi 0, %s254
      %s257 = sphi 0, %s256
      %s271 = sphi 0, %s257
      %s275 = sphi 0, %s275
      %s277 = sphi 0, %s275
      %s278 = sphi 0, %s277
      %s292 = sphi 0, %s278
      %s296 = sphi 0, %s296
      %s298 = sphi 0, %s296
      %s299 = sphi 0, %s298
      %s313 = sphi 0, %s299
      %s317 = sphi 0, %s317
      %s319 = sphi 0, %s317
      %s320 = sphi 0, %s319
      %s334 = sphi 0, %s320
      %s338 = sphi 0, %s338
      %s340 = sphi 0, %s338
      %s341 = sphi 0, %s340
      %s355 = sphi 0, %s341
      %s361 = sphi 0, %s363
      %s364 = sphi 0, %s361
      %s365 = sphi 0, %s364
      %s381 = sphi 0, %s365
    $region4: #{tpu_custom_call.1} parent=1 // loop_header_branch
      %34 = sbr.rel (%p32) target = $region8
    $region5: #{tpu_custom_call.1} parent=1 // loop_body
      %s36 = ssub.s32 %s31, 1
      %s37 = ssub.s32 %s31, 2
      %s38 = sadd.s32 %s31, 1
      %s39 = ssub.s32 %s31, %s38
      %p40 = scmp.eq.s32.totalorder %s39, 0
      %s42 = sadd.s32 %s41, 1
      %s43 = scalar_select %p40, %s41, %s42
      %p46 = pneg %p40
      %p47 = scmp.eq.s32.totalorder %s31, 1
      %p48 = por %p46, %p47
      %p49 = scmp.ne.s32.totalorder %s41, %s44
      %p50 = scmp.eq.s32.totalorder %s31, 0
      %p51 = por %p49, %p50
      %p52 = scmp.ne.s32.totalorder %s41, %s44
      %p53 = scmp.eq.s32.totalorder %s36, 1
      %p54 = por %p52, %p53
      %p55 = scmp.ne.s32.totalorder %s44, %s45
      %p56 = scmp.eq.s32.totalorder %s36, 0
      %p57 = por %p55, %p56
      %p58 = scmp.ne.s32.totalorder %s44, %s45
      %p59 = scmp.eq.s32.totalorder %s37, 1
      %p60 = por %p58, %p59
      %p62 = scmp.ne.s32.totalorder %s45, %s61
      %p63 = scmp.eq.s32.totalorder %s37, 0
      %p64 = por %p62, %p63
      %s66 = sadd.s32 %s65, 1
      %p69 = scmp.eq.s32.totalorder %s31, 1
      %p70 = scmp.ne.s32.totalorder %s65, %s67
      %p71 = scmp.eq.s32.totalorder %s31, 0
      %p72 = por %p70, %p71
      %p73 = scmp.ne.s32.totalorder %s65, %s67
      %p74 = scmp.eq.s32.totalorder %s36, 1
      %p75 = por %p73, %p74
      %p76 = scmp.ne.s32.totalorder %s67, %s68
      %p77 = scmp.eq.s32.totalorder %s36, 0
      %p78 = por %p76, %p77
      %p79 = scmp.ne.s32.totalorder %s67, %s68
      %p80 = scmp.eq.s32.totalorder %s37, 1
      %p81 = por %p79, %p80
      %p83 = scmp.ne.s32.totalorder %s68, %s82
      %p84 = scmp.eq.s32.totalorder %s37, 0
      %p85 = por %p83, %p84
      %s87 = sadd.s32 %s86, 1
      %p90 = scmp.eq.s32.totalorder %s31, 1
      %p91 = scmp.ne.s32.totalorder %s86, %s88
      %p92 = scmp.eq.s32.totalorder %s31, 0
      %p93 = por %p91, %p92
      %p94 = scmp.ne.s32.totalorder %s86, %s88
      %p95 = scmp.eq.s32.totalorder %s36, 1
      %p96 = por %p94, %p95
      %p97 = scmp.ne.s32.totalorder %s88, %s89
      %p98 = scmp.eq.s32.totalorder %s36, 0
      %p99 = por %p97, %p98
      %p100 = scmp.ne.s32.totalorder %s88, %s89
      %p101 = scmp.eq.s32.totalorder %s37, 1
      %p102 = por %p100, %p101
      %p104 = scmp.ne.s32.totalorder %s89, %s103
      %p105 = scmp.eq.s32.totalorder %s37, 0
      %p106 = por %p104, %p105
      %s108 = sadd.s32 %s107, 1
      %p111 = scmp.eq.s32.totalorder %s31, 1
      %p112 = scmp.ne.s32.totalorder %s107, %s109
      %p113 = scmp.eq.s32.totalorder %s31, 0
      %p114 = por %p112, %p113
      %p115 = scmp.ne.s32.totalorder %s107, %s109
      %p116 = scmp.eq.s32.totalorder %s36, 1
      %p117 = por %p115, %p116
      %p118 = scmp.ne.s32.totalorder %s109, %s110
      %p119 = scmp.eq.s32.totalorder %s36, 0
      %p120 = por %p118, %p119
      %p121 = scmp.ne.s32.totalorder %s109, %s110
      %p122 = scmp.eq.s32.totalorder %s37, 1
      %p123 = por %p121, %p122
      %p125 = scmp.ne.s32.totalorder %s110, %s124
      %p126 = scmp.eq.s32.totalorder %s37, 0
      %p127 = por %p125, %p126
      %s129 = sadd.s32 %s128, 1
      %p132 = scmp.eq.s32.totalorder %s31, 1
      %p133 = scmp.ne.s32.totalorder %s128, %s130
      %p134 = scmp.eq.s32.totalorder %s31, 0
      %p135 = por %p133, %p134
      %p136 = scmp.ne.s32.totalorder %s128, %s130
      %p137 = scmp.eq.s32.totalorder %s36, 1
      %p138 = por %p136, %p137
      %p139 = scmp.ne.s32.totalorder %s130, %s131
      %p140 = scmp.eq.s32.totalorder %s36, 0
      %p141 = por %p139, %p140
      %p142 = scmp.ne.s32.totalorder %s130, %s131
      %p143 = scmp.eq.s32.totalorder %s37, 1
      %p144 = por %p142, %p143
      %p146 = scmp.ne.s32.totalorder %s131, %s145
      %p147 = scmp.eq.s32.totalorder %s37, 0
      %p148 = por %p146, %p147
      %s150 = sadd.s32 %s149, 1
      %p153 = scmp.eq.s32.totalorder %s31, 1
      %p154 = scmp.ne.s32.totalorder %s149, %s151
      %p155 = scmp.eq.s32.totalorder %s31, 0
      %p156 = por %p154, %p155
      %p157 = scmp.ne.s32.totalorder %s149, %s151
      %p158 = scmp.eq.s32.totalorder %s36, 1
      %p159 = por %p157, %p158
      %p160 = scmp.ne.s32.totalorder %s151, %s152
      %p161 = scmp.eq.s32.totalorder %s36, 0
      %p162 = por %p160, %p161
      %p163 = scmp.ne.s32.totalorder %s151, %s152
      %p164 = scmp.eq.s32.totalorder %s37, 1
      %p165 = por %p163, %p164
      %p167 = scmp.ne.s32.totalorder %s152, %s166
      %p168 = scmp.eq.s32.totalorder %s37, 0
      %p169 = por %p167, %p168
      %s171 = sadd.s32 %s170, 1
      %p174 = scmp.eq.s32.totalorder %s31, 1
      %p175 = scmp.ne.s32.totalorder %s170, %s172
      %p176 = scmp.eq.s32.totalorder %s31, 0
      %p177 = por %p175, %p176
      %p178 = scmp.ne.s32.totalorder %s170, %s172
      %p179 = scmp.eq.s32.totalorder %s36, 1
      %p180 = por %p178, %p179
      %p181 = scmp.ne.s32.totalorder %s172, %s173
      %p182 = scmp.eq.s32.totalorder %s36, 0
      %p183 = por %p181, %p182
      %p184 = scmp.ne.s32.totalorder %s172, %s173
      %p185 = scmp.eq.s32.totalorder %s37, 1
      %p186 = por %p184, %p185
      %p188 = scmp.ne.s32.totalorder %s173, %s187
      %p189 = scmp.eq.s32.totalorder %s37, 0
      %p190 = por %p188, %p189
      %s192 = sadd.s32 %s191, 1
      %p195 = scmp.eq.s32.totalorder %s31, 1
      %p196 = scmp.ne.s32.totalorder %s191, %s193
      %p197 = scmp.eq.s32.totalorder %s31, 0
      %p198 = por %p196, %p197
      %p199 = scmp.ne.s32.totalorder %s191, %s193
      %p200 = scmp.eq.s32.totalorder %s36, 1
      %p201 = por %p199, %p200
      %p202 = scmp.ne.s32.totalorder %s193, %s194
      %p203 = scmp.eq.s32.totalorder %s36, 0
      %p204 = por %p202, %p203
      %p205 = scmp.ne.s32.totalorder %s193, %s194
      %p206 = scmp.eq.s32.totalorder %s37, 1
      %p207 = por %p205, %p206
      %p209 = scmp.ne.s32.totalorder %s194, %s208
      %p210 = scmp.eq.s32.totalorder %s37, 0
      %p211 = por %p209, %p210
      %s213 = sadd.s32 %s212, 1
      %p216 = scmp.eq.s32.totalorder %s31, 1
      %p217 = scmp.ne.s32.totalorder %s212, %s214
      %p218 = scmp.eq.s32.totalorder %s31, 0
      %p219 = por %p217, %p218
      %p220 = scmp.ne.s32.totalorder %s212, %s214
      %p221 = scmp.eq.s32.totalorder %s36, 1
      %p222 = por %p220, %p221
      %p223 = scmp.ne.s32.totalorder %s214, %s215
      %p224 = scmp.eq.s32.totalorder %s36, 0
      %p225 = por %p223, %p224
      %p226 = scmp.ne.s32.totalorder %s214, %s215
      %p227 = scmp.eq.s32.totalorder %s37, 1
      %p228 = por %p226, %p227
      %p230 = scmp.ne.s32.totalorder %s215, %s229
      %p231 = scmp.eq.s32.totalorder %s37, 0
      %p232 = por %p230, %p231
      %s234 = sadd.s32 %s233, 1
      %p237 = scmp.eq.s32.totalorder %s31, 1
      %p238 = scmp.ne.s32.totalorder %s233, %s235
      %p239 = scmp.eq.s32.totalorder %s31, 0
      %p240 = por %p238, %p239
      %p241 = scmp.ne.s32.totalorder %s233, %s235
      %p242 = scmp.eq.s32.totalorder %s36, 1
      %p243 = por %p241, %p242
      %p244 = scmp.ne.s32.totalorder %s235, %s236
      %p245 = scmp.eq.s32.totalorder %s36, 0
      %p246 = por %p244, %p245
      %p247 = scmp.ne.s32.totalorder %s235, %s236
      %p248 = scmp.eq.s32.totalorder %s37, 1
      %p249 = por %p247, %p248
      %p251 = scmp.ne.s32.totalorder %s236, %s250
      %p252 = scmp.eq.s32.totalorder %s37, 0
      %p253 = por %p251, %p252
      %s255 = sadd.s32 %s254, 1
      %p258 = scmp.eq.s32.totalorder %s31, 1
      %p259 = scmp.ne.s32.totalorder %s254, %s256
      %p260 = scmp.eq.s32.totalorder %s31, 0
      %p261 = por %p259, %p260
      %p262 = scmp.ne.s32.totalorder %s254, %s256
      %p263 = scmp.eq.s32.totalorder %s36, 1
      %p264 = por %p262, %p263
      %p265 = scmp.ne.s32.totalorder %s256, %s257
      %p266 = scmp.eq.s32.totalorder %s36, 0
      %p267 = por %p265, %p266
      %p268 = scmp.ne.s32.totalorder %s256, %s257
      %p269 = scmp.eq.s32.totalorder %s37, 1
      %p270 = por %p268, %p269
      %p272 = scmp.ne.s32.totalorder %s257, %s271
      %p273 = scmp.eq.s32.totalorder %s37, 0
      %p274 = por %p272, %p273
      %s276 = sadd.s32 %s275, 1
      %p279 = scmp.eq.s32.totalorder %s31, 1
      %p280 = scmp.ne.s32.totalorder %s275, %s277
      %p281 = scmp.eq.s32.totalorder %s31, 0
      %p282 = por %p280, %p281
      %p283 = scmp.ne.s32.totalorder %s275, %s277
      %p284 = scmp.eq.s32.totalorder %s36, 1
      %p285 = por %p283, %p284
      %p286 = scmp.ne.s32.totalorder %s277, %s278
      %p287 = scmp.eq.s32.totalorder %s36, 0
      %p288 = por %p286, %p287
      %p289 = scmp.ne.s32.totalorder %s277, %s278
      %p290 = scmp.eq.s32.totalorder %s37, 1
      %p291 = por %p289, %p290
      %p293 = scmp.ne.s32.totalorder %s278, %s292
      %p294 = scmp.eq.s32.totalorder %s37, 0
      %p295 = por %p293, %p294
      %s297 = sadd.s32 %s296, 1
      %p300 = scmp.eq.s32.totalorder %s31, 1
      %p301 = scmp.ne.s32.totalorder %s296, %s298
      %p302 = scmp.eq.s32.totalorder %s31, 0
      %p303 = por %p301, %p302
      %p304 = scmp.ne.s32.totalorder %s296, %s298
      %p305 = scmp.eq.s32.totalorder %s36, 1
      %p306 = por %p304, %p305
      %p307 = scmp.ne.s32.totalorder %s298, %s299
      %p308 = scmp.eq.s32.totalorder %s36, 0
      %p309 = por %p307, %p308
      %p310 = scmp.ne.s32.totalorder %s298, %s299
      %p311 = scmp.eq.s32.totalorder %s37, 1
      %p312 = por %p310, %p311
      %p314 = scmp.ne.s32.totalorder %s299, %s313
      %p315 = scmp.eq.s32.totalorder %s37, 0
      %p316 = por %p314, %p315
      %s318 = sadd.s32 %s317, 1
      %p321 = scmp.eq.s32.totalorder %s31, 1
      %p322 = scmp.ne.s32.totalorder %s317, %s319
      %p323 = scmp.eq.s32.totalorder %s31, 0
      %p324 = por %p322, %p323
      %p325 = scmp.ne.s32.totalorder %s317, %s319
      %p326 = scmp.eq.s32.totalorder %s36, 1
      %p327 = por %p325, %p326
      %p328 = scmp.ne.s32.totalorder %s319, %s320
      %p329 = scmp.eq.s32.totalorder %s36, 0
      %p330 = por %p328, %p329
      %p331 = scmp.ne.s32.totalorder %s319, %s320
      %p332 = scmp.eq.s32.totalorder %s37, 1
      %p333 = por %p331, %p332
      %p335 = scmp.ne.s32.totalorder %s320, %s334
      %p336 = scmp.eq.s32.totalorder %s37, 0
      %p337 = por %p335, %p336
      %s339 = sadd.s32 %s338, 1
      %p342 = scmp.eq.s32.totalorder %s31, 1
      %p343 = scmp.ne.s32.totalorder %s338, %s340
      %p344 = scmp.eq.s32.totalorder %s31, 0
      %p345 = por %p343, %p344
      %p346 = scmp.ne.s32.totalorder %s338, %s340
      %p347 = scmp.eq.s32.totalorder %s36, 1
      %p348 = por %p346, %p347
      %p349 = scmp.ne.s32.totalorder %s340, %s341
      %p350 = scmp.eq.s32.totalorder %s36, 0
      %p351 = por %p349, %p350
      %p352 = scmp.ne.s32.totalorder %s340, %s341
      %p353 = scmp.eq.s32.totalorder %s37, 1
      %p354 = por %p352, %p353
      %p356 = scmp.ne.s32.totalorder %s341, %s355
      %p357 = scmp.eq.s32.totalorder %s37, 0
      %p358 = por %p356, %p357
      %s359 = ssub.s32 %s31, %s38
      %p360 = scmp.eq.s32.totalorder %s359, 0
      %s362 = sadd.s32 %s361, 1
      %s363 = scalar_select %p360, %s361, %s362
      %p366 = pneg %p360
      %p367 = scmp.eq.s32.totalorder %s31, 1
      %p368 = por %p366, %p367
      %p369 = scmp.ne.s32.totalorder %s361, %s364
      %p370 = scmp.eq.s32.totalorder %s31, 0
      %p371 = por %p369, %p370
      %p372 = scmp.ne.s32.totalorder %s361, %s364
      %p373 = scmp.eq.s32.totalorder %s36, 1
      %p374 = por %p372, %p373
      %p375 = scmp.ne.s32.totalorder %s364, %s365
      %p376 = scmp.eq.s32.totalorder %s36, 0
      %p377 = por %p375, %p376
      %p378 = scmp.ne.s32.totalorder %s364, %s365
      %p379 = scmp.eq.s32.totalorder %s37, 1
      %p380 = por %p378, %p379
      %p382 = scmp.ne.s32.totalorder %s365, %s381
      %p383 = scmp.eq.s32.totalorder %s37, 0
      %p384 = por %p382, %p383
      %p385 = scmp.le.s32.totalorder 1, %s31
      %p386 = scmp.lt.s32.totalorder %s31, 3
      %p387 = pnand %p385, %p386
      %p388 = pneg %p387
      // Predicated region
      $region9: #{tpu_custom_call.1} parent=5 // pred_check
        _
      $region10: #{tpu_custom_call.1} parent=5 // pred_check_branch
        %390 = sbr.rel (%p387) target = $region12
      $region11: #{tpu_custom_call.1} parent=5 // pred_region
        %s391 = ssub.s32 %s31, 1
        // Predicated region
        $region13: #{tpu_custom_call.1} parent=11 // pred_check
          %p392 = pneg %p78
        $region14: #{tpu_custom_call.1} parent=11 // pred_check_branch
          %394 = sbr.rel (%p392) target = $region16
        $region15: #{tpu_custom_call.1} parent=11 // pred_region
          %s396 = ssub.s32 1024, 1024
          %397 = vsyncadd [#allocation6], %s396
          %s398 = sshll.u32 [#allocation5], 4
          %s399 = int_to_ptr.vmem [resolvable:$true] %s398
          %404 = dma.hbm_to_vmem [thread:$0]  %s1, 1024, %s399, [#allocation6], 64, 64, 4
        $region16: #{tpu_custom_call.1} parent=11 // pred_fallthru
          _
        // Predicated region
        $region17: #{tpu_custom_call.1} parent=11 // pred_check
          %p405 = pneg %p99
        $region18: #{tpu_custom_call.1} parent=11 // pred_check_branch
          %407 = sbr.rel (%p405) target = $region20
        $region19: #{tpu_custom_call.1} parent=11 // pred_region
          _
        $region20: #{tpu_custom_call.1} parent=11 // pred_fallthru
          _
        // Predicated region
        $region21: #{tpu_custom_call.1} parent=11 // pred_check
          %p408 = pneg %p120
        $region22: #{tpu_custom_call.1} parent=11 // pred_check_branch
          %410 = sbr.rel (%p408) target = $region24
        $region23: #{tpu_custom_call.1} parent=11 // pred_region
          %s412 = ssub.s32 1024, 1024
          %413 = vsyncadd [#allocation6], %s412
          %s414 = sshll.u32 [#allocation7], 4
          %s415 = int_to_ptr.vmem [resolvable:$true] %s414
          %420 = dma.hbm_to_vmem [thread:$0]  %s3, 1024, %s415, [#allocation6], 64, 64, 4
        $region24: #{tpu_custom_call.1} parent=11 // pred_fallthru
          _
        // Predicated region
        $region25: #{tpu_custom_call.1} parent=11 // pred_check
          %p421 = pneg %p141
        $region26: #{tpu_custom_call.1} parent=11 // pred_check_branch
          %423 = sbr.rel (%p421) target = $region28
        $region27: #{tpu_custom_call.1} parent=11 // pred_region
          _
        $region28: #{tpu_custom_call.1} parent=11 // pred_fallthru
          _
        // Predicated region
        $region29: #{tpu_custom_call.1} parent=11 // pred_check
          %p424 = pneg %p162
        $region30: #{tpu_custom_call.1} parent=11 // pred_check_branch
          %426 = sbr.rel (%p424) target = $region32
        $region31: #{tpu_custom_call.1} parent=11 // pred_region
          %s428 = ssub.s32 1024, 1024
          %429 = vsyncadd [#allocation9], %s428
          %s430 = sshll.u32 [#allocation8], 4
          %s431 = int_to_ptr.vmem [resolvable:$true] %s430
          %436 = dma.hbm_to_vmem [thread:$0]  %s5, 1024, %s431, [#allocation9], 64, 64, 4
        $region32: #{tpu_custom_call.1} parent=11 // pred_fallthru
          _
        // Predicated region
        $region33: #{tpu_custom_call.1} parent=11 // pred_check
          %p437 = pneg %p183
        $region34: #{tpu_custom_call.1} parent=11 // pred_check_branch
          %439 = sbr.rel (%p437) target = $region36
        $region35: #{tpu_custom_call.1} parent=11 // pred_region
          _
        $region36: #{tpu_custom_call.1} parent=11 // pred_fallthru
          _
        // Predicated region
        $region37: #{tpu_custom_call.1} parent=11 // pred_check
          %p440 = pneg %p204
        $region38: #{tpu_custom_call.1} parent=11 // pred_check_branch
          %442 = sbr.rel (%p440) target = $region40
        $region39: #{tpu_custom_call.1} parent=11 // pred_region
          %s444 = ssub.s32 1024, 1024
          %445 = vsyncadd [#allocation9], %s444
          %s446 = sshll.u32 [#allocation10], 4
          %s447 = int_to_ptr.vmem [resolvable:$true] %s446
          %452 = dma.hbm_to_vmem [thread:$0]  %s7, 1024, %s447, [#allocation9], 64, 64, 4
        $region40: #{tpu_custom_call.1} parent=11 // pred_fallthru
          _
        // Predicated region
        $region41: #{tpu_custom_call.1} parent=11 // pred_check
          %p453 = pneg %p225
        $region42: #{tpu_custom_call.1} parent=11 // pred_check_branch
          %455 = sbr.rel (%p453) target = $region44
        $region43: #{tpu_custom_call.1} parent=11 // pred_region
          _
        $region44: #{tpu_custom_call.1} parent=11 // pred_fallthru
          _
        // Predicated region
        $region45: #{tpu_custom_call.1} parent=11 // pred_check
          %p456 = pneg %p246
        $region46: #{tpu_custom_call.1} parent=11 // pred_check_branch
          %458 = sbr.rel (%p456) target = $region48
        $region47: #{tpu_custom_call.1} parent=11 // pred_region
          %s460 = ssub.s32 1024, 1024
          %461 = vsyncadd [#allocation12], %s460
          %s462 = sshll.u32 [#allocation11], 4
          %s463 = int_to_ptr.vmem [resolvable:$true] %s462
          %468 = dma.hbm_to_vmem [thread:$0]  %s9, 1024, %s463, [#allocation12], 64, 64, 4
        $region48: #{tpu_custom_call.1} parent=11 // pred_fallthru
          _
        // Predicated region
        $region49: #{tpu_custom_call.1} parent=11 // pred_check
          %p469 = pneg %p267
        $region50: #{tpu_custom_call.1} parent=11 // pred_check_branch
          %471 = sbr.rel (%p469) target = $region52
        $region51: #{tpu_custom_call.1} parent=11 // pred_region
          _
        $region52: #{tpu_custom_call.1} parent=11 // pred_fallthru
          _
        // Predicated region
        $region53: #{tpu_custom_call.1} parent=11 // pred_check
          %p472 = pneg %p288
        $region54: #{tpu_custom_call.1} parent=11 // pred_check_branch
          %474 = sbr.rel (%p472) target = $region56
        $region55: #{tpu_custom_call.1} parent=11 // pred_region
          %s476 = ssub.s32 1024, 1024
          %477 = vsyncadd [#allocation12], %s476
          %s478 = sshll.u32 [#allocation13], 4
          %s479 = int_to_ptr.vmem [resolvable:$true] %s478
          %484 = dma.hbm_to_vmem [thread:$0]  %s11, 1024, %s479, [#allocation12], 64, 64, 4
        $region56: #{tpu_custom_call.1} parent=11 // pred_fallthru
          _
        // Predicated region
        $region57: #{tpu_custom_call.1} parent=11 // pred_check
          %p485 = pneg %p309
        $region58: #{tpu_custom_call.1} parent=11 // pred_check_branch
          %487 = sbr.rel (%p485) target = $region60
        $region59: #{tpu_custom_call.1} parent=11 // pred_region
          _
        $region60: #{tpu_custom_call.1} parent=11 // pred_fallthru
          _
        // Predicated region
        $region61: #{tpu_custom_call.1} parent=11 // pred_check
          %p488 = pneg %p330
        $region62: #{tpu_custom_call.1} parent=11 // pred_check_branch
          %490 = sbr.rel (%p488) target = $region64
        $region63: #{tpu_custom_call.1} parent=11 // pred_region
          %s492 = ssub.s32 1024, 1024
          %493 = vsyncadd [#allocation15], %s492
          %s494 = sshll.u32 [#allocation14], 4
          %s495 = int_to_ptr.vmem [resolvable:$true] %s494
          %500 = dma.hbm_to_vmem [thread:$0]  %s13, 1024, %s495, [#allocation15], 64, 64, 4
        $region64: #{tpu_custom_call.1} parent=11 // pred_fallthru
          _
        // Predicated region
        $region65: #{tpu_custom_call.1} parent=11 // pred_check
          %p501 = pneg %p351
        $region66: #{tpu_custom_call.1} parent=11 // pred_check_branch
          %503 = sbr.rel (%p501) target = $region68
        $region67: #{tpu_custom_call.1} parent=11 // pred_region
          _
        $region68: #{tpu_custom_call.1} parent=11 // pred_fallthru
          _
      $region12: #{tpu_custom_call.1} parent=5 // pred_fallthru
        _
      %p504 = scmp.lt.s32.totalorder %s31, 2
      // Predicated region
      $region69: #{tpu_custom_call.1} parent=5 // pred_check
        %p505 = pneg %p504
      $region70: #{tpu_custom_call.1} parent=5 // pred_check_branch
        %507 = sbr.rel (%p505) target = $region72
      $region71: #{tpu_custom_call.1} parent=5 // pred_region
        // Predicated region
        $region73: #{tpu_custom_call.1} parent=71 // pred_check
          %p508 = pneg %p51
        $region74: #{tpu_custom_call.1} parent=71 // pred_check_branch
          %510 = sbr.rel (%p508) target = $region76
        $region75: #{tpu_custom_call.1} parent=71 // pred_region
          %s511 = sand.u32 %s41, 1
          %s512 = scalar_lea.sflag [#allocation3], %s511
          %s513 = sand.u32 %s41, 1
          %s514 = smul.addr %s513, 4
          %s515 = scalar_lea.vmem [#allocation2], %s514
          %s517 = ssub.s32 64, 64
          %518 = vsyncadd %s512, %s517
          %s519 = smul.addr %s31, 64
          %s520 = scalar_lea.hbm %s0, %s519
          %s522 = sshll.u32 %s515, 4
          %s523 = int_to_ptr.vmem [resolvable:$true] %s522
          %525 = dma.hbm_to_vmem [thread:$0]  %s520, 64, %s523, %s512
        $region76: #{tpu_custom_call.1} parent=71 // pred_fallthru
          _
      $region72: #{tpu_custom_call.1} parent=5 // pred_fallthru
        _
      %p526 = scmp.le.s32.totalorder 1, %s31
      %p527 = scmp.lt.s32.totalorder %s31, 3
      %p528 = pnand %p526, %p527
      %p529 = pneg %p528
      // Predicated region
      $region77: #{tpu_custom_call.1} parent=5 // pred_check
        _
      $region78: #{tpu_custom_call.1} parent=5 // pred_check_branch
        %531 = sbr.rel (%p528) target = $region80
      $region79: #{tpu_custom_call.1} parent=5 // pred_region
        %s532 = ssub.s32 %s31, 1
        %s533 = sand.u32 %s44, 1
        %s534 = scalar_lea.sflag [#allocation3], %s533
        %s535 = sand.u32 %s44, 1
        %s536 = smul.addr %s535, 4
        %s537 = scalar_lea.vmem [#allocation2], %s536
        // Predicated region
        $region81: #{tpu_custom_call.1} parent=79 // pred_check
          %p538 = pneg %p57
        $region82: #{tpu_custom_call.1} parent=79 // pred_check_branch
          %540 = sbr.rel (%p538) target = $region84
        $region83: #{tpu_custom_call.1} parent=79 // pred_region
          %541 = dma.done %s534, 64
        $region84: #{tpu_custom_call.1} parent=79 // pred_fallthru
          _
        // Predicated region
        $region85: #{tpu_custom_call.1} parent=79 // pred_check
          %p542 = pneg %p78
        $region86: #{tpu_custom_call.1} parent=79 // pred_check_branch
          %544 = sbr.rel (%p542) target = $region88
        $region87: #{tpu_custom_call.1} parent=79 // pred_region
          %545 = dma.done [#allocation6], 1024
        $region88: #{tpu_custom_call.1} parent=79 // pred_fallthru
          _
        // Predicated region
        $region89: #{tpu_custom_call.1} parent=79 // pred_check
          %p546 = pneg %p120
        $region90: #{tpu_custom_call.1} parent=79 // pred_check_branch
          %548 = sbr.rel (%p546) target = $region92
        $region91: #{tpu_custom_call.1} parent=79 // pred_region
          %549 = dma.done [#allocation6], 1024
        $region92: #{tpu_custom_call.1} parent=79 // pred_fallthru
          _
        // Predicated region
        $region93: #{tpu_custom_call.1} parent=79 // pred_check
          %p550 = pneg %p162
        $region94: #{tpu_custom_call.1} parent=79 // pred_check_branch
          %552 = sbr.rel (%p550) target = $region96
        $region95: #{tpu_custom_call.1} parent=79 // pred_region
          %553 = dma.done [#allocation9], 1024
        $region96: #{tpu_custom_call.1} parent=79 // pred_fallthru
          _
        // Predicated region
        $region97: #{tpu_custom_call.1} parent=79 // pred_check
          %p554 = pneg %p204
        $region98: #{tpu_custom_call.1} parent=79 // pred_check_branch
          %556 = sbr.rel (%p554) target = $region100
        $region99: #{tpu_custom_call.1} parent=79 // pred_region
          %557 = dma.done [#allocation9], 1024
        $region100: #{tpu_custom_call.1} parent=79 // pred_fallthru
          _
        // Predicated region
        $region101: #{tpu_custom_call.1} parent=79 // pred_check
          %p558 = pneg %p246
        $region102: #{tpu_custom_call.1} parent=79 // pred_check_branch
          %560 = sbr.rel (%p558) target = $region104
        $region103: #{tpu_custom_call.1} parent=79 // pred_region
          %561 = dma.done [#allocation12], 1024
        $region104: #{tpu_custom_call.1} parent=79 // pred_fallthru
          _
        // Predicated region
        $region105: #{tpu_custom_call.1} parent=79 // pred_check
          %p562 = pneg %p288
        $region106: #{tpu_custom_call.1} parent=79 // pred_check_branch
          %564 = sbr.rel (%p562) target = $region108
        $region107: #{tpu_custom_call.1} parent=79 // pred_region
          %565 = dma.done [#allocation12], 1024
        $region108: #{tpu_custom_call.1} parent=79 // pred_fallthru
          _
        // Predicated region
        $region109: #{tpu_custom_call.1} parent=79 // pred_check
          %p566 = pneg %p330
        $region110: #{tpu_custom_call.1} parent=79 // pred_check_branch
          %568 = sbr.rel (%p566) target = $region112
        $region111: #{tpu_custom_call.1} parent=79 // pred_region
          %569 = dma.done [#allocation15], 1024
        $region112: #{tpu_custom_call.1} parent=79 // pred_fallthru
          _
        %s570 = sand.u32 %s44, 1
        %s571 = scalar_lea.sflag [#allocation3], %s570
        %s572 = sand.u32 %s44, 1
        %s573 = smul.addr %s572, 4
        %s574 = scalar_lea.vmem [#allocation2], %s573
        %p575 = pneg %p57
        %p576 = pneg %p54
        %p577 = pneg %p78
        %p578 = pneg %p75
        %p579 = pneg %p99
        %p580 = pneg %p96
        %p581 = pneg %p120
        %p582 = pneg %p117
        %p583 = pneg %p141
        %p584 = pneg %p138
        %p585 = pneg %p162
        %p586 = pneg %p159
        %p587 = pneg %p183
        %p588 = pneg %p180
        %p589 = pneg %p204
        %p590 = pneg %p201
        %p591 = pneg %p225
        %p592 = pneg %p222
        %p593 = pneg %p246
        %p594 = pneg %p243
        %p595 = pneg %p267
        %p596 = pneg %p264
        %p597 = pneg %p288
        %p598 = pneg %p285
        %p599 = pneg %p309
        %p600 = pneg %p306
        %p601 = pneg %p330
        %p602 = pneg %p327
        %p603 = pneg %p351
        %p604 = pneg %p348
        %p605 = pneg %p377
        %p606 = pneg %p374
        %s607 = sand.u32 %s364, 1
        %s608 = scalar_lea.sflag [#allocation4], %s607
        %s609 = sand.u32 %s364, 1
        %s610 = smul.addr %s609, 8
        %s611 = scalar_lea.vmem [#allocation16], %s610
        %v613 = vld [vmem:[%s537] sm:$0xf]
        %v614 = vld [vmem:[#allocation5] sm:$0xf]
        %v615 = vld [vmem:[#allocation5 + $0x4] sm:$0xf]
        %v616 = vld [vmem:[#allocation5 + $0x8] sm:$0xf]
        %v617 = vld [vmem:[#allocation5 + $0xc] sm:$0xf]
        %v618 = vld [vmem:[#allocation5 + $0x10] sm:$0xf]
        %v619 = vld [vmem:[#allocation5 + $0x14] sm:$0xf]
        %v620 = vld [vmem:[#allocation5 + $0x18] sm:$0xf]
        %v621 = vld [vmem:[#allocation5 + $0x1c] sm:$0xf]
        %v622 = vld [vmem:[#allocation5 + $0x20] sm:$0xf]
        %v623 = vld [vmem:[#allocation5 + $0x24] sm:$0xf]
        %v624 = vld [vmem:[#allocation5 + $0x28] sm:$0xf]
        %v625 = vld [vmem:[#allocation5 + $0x2c] sm:$0xf]
        %v626 = vld [vmem:[#allocation5 + $0x30] sm:$0xf]
        %v627 = vld [vmem:[#allocation5 + $0x34] sm:$0xf]
        %v628 = vld [vmem:[#allocation5 + $0x38] sm:$0xf]
        %v629 = vld [vmem:[#allocation5 + $0x3c] sm:$0xf]
        %v630 = vld [vmem:[%s2] sm:$0x1]
        %v632 = vlaneseq
        %v633 = vshrl.u32 %v632, 7
        %v634 = vsub.s32 0, %v633
        %v635 = vrot.slane %v630, %v634
        %v653 = vunpack.c.l.b16 %v614
        %v654 = vunpack.c.l.b16 %v615
        %v655 = vunpack.c.l.b16 %v616
        %v656 = vunpack.c.l.b16 %v617
        %v657 = vunpack.c.l.b16 %v618
        %v658 = vunpack.c.l.b16 %v619
        %v659 = vunpack.c.l.b16 %v620
        %v660 = vunpack.c.l.b16 %v621
        %v661 = vunpack.c.l.b16 %v622
        %v662 = vunpack.c.l.b16 %v623
        %v663 = vunpack.c.l.b16 %v624
        %v664 = vunpack.c.l.b16 %v625
        %v665 = vunpack.c.l.b16 %v626
        %v666 = vunpack.c.l.b16 %v627
        %v667 = vunpack.c.l.b16 %v628
        %v668 = vunpack.c.l.b16 %v629
        %v669 = vpack.c.b16 %v654, %v653
        %v670 = vpack.c.b16 %v656, %v655
        %v671 = vpack.c.b16 %v658, %v657
        %v672 = vpack.c.b16 %v660, %v659
        %v673 = vpack.c.b16 %v662, %v661
        %v674 = vpack.c.b16 %v664, %v663
        %v675 = vpack.c.b16 %v666, %v665
        %v676 = vpack.c.b16 %v668, %v667
        %685 = vmatprep.subr.bf16.mxu0 0
        %686 = vmatpush1.bf16.msra.mxu0 %v676
        %687 = vmatprep.subr.bf16.mxu0 0
        %688 = vmatpush1.bf16.msra.mxu0 %v675
        %689 = vmatprep.subr.bf16.mxu0 0
        %690 = vmatpush1.bf16.msra.mxu0 %v674
        %691 = vmatprep.subr.bf16.mxu0 0
        %692 = vmatpush1.bf16.msra.mxu0 %v673
        %693 = vmatprep.subr.bf16.mxu0 0
        %694 = vmatpush1.bf16.msra.mxu0 %v672
        %695 = vmatprep.subr.bf16.mxu0 0
        %696 = vmatpush1.bf16.msra.mxu0 %v671
        %697 = vmatprep.subr.bf16.mxu0 0
        %698 = vmatpush1.bf16.msra.mxu0 %v670
        %699 = vmatprep.subr.bf16.mxu0 0
        %700 = vmatpush1.bf16.msra.mxu0 %v669
        %701 = vmatprep.subr.bf16.mxu0 0
        %702 = vmatpush2.bf16.msra.mxu0 0
        %703 = vmatprep.subr.bf16.mxu0 0
        %704 = vmatpush2.bf16.msra.mxu0 0
        %705 = vmatprep.subr.bf16.mxu0 0
        %706 = vmatpush2.bf16.msra.mxu0 0
        %707 = vmatprep.subr.bf16.mxu0 0
        %708 = vmatpush2.bf16.msra.mxu0 0
        %709 = vmatprep.subr.bf16.mxu0 0
        %710 = vmatpush2.bf16.msra.mxu0 0
        %711 = vmatprep.subr.bf16.mxu0 0
        %712 = vmatpush2.bf16.msra.mxu0 0
        %713 = vmatprep.subr.bf16.mxu0 0
        %714 = vmatpush2.bf16.msra.mxu0 0
        %715 = vmatprep.subr.bf16.mxu0 0
        %716 = vmatpush2.bf16.msra.mxu0 0
        %717 = vmatprep.mubr.bf16.mxu0 0
        %718 = vmatmul.mubr.bf16.gmra.mxu0 %v613
        %v719 = vpop.f32.mrf.mxu0
        %v720 = vadd.f32 %v635, %v719
        %v721 = vpop.f32.mrf.mxu0
        %v722 = vpop.f32.mrf.mxu0
        %v723 = vpop.f32.mrf.mxu0
        %724 = vdwg.mxu0
        %v725 = vmax.f32 %v720, 0.0
        %v726 = vpack.c.bf16 %v725, %v725
        %v727 = vld [vmem:[#allocation7] sm:$0xf]
        %v728 = vld [vmem:[#allocation7 + $0x4] sm:$0xf]
        %v729 = vld [vmem:[#allocation7 + $0x8] sm:$0xf]
        %v730 = vld [vmem:[#allocation7 + $0xc] sm:$0xf]
        %v731 = vld [vmem:[#allocation7 + $0x10] sm:$0xf]
        %v732 = vld [vmem:[#allocation7 + $0x14] sm:$0xf]
        %v733 = vld [vmem:[#allocation7 + $0x18] sm:$0xf]
        %v734 = vld [vmem:[#allocation7 + $0x1c] sm:$0xf]
        %v735 = vld [vmem:[#allocation7 + $0x20] sm:$0xf]
        %v736 = vld [vmem:[#allocation7 + $0x24] sm:$0xf]
        %v737 = vld [vmem:[#allocation7 + $0x28] sm:$0xf]
        %v738 = vld [vmem:[#allocation7 + $0x2c] sm:$0xf]
        %v739 = vld [vmem:[#allocation7 + $0x30] sm:$0xf]
        %v740 = vld [vmem:[#allocation7 + $0x34] sm:$0xf]
        %v741 = vld [vmem:[#allocation7 + $0x38] sm:$0xf]
        %v742 = vld [vmem:[#allocation7 + $0x3c] sm:$0xf]
        %v743 = vld [vmem:[%s4] sm:$0x1]
        %v745 = vlaneseq
        %v746 = vshrl.u32 %v745, 7
        %v747 = vsub.s32 0, %v746
        %v748 = vrot.slane %v743, %v747
        %v766 = vunpack.c.l.b16 %v727
        %v767 = vunpack.c.l.b16 %v728
        %v768 = vunpack.c.l.b16 %v729
        %v769 = vunpack.c.l.b16 %v730
        %v770 = vunpack.c.l.b16 %v731
        %v771 = vunpack.c.l.b16 %v732
        %v772 = vunpack.c.l.b16 %v733
        %v773 = vunpack.c.l.b16 %v734
        %v774 = vunpack.c.l.b16 %v735
        %v775 = vunpack.c.l.b16 %v736
        %v776 = vunpack.c.l.b16 %v737
        %v777 = vunpack.c.l.b16 %v738
        %v778 = vunpack.c.l.b16 %v739
        %v779 = vunpack.c.l.b16 %v740
        %v780 = vunpack.c.l.b16 %v741
        %v781 = vunpack.c.l.b16 %v742
        %v782 = vpack.c.b16 %v767, %v766
        %v783 = vpack.c.b16 %v769, %v768
        %v784 = vpack.c.b16 %v771, %v770
        %v785 = vpack.c.b16 %v773, %v772
        %v786 = vpack.c.b16 %v775, %v774
        %v787 = vpack.c.b16 %v777, %v776
        %v788 = vpack.c.b16 %v779, %v778
        %v789 = vpack.c.b16 %v781, %v780
        %798 = vmatprep.subr.bf16.mxu0 0
        %799 = vmatpush1.bf16.msra.mxu0 %v789
        %800 = vmatprep.subr.bf16.mxu0 0
        %801 = vmatpush1.bf16.msra.mxu0 %v788
        %802 = vmatprep.subr.bf16.mxu0 0
        %803 = vmatpush1.bf16.msra.mxu0 %v787
        %804 = vmatprep.subr.bf16.mxu0 0
        %805 = vmatpush1.bf16.msra.mxu0 %v786
        %806 = vmatprep.subr.bf16.mxu0 0
        %807 = vmatpush1.bf16.msra.mxu0 %v785
        %808 = vmatprep.subr.bf16.mxu0 0
        %809 = vmatpush1.bf16.msra.mxu0 %v784
        %810 = vmatprep.subr.bf16.mxu0 0
        %811 = vmatpush1.bf16.msra.mxu0 %v783
        %812 = vmatprep.subr.bf16.mxu0 0
        %813 = vmatpush1.bf16.msra.mxu0 %v782
        %814 = vmatprep.subr.bf16.mxu0 0
        %815 = vmatpush2.bf16.msra.mxu0 0
        %816 = vmatprep.subr.bf16.mxu0 0
        %817 = vmatpush2.bf16.msra.mxu0 0
        %818 = vmatprep.subr.bf16.mxu0 0
        %819 = vmatpush2.bf16.msra.mxu0 0
        %820 = vmatprep.subr.bf16.mxu0 0
        %821 = vmatpush2.bf16.msra.mxu0 0
        %822 = vmatprep.subr.bf16.mxu0 0
        %823 = vmatpush2.bf16.msra.mxu0 0
        %824 = vmatprep.subr.bf16.mxu0 0
        %825 = vmatpush2.bf16.msra.mxu0 0
        %826 = vmatprep.subr.bf16.mxu0 0
        %827 = vmatpush2.bf16.msra.mxu0 0
        %828 = vmatprep.subr.bf16.mxu0 0
        %829 = vmatpush2.bf16.msra.mxu0 0
        %830 = vmatprep.mubr.bf16.mxu0 0
        %831 = vmatmul.mubr.bf16.gmra.mxu0 %v726
        %v832 = vpop.f32.mrf.mxu0
        %v833 = vadd.f32 %v748, %v832
        %v834 = vpop.f32.mrf.mxu0
        %v835 = vpop.f32.mrf.mxu0
        %v836 = vpop.f32.mrf.mxu0
        %837 = vdwg.mxu0
        %v838 = vmax.f32 %v833, 0.0
        %v839 = vpack.c.bf16 %v838, %v838
        %v840 = vld [vmem:[#allocation8] sm:$0xf]
        %v841 = vld [vmem:[#allocation8 + $0x4] sm:$0xf]
        %v842 = vld [vmem:[#allocation8 + $0x8] sm:$0xf]
        %v843 = vld [vmem:[#allocation8 + $0xc] sm:$0xf]
        %v844 = vld [vmem:[#allocation8 + $0x10] sm:$0xf]
        %v845 = vld [vmem:[#allocation8 + $0x14] sm:$0xf]
        %v846 = vld [vmem:[#allocation8 + $0x18] sm:$0xf]
        %v847 = vld [vmem:[#allocation8 + $0x1c] sm:$0xf]
        %v848 = vld [vmem:[#allocation8 + $0x20] sm:$0xf]
        %v849 = vld [vmem:[#allocation8 + $0x24] sm:$0xf]
        %v850 = vld [vmem:[#allocation8 + $0x28] sm:$0xf]
        %v851 = vld [vmem:[#allocation8 + $0x2c] sm:$0xf]
        %v852 = vld [vmem:[#allocation8 + $0x30] sm:$0xf]
        %v853 = vld [vmem:[#allocation8 + $0x34] sm:$0xf]
        %v854 = vld [vmem:[#allocation8 + $0x38] sm:$0xf]
        %v855 = vld [vmem:[#allocation8 + $0x3c] sm:$0xf]
        %v856 = vld [vmem:[%s6] sm:$0x1]
        %v858 = vlaneseq
        %v859 = vshrl.u32 %v858, 7
        %v860 = vsub.s32 0, %v859
        %v861 = vrot.slane %v856, %v860
        %v879 = vunpack.c.l.b16 %v840
        %v880 = vunpack.c.l.b16 %v841
        %v881 = vunpack.c.l.b16 %v842
        %v882 = vunpack.c.l.b16 %v843
        %v883 = vunpack.c.l.b16 %v844
        %v884 = vunpack.c.l.b16 %v845
        %v885 = vunpack.c.l.b16 %v846
        %v886 = vunpack.c.l.b16 %v847
        %v887 = vunpack.c.l.b16 %v848
        %v888 = vunpack.c.l.b16 %v849
        %v889 = vunpack.c.l.b16 %v850
        %v890 = vunpack.c.l.b16 %v851
        %v891 = vunpack.c.l.b16 %v852
        %v892 = vunpack.c.l.b16 %v853
        %v893 = vunpack.c.l.b16 %v854
        %v894 = vunpack.c.l.b16 %v855
        %v895 = vpack.c.b16 %v880, %v879
        %v896 = vpack.c.b16 %v882, %v881
        %v897 = vpack.c.b16 %v884, %v883
        %v898 = vpack.c.b16 %v886, %v885
        %v899 = vpack.c.b16 %v888, %v887
        %v900 = vpack.c.b16 %v890, %v889
        %v901 = vpack.c.b16 %v892, %v891
        %v902 = vpack.c.b16 %v894, %v893
        %911 = vmatprep.subr.bf16.mxu0 0
        %912 = vmatpush1.bf16.msra.mxu0 %v902
        %913 = vmatprep.subr.bf16.mxu0 0
        %914 = vmatpush1.bf16.msra.mxu0 %v901
        %915 = vmatprep.subr.bf16.mxu0 0
        %916 = vmatpush1.bf16.msra.mxu0 %v900
        %917 = vmatprep.subr.bf16.mxu0 0
        %918 = vmatpush1.bf16.msra.mxu0 %v899
        %919 = vmatprep.subr.bf16.mxu0 0
        %920 = vmatpush1.bf16.msra.mxu0 %v898
        %921 = vmatprep.subr.bf16.mxu0 0
        %922 = vmatpush1.bf16.msra.mxu0 %v897
        %923 = vmatprep.subr.bf16.mxu0 0
        %924 = vmatpush1.bf16.msra.mxu0 %v896
        %925 = vmatprep.subr.bf16.mxu0 0
        %926 = vmatpush1.bf16.msra.mxu0 %v895
        %927 = vmatprep.subr.bf16.mxu0 0
        %928 = vmatpush2.bf16.msra.mxu0 0
        %929 = vmatprep.subr.bf16.mxu0 0
        %930 = vmatpush2.bf16.msra.mxu0 0
        %931 = vmatprep.subr.bf16.mxu0 0
        %932 = vmatpush2.bf16.msra.mxu0 0
        %933 = vmatprep.subr.bf16.mxu0 0
        %934 = vmatpush2.bf16.msra.mxu0 0
        %935 = vmatprep.subr.bf16.mxu0 0
        %936 = vmatpush2.bf16.msra.mxu0 0
        %937 = vmatprep.subr.bf16.mxu0 0
        %938 = vmatpush2.bf16.msra.mxu0 0
        %939 = vmatprep.subr.bf16.mxu0 0
        %940 = vmatpush2.bf16.msra.mxu0 0
        %941 = vmatprep.subr.bf16.mxu0 0
        %942 = vmatpush2.bf16.msra.mxu0 0
        %943 = vmatprep.mubr.bf16.mxu0 0
        %944 = vmatmul.mubr.bf16.gmra.mxu0 %v839
        %v945 = vpop.f32.mrf.mxu0
        %v946 = vadd.f32 %v861, %v945
        %v947 = vpop.f32.mrf.mxu0
        %v948 = vpop.f32.mrf.mxu0
        %v949 = vpop.f32.mrf.mxu0
        %950 = vdwg.mxu0
        %v951 = vmax.f32 %v946, 0.0
        %v952 = vpack.c.bf16 %v951, %v951
        %v953 = vld [vmem:[#allocation10] sm:$0xf]
        %v954 = vld [vmem:[#allocation10 + $0x4] sm:$0xf]
        %v955 = vld [vmem:[#allocation10 + $0x8] sm:$0xf]
        %v956 = vld [vmem:[#allocation10 + $0xc] sm:$0xf]
        %v957 = vld [vmem:[#allocation10 + $0x10] sm:$0xf]
        %v958 = vld [vmem:[#allocation10 + $0x14] sm:$0xf]
        %v959 = vld [vmem:[#allocation10 + $0x18] sm:$0xf]
        %v960 = vld [vmem:[#allocation10 + $0x1c] sm:$0xf]
        %v961 = vld [vmem:[#allocation10 + $0x20] sm:$0xf]
        %v962 = vld [vmem:[#allocation10 + $0x24] sm:$0xf]
        %v963 = vld [vmem:[#allocation10 + $0x28] sm:$0xf]
        %v964 = vld [vmem:[#allocation10 + $0x2c] sm:$0xf]
        %v965 = vld [vmem:[#allocation10 + $0x30] sm:$0xf]
        %v966 = vld [vmem:[#allocation10 + $0x34] sm:$0xf]
        %v967 = vld [vmem:[#allocation10 + $0x38] sm:$0xf]
        %v968 = vld [vmem:[#allocation10 + $0x3c] sm:$0xf]
        %v969 = vld [vmem:[%s8] sm:$0x1]
        %v971 = vlaneseq
        %v972 = vshrl.u32 %v971, 7
        %v973 = vsub.s32 0, %v972
        %v974 = vrot.slane %v969, %v973
        %v992 = vunpack.c.l.b16 %v953
        %v993 = vunpack.c.l.b16 %v954
        %v994 = vunpack.c.l.b16 %v955
        %v995 = vunpack.c.l.b16 %v956
        %v996 = vunpack.c.l.b16 %v957
        %v997 = vunpack.c.l.b16 %v958
        %v998 = vunpack.c.l.b16 %v959
        %v999 = vunpack.c.l.b16 %v960
        %v1000 = vunpack.c.l.b16 %v961
        %v1001 = vunpack.c.l.b16 %v962
        %v1002 = vunpack.c.l.b16 %v963
        %v1003 = vunpack.c.l.b16 %v964
        %v1004 = vunpack.c.l.b16 %v965
        %v1005 = vunpack.c.l.b16 %v966
        %v1006 = vunpack.c.l.b16 %v967
        %v1007 = vunpack.c.l.b16 %v968
        %v1008 = vpack.c.b16 %v993, %v992
        %v1009 = vpack.c.b16 %v995, %v994
        %v1010 = vpack.c.b16 %v997, %v996
        %v1011 = vpack.c.b16 %v999, %v998
        %v1012 = vpack.c.b16 %v1001, %v1000
        %v1013 = vpack.c.b16 %v1003, %v1002
        %v1014 = vpack.c.b16 %v1005, %v1004
        %v1015 = vpack.c.b16 %v1007, %v1006
        %1024 = vmatprep.subr.bf16.mxu0 0
        %1025 = vmatpush1.bf16.msra.mxu0 %v1015
        %1026 = vmatprep.subr.bf16.mxu0 0
        %1027 = vmatpush1.bf16.msra.mxu0 %v1014
        %1028 = vmatprep.subr.bf16.mxu0 0
        %1029 = vmatpush1.bf16.msra.mxu0 %v1013
        %1030 = vmatprep.subr.bf16.mxu0 0
        %1031 = vmatpush1.bf16.msra.mxu0 %v1012
        %1032 = vmatprep.subr.bf16.mxu0 0
        %1033 = vmatpush1.bf16.msra.mxu0 %v1011
        %1034 = vmatprep.subr.bf16.mxu0 0
        %1035 = vmatpush1.bf16.msra.mxu0 %v1010
        %1036 = vmatprep.subr.bf16.mxu0 0
        %1037 = vmatpush1.bf16.msra.mxu0 %v1009
        %1038 = vmatprep.subr.bf16.mxu0 0
        %1039 = vmatpush1.bf16.msra.mxu0 %v1008
        %1040 = vmatprep.subr.bf16.mxu0 0
        %1041 = vmatpush2.bf16.msra.mxu0 0
        %1042 = vmatprep.subr.bf16.mxu0 0
        %1043 = vmatpush2.bf16.msra.mxu0 0
        %1044 = vmatprep.subr.bf16.mxu0 0
        %1045 = vmatpush2.bf16.msra.mxu0 0
        %1046 = vmatprep.subr.bf16.mxu0 0
        %1047 = vmatpush2.bf16.msra.mxu0 0
        %1048 = vmatprep.subr.bf16.mxu0 0
        %1049 = vmatpush2.bf16.msra.mxu0 0
        %1050 = vmatprep.subr.bf16.mxu0 0
        %1051 = vmatpush2.bf16.msra.mxu0 0
        %1052 = vmatprep.subr.bf16.mxu0 0
        %1053 = vmatpush2.bf16.msra.mxu0 0
        %1054 = vmatprep.subr.bf16.mxu0 0
        %1055 = vmatpush2.bf16.msra.mxu0 0
        %1056 = vmatprep.mubr.bf16.mxu0 0
        %1057 = vmatmul.mubr.bf16.gmra.mxu0 %v952
        %v1058 = vpop.f32.mrf.mxu0
        %v1059 = vadd.f32 %v974, %v1058
        %v1060 = vpop.f32.mrf.mxu0
        %v1061 = vpop.f32.mrf.mxu0
        %v1062 = vpop.f32.mrf.mxu0
        %1063 = vdwg.mxu0
        %v1064 = vmax.f32 %v1059, 0.0
        %v1065 = vpack.c.bf16 %v1064, %v1064
        %v1066 = vld [vmem:[#allocation11] sm:$0xf]
        %v1067 = vld [vmem:[#allocation11 + $0x4] sm:$0xf]
        %v1068 = vld [vmem:[#allocation11 + $0x8] sm:$0xf]
        %v1069 = vld [vmem:[#allocation11 + $0xc] sm:$0xf]
        %v1070 = vld [vmem:[#allocation11 + $0x10] sm:$0xf]
        %v1071 = vld [vmem:[#allocation11 + $0x14] sm:$0xf]
        %v1072 = vld [vmem:[#allocation11 + $0x18] sm:$0xf]
        %v1073 = vld [vmem:[#allocation11 + $0x1c] sm:$0xf]
        %v1074 = vld [vmem:[#allocation11 + $0x20] sm:$0xf]
        %v1075 = vld [vmem:[#allocation11 + $0x24] sm:$0xf]
        %v1076 = vld [vmem:[#allocation11 + $0x28] sm:$0xf]
        %v1077 = vld [vmem:[#allocation11 + $0x2c] sm:$0xf]
        %v1078 = vld [vmem:[#allocation11 + $0x30] sm:$0xf]
        %v1079 = vld [vmem:[#allocation11 + $0x34] sm:$0xf]
        %v1080 = vld [vmem:[#allocation11 + $0x38] sm:$0xf]
        %v1081 = vld [vmem:[#allocation11 + $0x3c] sm:$0xf]
        %v1082 = vld [vmem:[%s10] sm:$0x1]
        %v1084 = vlaneseq
        %v1085 = vshrl.u32 %v1084, 7
        %v1086 = vsub.s32 0, %v1085
        %v1087 = vrot.slane %v1082, %v1086
        %v1105 = vunpack.c.l.b16 %v1066
        %v1106 = vunpack.c.l.b16 %v1067
        %v1107 = vunpack.c.l.b16 %v1068
        %v1108 = vunpack.c.l.b16 %v1069
        %v1109 = vunpack.c.l.b16 %v1070
        %v1110 = vunpack.c.l.b16 %v1071
        %v1111 = vunpack.c.l.b16 %v1072
        %v1112 = vunpack.c.l.b16 %v1073
        %v1113 = vunpack.c.l.b16 %v1074
        %v1114 = vunpack.c.l.b16 %v1075
        %v1115 = vunpack.c.l.b16 %v1076
        %v1116 = vunpack.c.l.b16 %v1077
        %v1117 = vunpack.c.l.b16 %v1078
        %v1118 = vunpack.c.l.b16 %v1079
        %v1119 = vunpack.c.l.b16 %v1080
        %v1120 = vunpack.c.l.b16 %v1081
        %v1121 = vpack.c.b16 %v1106, %v1105
        %v1122 = vpack.c.b16 %v1108, %v1107
        %v1123 = vpack.c.b16 %v1110, %v1109
        %v1124 = vpack.c.b16 %v1112, %v1111
        %v1125 = vpack.c.b16 %v1114, %v1113
        %v1126 = vpack.c.b16 %v1116, %v1115
        %v1127 = vpack.c.b16 %v1118, %v1117
        %v1128 = vpack.c.b16 %v1120, %v1119
        %1137 = vmatprep.subr.bf16.mxu0 0
        %1138 = vmatpush1.bf16.msra.mxu0 %v1128
        %1139 = vmatprep.subr.bf16.mxu0 0
        %1140 = vmatpush1.bf16.msra.mxu0 %v1127
        %1141 = vmatprep.subr.bf16.mxu0 0
        %1142 = vmatpush1.bf16.msra.mxu0 %v1126
        %1143 = vmatprep.subr.bf16.mxu0 0
        %1144 = vmatpush1.bf16.msra.mxu0 %v1125
        %1145 = vmatprep.subr.bf16.mxu0 0
        %1146 = vmatpush1.bf16.msra.mxu0 %v1124
        %1147 = vmatprep.subr.bf16.mxu0 0
        %1148 = vmatpush1.bf16.msra.mxu0 %v1123
        %1149 = vmatprep.subr.bf16.mxu0 0
        %1150 = vmatpush1.bf16.msra.mxu0 %v1122
        %1151 = vmatprep.subr.bf16.mxu0 0
        %1152 = vmatpush1.bf16.msra.mxu0 %v1121
        %1153 = vmatprep.subr.bf16.mxu0 0
        %1154 = vmatpush2.bf16.msra.mxu0 0
        %1155 = vmatprep.subr.bf16.mxu0 0
        %1156 = vmatpush2.bf16.msra.mxu0 0
        %1157 = vmatprep.subr.bf16.mxu0 0
        %1158 = vmatpush2.bf16.msra.mxu0 0
        %1159 = vmatprep.subr.bf16.mxu0 0
        %1160 = vmatpush2.bf16.msra.mxu0 0
        %1161 = vmatprep.subr.bf16.mxu0 0
        %1162 = vmatpush2.bf16.msra.mxu0 0
        %1163 = vmatprep.subr.bf16.mxu0 0
        %1164 = vmatpush2.bf16.msra.mxu0 0
        %1165 = vmatprep.subr.bf16.mxu0 0
        %1166 = vmatpush2.bf16.msra.mxu0 0
        %1167 = vmatprep.subr.bf16.mxu0 0
        %1168 = vmatpush2.bf16.msra.mxu0 0
        %1169 = vmatprep.mubr.bf16.mxu0 0
        %1170 = vmatmul.mubr.bf16.gmra.mxu0 %v1065
        %v1171 = vpop.f32.mrf.mxu0
        %v1172 = vadd.f32 %v1087, %v1171
        %v1173 = vpop.f32.mrf.mxu0
        %v1174 = vpop.f32.mrf.mxu0
        %v1175 = vpop.f32.mrf.mxu0
        %1176 = vdwg.mxu0
        %v1177 = vmax.f32 %v1172, 0.0
        %v1178 = vpack.c.bf16 %v1177, %v1177
        %v1179 = vld [vmem:[#allocation13] sm:$0xf]
        %v1180 = vld [vmem:[#allocation13 + $0x4] sm:$0xf]
        %v1181 = vld [vmem:[#allocation13 + $0x8] sm:$0xf]
        %v1182 = vld [vmem:[#allocation13 + $0xc] sm:$0xf]
        %v1183 = vld [vmem:[#allocation13 + $0x10] sm:$0xf]
        %v1184 = vld [vmem:[#allocation13 + $0x14] sm:$0xf]
        %v1185 = vld [vmem:[#allocation13 + $0x18] sm:$0xf]
        %v1186 = vld [vmem:[#allocation13 + $0x1c] sm:$0xf]
        %v1187 = vld [vmem:[#allocation13 + $0x20] sm:$0xf]
        %v1188 = vld [vmem:[#allocation13 + $0x24] sm:$0xf]
        %v1189 = vld [vmem:[#allocation13 + $0x28] sm:$0xf]
        %v1190 = vld [vmem:[#allocation13 + $0x2c] sm:$0xf]
        %v1191 = vld [vmem:[#allocation13 + $0x30] sm:$0xf]
        %v1192 = vld [vmem:[#allocation13 + $0x34] sm:$0xf]
        %v1193 = vld [vmem:[#allocation13 + $0x38] sm:$0xf]
        %v1194 = vld [vmem:[#allocation13 + $0x3c] sm:$0xf]
        %v1195 = vld [vmem:[%s12] sm:$0x1]
        %v1197 = vlaneseq
        %v1198 = vshrl.u32 %v1197, 7
        %v1199 = vsub.s32 0, %v1198
        %v1200 = vrot.slane %v1195, %v1199
        %v1218 = vunpack.c.l.b16 %v1179
        %v1219 = vunpack.c.l.b16 %v1180
        %v1220 = vunpack.c.l.b16 %v1181
        %v1221 = vunpack.c.l.b16 %v1182
        %v1222 = vunpack.c.l.b16 %v1183
        %v1223 = vunpack.c.l.b16 %v1184
        %v1224 = vunpack.c.l.b16 %v1185
        %v1225 = vunpack.c.l.b16 %v1186
        %v1226 = vunpack.c.l.b16 %v1187
        %v1227 = vunpack.c.l.b16 %v1188
        %v1228 = vunpack.c.l.b16 %v1189
        %v1229 = vunpack.c.l.b16 %v1190
        %v1230 = vunpack.c.l.b16 %v1191
        %v1231 = vunpack.c.l.b16 %v1192
        %v1232 = vunpack.c.l.b16 %v1193
        %v1233 = vunpack.c.l.b16 %v1194
        %v1234 = vpack.c.b16 %v1219, %v1218
        %v1235 = vpack.c.b16 %v1221, %v1220
        %v1236 = vpack.c.b16 %v1223, %v1222
        %v1237 = vpack.c.b16 %v1225, %v1224
        %v1238 = vpack.c.b16 %v1227, %v1226
        %v1239 = vpack.c.b16 %v1229, %v1228
        %v1240 = vpack.c.b16 %v1231, %v1230
        %v1241 = vpack.c.b16 %v1233, %v1232
        %1250 = vmatprep.subr.bf16.mxu0 0
        %1251 = vmatpush1.bf16.msra.mxu0 %v1241
        %1252 = vmatprep.subr.bf16.mxu0 0
        %1253 = vmatpush1.bf16.msra.mxu0 %v1240
        %1254 = vmatprep.subr.bf16.mxu0 0
        %1255 = vmatpush1.bf16.msra.mxu0 %v1239
        %1256 = vmatprep.subr.bf16.mxu0 0
        %1257 = vmatpush1.bf16.msra.mxu0 %v1238
        %1258 = vmatprep.subr.bf16.mxu0 0
        %1259 = vmatpush1.bf16.msra.mxu0 %v1237
        %1260 = vmatprep.subr.bf16.mxu0 0
        %1261 = vmatpush1.bf16.msra.mxu0 %v1236
        %1262 = vmatprep.subr.bf16.mxu0 0
        %1263 = vmatpush1.bf16.msra.mxu0 %v1235
        %1264 = vmatprep.subr.bf16.mxu0 0
        %1265 = vmatpush1.bf16.msra.mxu0 %v1234
        %1266 = vmatprep.subr.bf16.mxu0 0
        %1267 = vmatpush2.bf16.msra.mxu0 0
        %1268 = vmatprep.subr.bf16.mxu0 0
        %1269 = vmatpush2.bf16.msra.mxu0 0
        %1270 = vmatprep.subr.bf16.mxu0 0
        %1271 = vmatpush2.bf16.msra.mxu0 0
        %1272 = vmatprep.subr.bf16.mxu0 0
        %1273 = vmatpush2.bf16.msra.mxu0 0
        %1274 = vmatprep.subr.bf16.mxu0 0
        %1275 = vmatpush2.bf16.msra.mxu0 0
        %1276 = vmatprep.subr.bf16.mxu0 0
        %1277 = vmatpush2.bf16.msra.mxu0 0
        %1278 = vmatprep.subr.bf16.mxu0 0
        %1279 = vmatpush2.bf16.msra.mxu0 0
        %1280 = vmatprep.subr.bf16.mxu0 0
        %1281 = vmatpush2.bf16.msra.mxu0 0
        %1282 = vmatprep.mubr.bf16.mxu0 0
        %1283 = vmatmul.mubr.bf16.gmra.mxu0 %v1178
        %v1284 = vpop.f32.mrf.mxu0
        %v1285 = vadd.f32 %v1200, %v1284
        %v1286 = vpop.f32.mrf.mxu0
        %v1287 = vpop.f32.mrf.mxu0
        %v1288 = vpop.f32.mrf.mxu0
        %1289 = vdwg.mxu0
        %v1290 = vmax.f32 %v1285, 0.0
        %v1291 = vpack.c.bf16 %v1290, %v1290
        %v1292 = vld [vmem:[#allocation14] sm:$0xf]
        %v1293 = vld [vmem:[#allocation14 + $0x4] sm:$0xf]
        %v1294 = vld [vmem:[#allocation14 + $0x8] sm:$0xf]
        %v1295 = vld [vmem:[#allocation14 + $0xc] sm:$0xf]
        %v1296 = vld [vmem:[#allocation14 + $0x10] sm:$0xf]
        %v1297 = vld [vmem:[#allocation14 + $0x14] sm:$0xf]
        %v1298 = vld [vmem:[#allocation14 + $0x18] sm:$0xf]
        %v1299 = vld [vmem:[#allocation14 + $0x1c] sm:$0xf]
        %v1300 = vld [vmem:[#allocation14 + $0x20] sm:$0xf]
        %v1301 = vld [vmem:[#allocation14 + $0x24] sm:$0xf]
        %v1302 = vld [vmem:[#allocation14 + $0x28] sm:$0xf]
        %v1303 = vld [vmem:[#allocation14 + $0x2c] sm:$0xf]
        %v1304 = vld [vmem:[#allocation14 + $0x30] sm:$0xf]
        %v1305 = vld [vmem:[#allocation14 + $0x34] sm:$0xf]
        %v1306 = vld [vmem:[#allocation14 + $0x38] sm:$0xf]
        %v1307 = vld [vmem:[#allocation14 + $0x3c] sm:$0xf]
        %v1308 = vld [vmem:[%s14] sm:$0x1]
        %v1310 = vlaneseq
        %v1311 = vshrl.u32 %v1310, 7
        %v1312 = vsub.s32 0, %v1311
        %v1313 = vrot.slane %v1308, %v1312
        %v1331 = vunpack.c.l.b16 %v1292
        %v1332 = vunpack.c.l.b16 %v1293
        %v1333 = vunpack.c.l.b16 %v1294
        %v1334 = vunpack.c.l.b16 %v1295
        %v1335 = vunpack.c.l.b16 %v1296
        %v1336 = vunpack.c.l.b16 %v1297
        %v1337 = vunpack.c.l.b16 %v1298
        %v1338 = vunpack.c.l.b16 %v1299
        %v1339 = vunpack.c.l.b16 %v1300
        %v1340 = vunpack.c.l.b16 %v1301
        %v1341 = vunpack.c.l.b16 %v1302
        %v1342 = vunpack.c.l.b16 %v1303
        %v1343 = vunpack.c.l.b16 %v1304
        %v1344 = vunpack.c.l.b16 %v1305
        %v1345 = vunpack.c.l.b16 %v1306
        %v1346 = vunpack.c.l.b16 %v1307
        %v1347 = vpack.c.b16 %v1332, %v1331
        %v1348 = vpack.c.b16 %v1334, %v1333
        %v1349 = vpack.c.b16 %v1336, %v1335
        %v1350 = vpack.c.b16 %v1338, %v1337
        %v1351 = vpack.c.b16 %v1340, %v1339
        %v1352 = vpack.c.b16 %v1342, %v1341
        %v1353 = vpack.c.b16 %v1344, %v1343
        %v1354 = vpack.c.b16 %v1346, %v1345
        %1363 = vmatprep.subr.bf16.mxu0 0
        %1364 = vmatpush1.bf16.msra.mxu0 %v1354
        %1365 = vmatprep.subr.bf16.mxu0 0
        %1366 = vmatpush1.bf16.msra.mxu0 %v1353
        %1367 = vmatprep.subr.bf16.mxu0 0
        %1368 = vmatpush1.bf16.msra.mxu0 %v1352
        %1369 = vmatprep.subr.bf16.mxu0 0
        %1370 = vmatpush1.bf16.msra.mxu0 %v1351
        %1371 = vmatprep.subr.bf16.mxu0 0
        %1372 = vmatpush1.bf16.msra.mxu0 %v1350
        %1373 = vmatprep.subr.bf16.mxu0 0
        %1374 = vmatpush1.bf16.msra.mxu0 %v1349
        %1375 = vmatprep.subr.bf16.mxu0 0
        %1376 = vmatpush1.bf16.msra.mxu0 %v1348
        %1377 = vmatprep.subr.bf16.mxu0 0
        %1378 = vmatpush1.bf16.msra.mxu0 %v1347
        %1379 = vmatprep.subr.bf16.mxu0 0
        %1380 = vmatpush2.bf16.msra.mxu0 0
        %1381 = vmatprep.subr.bf16.mxu0 0
        %1382 = vmatpush2.bf16.msra.mxu0 0
        %1383 = vmatprep.subr.bf16.mxu0 0
        %1384 = vmatpush2.bf16.msra.mxu0 0
        %1385 = vmatprep.subr.bf16.mxu0 0
        %1386 = vmatpush2.bf16.msra.mxu0 0
        %1387 = vmatprep.subr.bf16.mxu0 0
        %1388 = vmatpush2.bf16.msra.mxu0 0
        %1389 = vmatprep.subr.bf16.mxu0 0
        %1390 = vmatpush2.bf16.msra.mxu0 0
        %1391 = vmatprep.subr.bf16.mxu0 0
        %1392 = vmatpush2.bf16.msra.mxu0 0
        %1393 = vmatprep.subr.bf16.mxu0 0
        %1394 = vmatpush2.bf16.msra.mxu0 0
        %1395 = vmatprep.mubr.bf16.mxu0 0
        %1396 = vmatmul.mubr.bf16.gmra.mxu0 %v1291
        %v1397 = vpop.f32.mrf.mxu0
        %v1398 = vadd.f32 %v1313, %v1397
        %v1399 = vpop.f32.mrf.mxu0
        %v1400 = vpop.f32.mrf.mxu0
        %v1401 = vpop.f32.mrf.mxu0
        %1402 = vdwg.mxu0
        %v1403 = vlaneseq
        %v1404 = vand.u32 %v1403, 127
        %vm1405 = vcmp.lt.s32.totalorder %v1404, 16
        %v1406 = vsel %vm1405, %v1398, -inf
        %1407 = vmax.xlane.f32.xlu0 %v1406
        %v1408 = vpop.xlane.xlu0 %1407
        %v1409 = vsub.f32 %v1406, %v1408
        %v1410 = vmul.f32 %v1409, 1.442695
        %v1411 = vpow.pop %v1410
        %1412 = vadd.xlane.f32.xlu0 %v1411
        %v1413 = vpop.xlane.xlu0 %1412
        %v1414 = vlog2.pop %v1413
        %v1415 = vmul.f32 %v1414, 0.6931472
        %v1416 = vsub.f32 %v1409, %v1415
        %v1417 = vsel %vm1405, %v1416, 0.0
        %1418 = vst [vmem:[%s611] sm:$0xff] %v1417
        %s1419 = sand.u32 %s364, 1
        %s1420 = scalar_lea.sflag [#allocation4], %s1419
        %s1421 = sand.u32 %s364, 1
        %s1422 = smul.addr %s1421, 8
        %s1423 = scalar_lea.vmem [#allocation16], %s1422
        // Predicated region
        $region113: #{tpu_custom_call.1} parent=79 // pred_check
          %p1424 = pneg %p374
        $region114: #{tpu_custom_call.1} parent=79 // pred_check_branch
          %1426 = sbr.rel (%p1424) target = $region116
        $region115: #{tpu_custom_call.1} parent=79 // pred_region
          %s1428 = ssub.s32 128, 128
          %1429 = vsyncadd %s1420, %s1428
          %s1430 = smul.addr %s36, 128
          %s1431 = scalar_lea.hbm %s15, %s1430
          %s1433 = sshll.u32 %s1423, 4
          %s1434 = int_to_ptr.vmem [resolvable:$true] %s1433
          %1436 = dma.vmem_to_hbm [thread:$0]  %s1434, 128, %s1431, %s1420
        $region116: #{tpu_custom_call.1} parent=79 // pred_fallthru
          _
      $region80: #{tpu_custom_call.1} parent=5 // pred_fallthru
        _
      %p1437 = scmp.le.s32.totalorder 2, %s31
      // Predicated region
      $region117: #{tpu_custom_call.1} parent=5 // pred_check
        %p1438 = pneg %p1437
      $region118: #{tpu_custom_call.1} parent=5 // pred_check_branch
        %1440 = sbr.rel (%p1438) target = $region120
      $region119: #{tpu_custom_call.1} parent=5 // pred_region
        %s1441 = ssub.s32 %s31, 2
        // Predicated region
        $region121: #{tpu_custom_call.1} parent=119 // pred_check
          %p1442 = pneg %p380
        $region122: #{tpu_custom_call.1} parent=119 // pred_check_branch
          %1444 = sbr.rel (%p1442) target = $region124
        $region123: #{tpu_custom_call.1} parent=119 // pred_region
          %s1445 = sand.u32 %s365, 1
          %s1446 = scalar_lea.sflag [#allocation4], %s1445
          %s1447 = sand.u32 %s365, 1
          %s1448 = smul.addr %s1447, 8
          %s1449 = scalar_lea.vmem [#allocation16], %s1448
          %1450 = dma.done %s1446, 128
        $region124: #{tpu_custom_call.1} parent=119 // pred_fallthru
          _
      $region120: #{tpu_custom_call.1} parent=5 // pred_fallthru
        _
    $region6: #{tpu_custom_call.1} parent=1 // loop_footer
      %s35 = sadd.s32 1, %s31
    $region7: #{tpu_custom_call.1} parent=1 // loop_footer_branch
      %30 = sbr.rel target = $region3
    $region8: #{tpu_custom_call.1} parent=1 // loop_exit
      _
    %1451 = vsyncpa [#allocation3], 1
    %s1452 = scalar_lea.sflag [#allocation3], 1
    %1453 = vsyncpa %s1452, 1
    %1454 = vsyncpa [#allocation6], 1
    %1455 = vsyncpa [#allocation9], 1
    %1456 = vsyncpa [#allocation12], 1
    %1457 = vsyncpa [#allocation15], 1
    %1458 = vsyncpa [#allocation4], 1
    %s1459 = scalar_lea.sflag [#allocation4], 1
    %1460 = vsyncpa %s1459, 1

</llo_original>
